<compile_context>
chip_gen: v7x
topology: tpu7x:2x2x1
jax: 0.10.0
libtpu: 0.0.40
codegen_flags: <defaults>
</compile_context>

<pallas_src>
import jax
import jax.numpy as jnp
from jax.experimental import pallas as pl
from jax.experimental.pallas import tpu as pltpu


def _make_kernel(num_layers, lane_dense_out):
    def kernel(*refs):
        xi_ref, xj_ref = refs[0], refs[1]
        w_refs = refs[2:2 + num_layers]
        b_refs = refs[2 + num_layers:2 + 2 * num_layers]
        o_ref = refs[-1]

        # Elementwise product of the two node embeddings (bf16 on the wire; the
        # bf16 x bf16 product is exact in the MXU input precision).
        x = xi_ref[...] * xj_ref[...]

        # Hidden layers: matmul on MXU (bf16 in, f32 acc), bias + ReLU on VPU in f32.
        for li in range(num_layers - 1):
            h = jnp.dot(x.astype(w_refs[li].dtype), w_refs[li][...],
                        preferred_element_type=jnp.float32)
            x = jnp.maximum(h + b_refs[li][...], 0.0)
            # F.dropout(training=False) is the identity -> nothing to do.

        wl = w_refs[-1]
        bl = b_refs[-1]
        if lane_dense_out:
            # out_channels == 1: compute the last layer as a VPU multiply + sublane
            # reduce on the transposed activation so the result is a lane-dense
            # (1, tile_n) row (dense stores instead of masked 1-lane stores).
            xt = jnp.transpose(x.astype(jnp.float32))          # (hidden, tile_n), XLU
            y = jnp.sum(xt * wl[...].astype(jnp.float32),
                        axis=0, keepdims=True) + bl[...]       # (1, tile_n)
            o_ref[0] = jax.nn.sigmoid(y).astype(o_ref.dtype)
        else:
            y = jnp.dot(x.astype(wl.dtype), wl[...],
                        preferred_element_type=jnp.float32) + bl[...]
            o_ref[...] = jax.nn.sigmoid(y).astype(o_ref.dtype)

    return kernel


def link_predictor_forward(x_i, x_j, weights, biases, *, tile_n=1024):
    """weights[i]: (in_i, out_i) (already transposed), biases[i]: (1, out_i)."""
    N, C_in = x_i.shape
    num_layers = len(weights)
    out_dim = weights[-1].shape[1]

    # bf16 on the HBM/MXU path (inputs dominate traffic); biases stay f32.
    x_i = x_i.astype(jnp.bfloat16)
    x_j = x_j.astype(jnp.bfloat16)
    weights = [w.astype(jnp.bfloat16) for w in weights]
    biases = [b.astype(jnp.float32) for b in biases]

    num_tiles = pl.cdiv(N, tile_n)
    n_pad = num_tiles * tile_n
    if n_pad != N:
        pad = n_pad - N
        x_i = jnp.pad(x_i, ((0, pad), (0, 0)))
        x_j = jnp.pad(x_j, ((0, pad), (0, 0)))

    lane_dense = (out_dim == 1)
    kernel = _make_kernel(num_layers, lane_dense)

    in_specs = [
        pl.BlockSpec((tile_n, C_in), lambda i: (i, 0)),
        pl.BlockSpec((tile_n, C_in), lambda i: (i, 0)),
    ]
    # weights / biases: full blocks, constant index -> resident across grid steps.
    for w in weights:
        in_specs.append(pl.BlockSpec(w.shape, lambda i: (0, 0)))
    for b in biases:
        in_specs.append(pl.BlockSpec(b.shape, lambda i: (0, 0)))

    if lane_dense:
        # Lane-dense output slab: one (1, tile_n) row per grid step.
        out_shape = jax.ShapeDtypeStruct((num_tiles, 1, tile_n), jnp.float32)
        out_spec = pl.BlockSpec((1, 1, tile_n), lambda i: (i, 0, 0))
    else:
        out_shape = jax.ShapeDtypeStruct((n_pad, out_dim), jnp.float32)
        out_spec = pl.BlockSpec((tile_n, out_dim), lambda i: (i, 0))

    out = pl.pallas_call(
        kernel,
        out_shape=out_shape,
        grid=(num_tiles,),
        in_specs=in_specs,
        out_specs=out_spec,
        compiler_params=pltpu.CompilerParams(
            dimension_semantics=("parallel",)),
    )(x_i, x_j, *weights, *biases)

    if lane_dense:
        out = out.reshape(n_pad, 1)
    return out[:N]


def init_link_predictor_params(key, in_channels, hidden_channels, out_channels,
                               num_layers):
    """Deterministic init mimicking torch.nn.Linear defaults (uniform +-1/sqrt(fan_in)).
    Returns weights already transposed to (in, out) and biases as (1, out)."""
    dims = [in_channels] + [hidden_channels] * (num_layers - 1) + [out_channels]
    weights, biases = [], []
    for li in range(num_layers):
        fan_in, fan_out = dims[li], dims[li + 1]
        key, kw, kb = jax.random.split(key, 3)
        bound = 1.0 / jnp.sqrt(fan_in)
        w = jax.random.uniform(kw, (fan_in, fan_out), jnp.float32, -bound, bound)
        b = jax.random.uniform(kb, (1, fan_out), jnp.float32, -bound, bound)
        weights.append(w)
        biases.append(b)

    # prompt2 / prompt3 exist in __init__ but are unused in forward; init for parity.
    key, k2, k3 = jax.random.split(key, 3)
    prompt2 = jax.random.uniform(k2, (128, in_channels), jnp.float32,
                                 -1.0 / jnp.sqrt(128.0), 1.0 / jnp.sqrt(128.0))
    prompt3 = jax.random.uniform(k3, (2, out_channels), jnp.float32,
                                 -1.0 / jnp.sqrt(2.0), 1.0 / jnp.sqrt(2.0))
    return weights, biases, (prompt2, prompt3)


def link_predictor_reference(x_i, x_j, weights, biases):
    x = x_i * x_j
    for li in range(len(weights)):
        x = x @ weights[li] + biases[li]
        if li < len(weights) - 1:
            x = jnp.maximum(x, 0.0)
    return jax.nn.sigmoid(x)


if __name__ == "__main__":
    # Small config consistent with the module: in=32, hidden=64, out=1, 3 layers.
    # N deliberately not a multiple of tile_n to exercise the padded-tail path.
    N = 2500
    in_channels, hidden_channels, out_channels = 32, 64, 1
    num_layers, dropout = 3, 0.5  # dropout inactive at inference

    key = jax.random.PRNGKey(0)
    key, ki, kj, kp = jax.random.split(key, 4)
    x_i = jax.random.normal(ki, (N, in_channels), jnp.float32)
    x_j = jax.random.normal(kj, (N, in_channels), jnp.float32)

    weights, biases, _unused_prompts = init_link_predictor_params(
        kp, in_channels, hidden_channels, out_channels, num_layers)

    out = link_predictor_forward(x_i, x_j, weights, biases, tile_n=1024)
    out = jax.block_until_ready(out)

    # Reference in f32 on the same bf16-rounded inputs/weights (kernel uses a
    # bf16 DMA/MXU path with f32 accumulation).
    xi_b = x_i.astype(jnp.bfloat16).astype(jnp.float32)
    xj_b = x_j.astype(jnp.bfloat16).astype(jnp.float32)
    w_b = [w.astype(jnp.bfloat16).astype(jnp.float32) for w in weights]
    ref = link_predictor_reference(xi_b, xj_b, w_b, biases)

    assert out.shape == (N, out_channels)
    assert jnp.allclose(out, ref, atol=3e-2, rtol=3e-2), "mismatch vs JAX reference"

    print("KERNEL_OK")
</pallas_src>

<mosaic_0001>
module attributes {stable_mosaic.version = 11 : i64} {
  func.func @kernel(%arg0: i32, %arg1: memref<1024x32xbf16, #tpu.memory_space<vmem>>, %arg2: memref<1024x32xbf16, #tpu.memory_space<vmem>>, %arg3: memref<32x64xbf16, #tpu.memory_space<vmem>>, %arg4: memref<64x64xbf16, #tpu.memory_space<vmem>>, %arg5: memref<64x1xbf16, #tpu.memory_space<vmem>>, %arg6: memref<1x64xf32, #tpu.memory_space<vmem>>, %arg7: memref<1x64xf32, #tpu.memory_space<vmem>>, %arg8: memref<1x1xf32, #tpu.memory_space<vmem>>, %arg9: memref<1x1x1024xf32, #tpu.memory_space<vmem>>) attributes {dimension_semantics = [#tpu.dimension_semantics<parallel>], iteration_bounds = array<i64: 3>, scalar_prefetch = 0 : i64, scratch_operands = 0 : i64, tpu.core_type = #tpu.core_type<tc>, window_params = [{transform_indices = @transform_0, window_bounds = array<i64: 1024, 32>}, {transform_indices = @transform_1, window_bounds = array<i64: 1024, 32>}, {pipeline_mode = #tpu.pipeline_mode<synchronous>, transform_indices = @transform_2, window_bounds = array<i64: 32, 64>}, {pipeline_mode = #tpu.pipeline_mode<synchronous>, transform_indices = @transform_3, window_bounds = array<i64: 64, 64>}, {pipeline_mode = #tpu.pipeline_mode<synchronous>, transform_indices = @transform_4, window_bounds = array<i64: 64, 1>}, {pipeline_mode = #tpu.pipeline_mode<synchronous>, transform_indices = @transform_5, window_bounds = array<i64: 1, 64>}, {pipeline_mode = #tpu.pipeline_mode<synchronous>, transform_indices = @transform_6, window_bounds = array<i64: 1, 64>}, {pipeline_mode = #tpu.pipeline_mode<synchronous>, transform_indices = @transform_7, window_bounds = array<i64: 1, 1>}, {transform_indices = @transform_8, window_bounds = array<i64: 1, 1, 1024>}]} {
    %c0 = arith.constant 0 : index
    %c0_0 = arith.constant 0 : index
    %0 = vector.load %arg1[%c0, %c0_0] : memref<1024x32xbf16, #tpu.memory_space<vmem>>, vector<1024x32xbf16>
    %c0_1 = arith.constant 0 : index
    %c0_2 = arith.constant 0 : index
    %1 = vector.load %arg2[%c0_1, %c0_2] : memref<1024x32xbf16, #tpu.memory_space<vmem>>, vector<1024x32xbf16>
    %2 = arith.mulf %0, %1 : vector<1024x32xbf16>
    %c0_3 = arith.constant 0 : index
    %c0_4 = arith.constant 0 : index
    %3 = vector.load %arg3[%c0_3, %c0_4] : memref<32x64xbf16, #tpu.memory_space<vmem>>, vector<32x64xbf16>
    %cst = arith.constant dense<0.000000e+00> : vector<1024x64xf32>
    %4 = tpu.matmul %2, %3, %cst {dimension_numbers = #tpu.dot_dimension_numbers<[1], [0], [0], [1], [0, 0, 1, 1], [], []>} : vector<1024x32xbf16>, vector<32x64xbf16>, vector<1024x64xf32> -> vector<1024x64xf32>
    %c0_5 = arith.constant 0 : index
    %c0_6 = arith.constant 0 : index
    %5 = vector.load %arg6[%c0_5, %c0_6] : memref<1x64xf32, #tpu.memory_space<vmem>>, vector<1x64xf32>
    %6 = vector.broadcast %5 : vector<1x64xf32> to vector<1024x64xf32>
    %7 = arith.addf %4, %6 : vector<1024x64xf32>
    %cst_7 = arith.constant 0.000000e+00 : f32
    %8 = vector.broadcast %cst_7 : f32 to vector<1024x64xf32>
    %9 = arith.maximumf %7, %8 : vector<1024x64xf32>
    %10 = arith.truncf %9 : vector<1024x64xf32> to vector<1024x64xbf16>
    %c0_8 = arith.constant 0 : index
    %c0_9 = arith.constant 0 : index
    %11 = vector.load %arg4[%c0_8, %c0_9] : memref<64x64xbf16, #tpu.memory_space<vmem>>, vector<64x64xbf16>
    %cst_10 = arith.constant dense<0.000000e+00> : vector<1024x64xf32>
    %12 = tpu.matmul %10, %11, %cst_10 {dimension_numbers = #tpu.dot_dimension_numbers<[1], [0], [0], [1], [0, 0, 1, 1], [], []>} : vector<1024x64xbf16>, vector<64x64xbf16>, vector<1024x64xf32> -> vector<1024x64xf32>
    %c0_11 = arith.constant 0 : index
    %c0_12 = arith.constant 0 : index
    %13 = vector.load %arg7[%c0_11, %c0_12] : memref<1x64xf32, #tpu.memory_space<vmem>>, vector<1x64xf32>
    %14 = vector.broadcast %13 : vector<1x64xf32> to vector<1024x64xf32>
    %15 = arith.addf %12, %14 : vector<1024x64xf32>
    %cst_13 = arith.constant 0.000000e+00 : f32
    %16 = vector.broadcast %cst_13 : f32 to vector<1024x64xf32>
    %17 = arith.maximumf %15, %16 : vector<1024x64xf32>
    %18 = tpu.transpose %17, [1, 0] : vector<1024x64xf32> -> vector<64x1024xf32>
    %c0_14 = arith.constant 0 : index
    %c0_15 = arith.constant 0 : index
    %19 = vector.load %arg5[%c0_14, %c0_15] : memref<64x1xbf16, #tpu.memory_space<vmem>>, vector<64x1xbf16>
    %20 = arith.extf %19 : vector<64x1xbf16> to vector<64x1xf32>
    %21 = vector.broadcast %20 : vector<64x1xf32> to vector<64x1024xf32>
    %22 = arith.mulf %18, %21 : vector<64x1024xf32>
    %cst_16 = arith.constant dense<0.000000e+00> : vector<1024xf32>
    %23 = vector.multi_reduction <add>, %22, %cst_16 [0] : vector<64x1024xf32> to vector<1024xf32>
    %24 = vector.shape_cast %23 : vector<1024xf32> to vector<1x1024xf32>
    %c0_17 = arith.constant 0 : index
    %c0_18 = arith.constant 0 : index
    %25 = vector.load %arg8[%c0_17, %c0_18] : memref<1x1xf32, #tpu.memory_space<vmem>>, vector<1x1xf32>
    %26 = vector.broadcast %25 : vector<1x1xf32> to vector<1x1024xf32>
    %27 = arith.addf %24, %26 : vector<1x1024xf32>
    %28 = arith.negf %27 : vector<1x1024xf32>
    %29 = math.exp %28 : vector<1x1024xf32>
    %cst_19 = arith.constant 1.000000e+00 : f32
    %30 = vector.broadcast %cst_19 : f32 to vector<1x1024xf32>
    %31 = arith.addf %30, %29 : vector<1x1024xf32>
    %32 = arith.divf %30, %31 : vector<1x1024xf32>
    %c0_20 = arith.constant 0 : index
    %c0_21 = arith.constant 0 : index
    %c0_22 = arith.constant 0 : index
    %33 = vector.load %arg9[%c0_20, %c0_21, %c0_22] : memref<1x1x1024xf32, #tpu.memory_space<vmem>>, vector<1x1x1024xf32>
    %34 = vector.shape_cast %33 : vector<1x1x1024xf32> to vector<1x1024xf32>
    %35 = vector.shape_cast %32 : vector<1x1024xf32> to vector<1x1x1024xf32>
    tpu.vector_store %arg9[%c0_20, %c0_21, %c0_22], %35 {strides = array<i32>} : memref<1x1x1024xf32, #tpu.memory_space<vmem>>, vector<1x1x1024xf32>,
    return
  }
  func.func @transform_0(%arg0: i32) -> (i32, i32) {
    %c0_i32 = arith.constant 0 : i32
    %c0_i32_0 = arith.constant 0 : i32
    return %arg0, %c0_i32 : i32, i32
  }
  func.func @transform_1(%arg0: i32) -> (i32, i32) {
    %c0_i32 = arith.constant 0 : i32
    %c0_i32_0 = arith.constant 0 : i32
    return %arg0, %c0_i32 : i32, i32
  }
  func.func @transform_2(%arg0: i32) -> (i32, i32) {
    %c0_i32 = arith.constant 0 : i32
    %c0_i32_0 = arith.constant 0 : i32
    %c0_i32_1 = arith.constant 0 : i32
    return %c0_i32, %c0_i32_0 : i32, i32
  }
  func.func @transform_3(%arg0: i32) -> (i32, i32) {
    %c0_i32 = arith.constant 0 : i32
    %c0_i32_0 = arith.constant 0 : i32
    %c0_i32_1 = arith.constant 0 : i32
    return %c0_i32, %c0_i32_0 : i32, i32
  }
  func.func @transform_4(%arg0: i32) -> (i32, i32) {
    %c0_i32 = arith.constant 0 : i32
    %c0_i32_0 = arith.constant 0 : i32
    %c0_i32_1 = arith.constant 0 : i32
    return %c0_i32, %c0_i32_0 : i32, i32
  }
  func.func @transform_5(%arg0: i32) -> (i32, i32) {
    %c0_i32 = arith.constant 0 : i32
    %c0_i32_0 = arith.constant 0 : i32
    %c0_i32_1 = arith.constant 0 : i32
    return %c0_i32, %c0_i32_0 : i32, i32
  }
  func.func @transform_6(%arg0: i32) -> (i32, i32) {
    %c0_i32 = arith.constant 0 : i32
    %c0_i32_0 = arith.constant 0 : i32
    %c0_i32_1 = arith.constant 0 : i32
    return %c0_i32, %c0_i32_0 : i32, i32
  }
  func.func @transform_7(%arg0: i32) -> (i32, i32) {
    %c0_i32 = arith.constant 0 : i32
    %c0_i32_0 = arith.constant 0 : i32
    %c0_i32_1 = arith.constant 0 : i32
    return %c0_i32, %c0_i32_0 : i32, i32
  }
  func.func @transform_8(%arg0: i32) -> (i32, i32, i32) {
    %c0_i32 = arith.constant 0 : i32
    %c0_i32_0 = arith.constant 0 : i32
    %c0_i32_1 = arith.constant 0 : i32
    return %arg0, %c0_i32, %c0_i32_0 : i32, i32, i32
  }
}

</mosaic_0001>

<llo_original>
// kernel: tpu_custom_call.1
$region0: #{tpu_custom_call.1}
  #allocation0 [shape = 'u32[]', space=smem, size = 0x4, offset = 0x4, fixed_abs, tag = 'smem constant byte address 0x4 - core index']
  #allocation1 [shape = 'u32[144,128]{1,0:T(1,128)}', space=vmem, size = 0x12000, scoped, tag = 'internal scratch']
  #allocation2 [shape = 'f32[1,1]{1,0:T(1,128)S(1)}', space=vmem, size = 0x200, scoped, tag = 'scoped memory for tpu_custom_call.1']
  %s0 = inlined_call_operand.vmem [shape: bf16[3072,32], index: 0, kind: input, shape index: {}]
  %s1 = inlined_call_operand.vmem [shape: bf16[3072,32], index: 1, kind: input, shape index: {}]
  %s2 = inlined_call_operand.vmem [shape: bf16[32,64], index: 2, kind: input, shape index: {}]
  %s3 = inlined_call_operand.vmem [shape: bf16[64,64], index: 3, kind: input, shape index: {}]
  %s4 = inlined_call_operand.vmem [shape: bf16[64,1], index: 4, kind: input, shape index: {}]
  %s5 = inlined_call_operand.vmem [shape: f32[1,64], index: 5, kind: input, shape index: {}]
  %s6 = inlined_call_operand.vmem [shape: f32[1,64], index: 6, kind: input, shape index: {}]
  %s7 = inlined_call_operand.<no memory space> [shape: f32[1,1], index: 7, kind: input, shape index: {}]
  %s8 = inlined_call_operand.hbm [shape: f32[3,1,1024], index: 8, kind: output, shape index: {}]
  %s9 = sld [smem:[#allocation0]]
  $region65: #{tpu_custom_call.1} parent=0
    _
  %s11 = ssub.s32 1, %s9
  %s12 = scalar_select 0, %s11, %s9
  %v13 = vstv %s7
  %14 = vst [vmem:[#allocation2] sm:$0x1] %v13
  $region1: #{tpu_custom_call.1} parent=0
    #allocation3 [shape = 'u8[8192]{0}', space=vmem, size = 0x2000, scoped, tag = 'output window, operand 0']
    #allocation4 [shape = 's32[2]{0}', space=sflag, size = 0x8, scoped, tag = 'scoped memory for tpu_custom_call.1']
    %15 = vsyncpa [#allocation4], 0
    %s16 = scalar_lea.sflag [#allocation4], 1
    %17 = vsyncpa %s16, 0
    loop: start=0, step=1, limit=5
    $region2: #{tpu_custom_call.1} parent=1 // loop_pre_header
      _
    $region3: #{tpu_custom_call.1} parent=1 // loop_header
      %s19 = sphi 0, %s23
      %p20 = scmp.ge.s32.totalorder %s19, 5
      %s29 = sphi 0, %s31
      %s32 = sphi 0, %s29
      %s33 = sphi 0, %s32
      %s49 = sphi 0, %s33
      %s55 = sphi 0, %s57
      %s58 = sphi 0, %s55
      %s59 = sphi 0, %s58
      %s75 = sphi 0, %s59
      %s79 = sphi 0, %s79
      %s81 = sphi 0, %s79
      %s82 = sphi 0, %s81
      %s96 = sphi 0, %s82
      %s100 = sphi 0, %s100
      %s102 = sphi 0, %s100
      %s103 = sphi 0, %s102
      %s117 = sphi 0, %s103
      %s121 = sphi 0, %s121
      %s123 = sphi 0, %s121
      %s124 = sphi 0, %s123
      %s138 = sphi 0, %s124
      %s142 = sphi 0, %s142
      %s144 = sphi 0, %s142
      %s145 = sphi 0, %s144
      %s159 = sphi 0, %s145
      %s163 = sphi 0, %s163
      %s165 = sphi 0, %s163
      %s166 = sphi 0, %s165
      %s180 = sphi 0, %s166
      %s184 = sphi 0, %s184
      %s186 = sphi 0, %s184
      %s187 = sphi 0, %s186
      %s201 = sphi 0, %s187
      %s207 = sphi 0, %s209
      %s210 = sphi 0, %s207
      %s211 = sphi 0, %s210
      %s227 = sphi 0, %s211
    $region4: #{tpu_custom_call.1} parent=1 // loop_header_branch
      %22 = sbr.rel (%p20) target = $region8
    $region5: #{tpu_custom_call.1} parent=1 // loop_body
      %s24 = ssub.s32 %s19, 1
      %s25 = ssub.s32 %s19, 2
      %s26 = sadd.s32 %s19, 1
      %s27 = ssub.s32 %s19, %s26
      %p28 = scmp.eq.s32.totalorder %s27, 0
      %s30 = sadd.s32 %s29, 1
      %s31 = scalar_select %p28, %s29, %s30
      %p34 = pneg %p28
      %p35 = scmp.eq.s32.totalorder %s19, 2
      %p36 = por %p34, %p35
      %p37 = scmp.ne.s32.totalorder %s29, %s32
      %p38 = scmp.eq.s32.totalorder %s19, 0
      %p39 = por %p37, %p38
      %p40 = scmp.ne.s32.totalorder %s29, %s32
      %p41 = scmp.eq.s32.totalorder %s24, 2
      %p42 = por %p40, %p41
      %p43 = scmp.ne.s32.totalorder %s32, %s33
      %p44 = scmp.eq.s32.totalorder %s24, 0
      %p45 = por %p43, %p44
      %p46 = scmp.ne.s32.totalorder %s32, %s33
      %p47 = scmp.eq.s32.totalorder %s25, 2
      %p48 = por %p46, %p47
      %p50 = scmp.ne.s32.totalorder %s33, %s49
      %p51 = scmp.eq.s32.totalorder %s25, 0
      %p52 = por %p50, %p51
      %s53 = ssub.s32 %s19, %s26
      %p54 = scmp.eq.s32.totalorder %s53, 0
      %s56 = sadd.s32 %s55, 1
      %s57 = scalar_select %p54, %s55, %s56
      %p60 = pneg %p54
      %p61 = scmp.eq.s32.totalorder %s19, 2
      %p62 = por %p60, %p61
      %p63 = scmp.ne.s32.totalorder %s55, %s58
      %p64 = scmp.eq.s32.totalorder %s19, 0
      %p65 = por %p63, %p64
      %p66 = scmp.ne.s32.totalorder %s55, %s58
      %p67 = scmp.eq.s32.totalorder %s24, 2
      %p68 = por %p66, %p67
      %p69 = scmp.ne.s32.totalorder %s58, %s59
      %p70 = scmp.eq.s32.totalorder %s24, 0
      %p71 = por %p69, %p70
      %p72 = scmp.ne.s32.totalorder %s58, %s59
      %p73 = scmp.eq.s32.totalorder %s25, 2
      %p74 = por %p72, %p73
      %p76 = scmp.ne.s32.totalorder %s59, %s75
      %p77 = scmp.eq.s32.totalorder %s25, 0
      %p78 = por %p76, %p77
      %s80 = sadd.s32 %s79, 1
      %p83 = scmp.eq.s32.totalorder %s19, 2
      %p84 = scmp.ne.s32.totalorder %s79, %s81
      %p85 = scmp.eq.s32.totalorder %s19, 0
      %p86 = por %p84, %p85
      %p87 = scmp.ne.s32.totalorder %s79, %s81
      %p88 = scmp.eq.s32.totalorder %s24, 2
      %p89 = por %p87, %p88
      %p90 = scmp.ne.s32.totalorder %s81, %s82
      %p91 = scmp.eq.s32.totalorder %s24, 0
      %p92 = por %p90, %p91
      %p93 = scmp.ne.s32.totalorder %s81, %s82
      %p94 = scmp.eq.s32.totalorder %s25, 2
      %p95 = por %p93, %p94
      %p97 = scmp.ne.s32.totalorder %s82, %s96
      %p98 = scmp.eq.s32.totalorder %s25, 0
      %p99 = por %p97, %p98
      %s101 = sadd.s32 %s100, 1
      %p104 = scmp.eq.s32.totalorder %s19, 2
      %p105 = scmp.ne.s32.totalorder %s100, %s102
      %p106 = scmp.eq.s32.totalorder %s19, 0
      %p107 = por %p105, %p106
      %p108 = scmp.ne.s32.totalorder %s100, %s102
      %p109 = scmp.eq.s32.totalorder %s24, 2
      %p110 = por %p108, %p109
      %p111 = scmp.ne.s32.totalorder %s102, %s103
      %p112 = scmp.eq.s32.totalorder %s24, 0
      %p113 = por %p111, %p112
      %p114 = scmp.ne.s32.totalorder %s102, %s103
      %p115 = scmp.eq.s32.totalorder %s25, 2
      %p116 = por %p114, %p115
      %p118 = scmp.ne.s32.totalorder %s103, %s117
      %p119 = scmp.eq.s32.totalorder %s25, 0
      %p120 = por %p118, %p119
      %s122 = sadd.s32 %s121, 1
      %p125 = scmp.eq.s32.totalorder %s19, 2
      %p126 = scmp.ne.s32.totalorder %s121, %s123
      %p127 = scmp.eq.s32.totalorder %s19, 0
      %p128 = por %p126, %p127
      %p129 = scmp.ne.s32.totalorder %s121, %s123
      %p130 = scmp.eq.s32.totalorder %s24, 2
      %p131 = por %p129, %p130
      %p132 = scmp.ne.s32.totalorder %s123, %s124
      %p133 = scmp.eq.s32.totalorder %s24, 0
      %p134 = por %p132, %p133
      %p135 = scmp.ne.s32.totalorder %s123, %s124
      %p136 = scmp.eq.s32.totalorder %s25, 2
      %p137 = por %p135, %p136
      %p139 = scmp.ne.s32.totalorder %s124, %s138
      %p140 = scmp.eq.s32.totalorder %s25, 0
      %p141 = por %p139, %p140
      %s143 = sadd.s32 %s142, 1
      %p146 = scmp.eq.s32.totalorder %s19, 2
      %p147 = scmp.ne.s32.totalorder %s142, %s144
      %p148 = scmp.eq.s32.totalorder %s19, 0
      %p149 = por %p147, %p148
      %p150 = scmp.ne.s32.totalorder %s142, %s144
      %p151 = scmp.eq.s32.totalorder %s24, 2
      %p152 = por %p150, %p151
      %p153 = scmp.ne.s32.totalorder %s144, %s145
      %p154 = scmp.eq.s32.totalorder %s24, 0
      %p155 = por %p153, %p154
      %p156 = scmp.ne.s32.totalorder %s144, %s145
      %p157 = scmp.eq.s32.totalorder %s25, 2
      %p158 = por %p156, %p157
      %p160 = scmp.ne.s32.totalorder %s145, %s159
      %p161 = scmp.eq.s32.totalorder %s25, 0
      %p162 = por %p160, %p161
      %s164 = sadd.s32 %s163, 1
      %p167 = scmp.eq.s32.totalorder %s19, 2
      %p168 = scmp.ne.s32.totalorder %s163, %s165
      %p169 = scmp.eq.s32.totalorder %s19, 0
      %p170 = por %p168, %p169
      %p171 = scmp.ne.s32.totalorder %s163, %s165
      %p172 = scmp.eq.s32.totalorder %s24, 2
      %p173 = por %p171, %p172
      %p174 = scmp.ne.s32.totalorder %s165, %s166
      %p175 = scmp.eq.s32.totalorder %s24, 0
      %p176 = por %p174, %p175
      %p177 = scmp.ne.s32.totalorder %s165, %s166
      %p178 = scmp.eq.s32.totalorder %s25, 2
      %p179 = por %p177, %p178
      %p181 = scmp.ne.s32.totalorder %s166, %s180
      %p182 = scmp.eq.s32.totalorder %s25, 0
      %p183 = por %p181, %p182
      %s185 = sadd.s32 %s184, 1
      %p188 = scmp.eq.s32.totalorder %s19, 2
      %p189 = scmp.ne.s32.totalorder %s184, %s186
      %p190 = scmp.eq.s32.totalorder %s19, 0
      %p191 = por %p189, %p190
      %p192 = scmp.ne.s32.totalorder %s184, %s186
      %p193 = scmp.eq.s32.totalorder %s24, 2
      %p194 = por %p192, %p193
      %p195 = scmp.ne.s32.totalorder %s186, %s187
      %p196 = scmp.eq.s32.totalorder %s24, 0
      %p197 = por %p195, %p196
      %p198 = scmp.ne.s32.totalorder %s186, %s187
      %p199 = scmp.eq.s32.totalorder %s25, 2
      %p200 = por %p198, %p199
      %p202 = scmp.ne.s32.totalorder %s187, %s201
      %p203 = scmp.eq.s32.totalorder %s25, 0
      %p204 = por %p202, %p203
      %s205 = ssub.s32 %s19, %s26
      %p206 = scmp.eq.s32.totalorder %s205, 0
      %s208 = sadd.s32 %s207, 1
      %s209 = scalar_select %p206, %s207, %s208
      %p212 = pneg %p206
      %p213 = scmp.eq.s32.totalorder %s19, 2
      %p214 = por %p212, %p213
      %p215 = scmp.ne.s32.totalorder %s207, %s210
      %p216 = scmp.eq.s32.totalorder %s19, 0
      %p217 = por %p215, %p216
      %p218 = scmp.ne.s32.totalorder %s207, %s210
      %p219 = scmp.eq.s32.totalorder %s24, 2
      %p220 = por %p218, %p219
      %p221 = scmp.ne.s32.totalorder %s210, %s211
      %p222 = scmp.eq.s32.totalorder %s24, 0
      %p223 = por %p221, %p222
      %p224 = scmp.ne.s32.totalorder %s210, %s211
      %p225 = scmp.eq.s32.totalorder %s25, 2
      %p226 = por %p224, %p225
      %p228 = scmp.ne.s32.totalorder %s211, %s227
      %p229 = scmp.eq.s32.totalorder %s25, 0
      %p230 = por %p228, %p229
      %p231 = scmp.le.s32.totalorder 1, %s19
      %p232 = scmp.lt.s32.totalorder %s19, 4
      %p233 = pnand %p231, %p232
      %p234 = pneg %p233
      // Predicated region
      $region9: #{tpu_custom_call.1} parent=5 // pred_check
        _
      $region10: #{tpu_custom_call.1} parent=5 // pred_check_branch
        %236 = sbr.rel (%p233) target = $region12
      $region11: #{tpu_custom_call.1} parent=5 // pred_region
        %s237 = ssub.s32 %s19, 1
        // Predicated region
        $region13: #{tpu_custom_call.1} parent=11 // pred_check
          %p238 = pneg %p92
        $region14: #{tpu_custom_call.1} parent=11 // pred_check_branch
          %240 = sbr.rel (%p238) target = $region16
        $region15: #{tpu_custom_call.1} parent=11 // pred_region
          _
        $region16: #{tpu_custom_call.1} parent=11 // pred_fallthru
          _
        // Predicated region
        $region17: #{tpu_custom_call.1} parent=11 // pred_check
          %p241 = pneg %p113
        $region18: #{tpu_custom_call.1} parent=11 // pred_check_branch
          %243 = sbr.rel (%p241) target = $region20
        $region19: #{tpu_custom_call.1} parent=11 // pred_region
          _
        $region20: #{tpu_custom_call.1} parent=11 // pred_fallthru
          _
        // Predicated region
        $region21: #{tpu_custom_call.1} parent=11 // pred_check
          %p244 = pneg %p134
        $region22: #{tpu_custom_call.1} parent=11 // pred_check_branch
          %246 = sbr.rel (%p244) target = $region24
        $region23: #{tpu_custom_call.1} parent=11 // pred_region
          _
        $region24: #{tpu_custom_call.1} parent=11 // pred_fallthru
          _
        // Predicated region
        $region25: #{tpu_custom_call.1} parent=11 // pred_check
          %p247 = pneg %p155
        $region26: #{tpu_custom_call.1} parent=11 // pred_check_branch
          %249 = sbr.rel (%p247) target = $region28
        $region27: #{tpu_custom_call.1} parent=11 // pred_region
          _
        $region28: #{tpu_custom_call.1} parent=11 // pred_fallthru
          _
        // Predicated region
        $region29: #{tpu_custom_call.1} parent=11 // pred_check
          %p250 = pneg %p176
        $region30: #{tpu_custom_call.1} parent=11 // pred_check_branch
          %252 = sbr.rel (%p250) target = $region32
        $region31: #{tpu_custom_call.1} parent=11 // pred_region
          _
        $region32: #{tpu_custom_call.1} parent=11 // pred_fallthru
          _
        // Predicated region
        $region33: #{tpu_custom_call.1} parent=11 // pred_check
          %p253 = pneg %p197
        $region34: #{tpu_custom_call.1} parent=11 // pred_check_branch
          %255 = sbr.rel (%p253) target = $region36
        $region35: #{tpu_custom_call.1} parent=11 // pred_region
          _
        $region36: #{tpu_custom_call.1} parent=11 // pred_fallthru
          _
      $region12: #{tpu_custom_call.1} parent=5 // pred_fallthru
        _
      %p256 = scmp.lt.s32.totalorder %s19, 3
      // Predicated region
      $region37: #{tpu_custom_call.1} parent=5 // pred_check
        %p257 = pneg %p256
      $region38: #{tpu_custom_call.1} parent=5 // pred_check_branch
        %259 = sbr.rel (%p257) target = $region40
      $region39: #{tpu_custom_call.1} parent=5 // pred_region
        // Predicated region
        $region41: #{tpu_custom_call.1} parent=39 // pred_check
          %p260 = pneg %p39
        $region42: #{tpu_custom_call.1} parent=39 // pred_check_branch
          %262 = sbr.rel (%p260) target = $region44
        $region43: #{tpu_custom_call.1} parent=39 // pred_region
          %s263 = smul.u32 128, %s19
          %p264 = scmp.lt.s32.totalorder %s263, 383
          %s265 = scalar_select %p264, %s263, 383
          %s266 = smul.addr %s265, 4
          %s267 = scalar_lea.vmem %s0, %s266
          %s268 = smul.u32 128, %s19
        $region44: #{tpu_custom_call.1} parent=39 // pred_fallthru
          _
        // Predicated region
        $region45: #{tpu_custom_call.1} parent=39 // pred_check
          %p269 = pneg %p65
        $region46: #{tpu_custom_call.1} parent=39 // pred_check_branch
          %271 = sbr.rel (%p269) target = $region48
        $region47: #{tpu_custom_call.1} parent=39 // pred_region
          %s272 = smul.u32 128, %s19
          %p273 = scmp.lt.s32.totalorder %s272, 383
          %s274 = scalar_select %p273, %s272, 383
          %s275 = smul.addr %s274, 4
          %s276 = scalar_lea.vmem %s1, %s275
          %s277 = smul.u32 128, %s19
        $region48: #{tpu_custom_call.1} parent=39 // pred_fallthru
          _
      $region40: #{tpu_custom_call.1} parent=5 // pred_fallthru
        _
      %p278 = scmp.le.s32.totalorder 1, %s19
      %p279 = scmp.lt.s32.totalorder %s19, 4
      %p280 = pnand %p278, %p279
      %p281 = pneg %p280
      // Predicated region
      $region49: #{tpu_custom_call.1} parent=5 // pred_check
        _
      $region50: #{tpu_custom_call.1} parent=5 // pred_check_branch
        %283 = sbr.rel (%p280) target = $region52
      $region51: #{tpu_custom_call.1} parent=5 // pred_region
        %s284 = ssub.s32 %s19, 1
        %s285 = smul.u32 128, %s24
        %p286 = scmp.lt.s32.totalorder %s285, 383
        %s287 = scalar_select %p286, %s285, 383
        %s288 = smul.addr %s287, 4
        %s289 = scalar_lea.vmem %s0, %s288
        %p290 = pneg %p45
        %p291 = pneg %p42
        %s292 = smul.u32 128, %s24
        %p293 = scmp.lt.s32.totalorder %s292, 383
        %s294 = scalar_select %p293, %s292, 383
        %s295 = smul.addr %s294, 4
        %s296 = scalar_lea.vmem %s1, %s295
        %p297 = pneg %p71
        %p298 = pneg %p68
        %p299 = pneg %p92
        %p300 = pneg %p89
        %p301 = pneg %p113
        %p302 = pneg %p110
        %p303 = pneg %p134
        %p304 = pneg %p131
        %p305 = pneg %p155
        %p306 = pneg %p152
        %p307 = pneg %p176
        %p308 = pneg %p173
        %p309 = pneg %p197
        %p310 = pneg %p194
        %p311 = pneg %p223
        %p312 = pneg %p220
        %s313 = sand.u32 %s210, 1
        %s314 = scalar_lea.sflag [#allocation4], %s313
        %s315 = sand.u32 %s210, 1
        %s316 = smul.addr %s315, 8
        %s317 = scalar_lea.vmem [#allocation3], %s316
        %s318 = smul.u32 128, %s24
        %p319 = scmp.lt.s32.totalorder %s318, 383
        %s320 = scalar_select %p319, %s318, 383
        %s321 = smul.addr %s320, 4
        %s322 = scalar_lea.vmem %s0, %s321
        %s323 = smul.u32 128, %s24
        %s324 = smul.u32 128, %s24
        %p325 = scmp.lt.s32.totalorder %s324, 383
        %s326 = scalar_select %p325, %s324, 383
        %s327 = smul.addr %s326, 4
        %s328 = scalar_lea.vmem %s1, %s327
        %s329 = smul.u32 128, %s24
        %v331 = vld [vmem:[%s322] sm:$0xf]
        %v332 = vld [vmem:[%s322 + $0x4] sm:$0xf]
        %v333 = vld [vmem:[%s322 + $0x8] sm:$0xf]
        %v334 = vld [vmem:[%s322 + $0xc] sm:$0xf]
        %v335 = vld [vmem:[%s322 + $0x10] sm:$0xf]
        %v336 = vld [vmem:[%s322 + $0x14] sm:$0xf]
        %v337 = vld [vmem:[%s322 + $0x18] sm:$0xf]
        %v338 = vld [vmem:[%s322 + $0x1c] sm:$0xf]
        %v339 = vld [vmem:[%s322 + $0x20] sm:$0xf]
        %v340 = vld [vmem:[%s322 + $0x24] sm:$0xf]
        %v341 = vld [vmem:[%s322 + $0x28] sm:$0xf]
        %v342 = vld [vmem:[%s322 + $0x2c] sm:$0xf]
        %v343 = vld [vmem:[%s322 + $0x30] sm:$0xf]
        %v344 = vld [vmem:[%s322 + $0x34] sm:$0xf]
        %v345 = vld [vmem:[%s322 + $0x38] sm:$0xf]
        %v346 = vld [vmem:[%s322 + $0x3c] sm:$0xf]
        %v347 = vld [vmem:[%s322 + $0x40] sm:$0xf]
        %v348 = vld [vmem:[%s322 + $0x44] sm:$0xf]
        %v349 = vld [vmem:[%s322 + $0x48] sm:$0xf]
        %v350 = vld [vmem:[%s322 + $0x4c] sm:$0xf]
        %v351 = vld [vmem:[%s322 + $0x50] sm:$0xf]
        %v352 = vld [vmem:[%s322 + $0x54] sm:$0xf]
        %v353 = vld [vmem:[%s322 + $0x58] sm:$0xf]
        %v354 = vld [vmem:[%s322 + $0x5c] sm:$0xf]
        %v355 = vld [vmem:[%s322 + $0x60] sm:$0xf]
        %v356 = vld [vmem:[%s322 + $0x64] sm:$0xf]
        %v357 = vld [vmem:[%s322 + $0x68] sm:$0xf]
        %v358 = vld [vmem:[%s322 + $0x6c] sm:$0xf]
        %v359 = vld [vmem:[%s322 + $0x70] sm:$0xf]
        %v360 = vld [vmem:[%s322 + $0x74] sm:$0xf]
        %v361 = vld [vmem:[%s322 + $0x78] sm:$0xf]
        %v362 = vld [vmem:[%s322 + $0x7c] sm:$0xf]
        %v363 = vld [vmem:[%s322 + $0x80] sm:$0xf]
        %v364 = vld [vmem:[%s322 + $0x84] sm:$0xf]
        %v365 = vld [vmem:[%s322 + $0x88] sm:$0xf]
        %v366 = vld [vmem:[%s322 + $0x8c] sm:$0xf]
        %v367 = vld [vmem:[%s322 + $0x90] sm:$0xf]
        %v368 = vld [vmem:[%s322 + $0x94] sm:$0xf]
        %v369 = vld [vmem:[%s322 + $0x98] sm:$0xf]
        %v370 = vld [vmem:[%s322 + $0x9c] sm:$0xf]
        %v371 = vld [vmem:[%s322 + $0xa0] sm:$0xf]
        %v372 = vld [vmem:[%s322 + $0xa4] sm:$0xf]
        %v373 = vld [vmem:[%s322 + $0xa8] sm:$0xf]
        %v374 = vld [vmem:[%s322 + $0xac] sm:$0xf]
        %v375 = vld [vmem:[%s322 + $0xb0] sm:$0xf]
        %v376 = vld [vmem:[%s322 + $0xb4] sm:$0xf]
        %v377 = vld [vmem:[%s322 + $0xb8] sm:$0xf]
        %v378 = vld [vmem:[%s322 + $0xbc] sm:$0xf]
        %v379 = vld [vmem:[%s322 + $0xc0] sm:$0xf]
        %v380 = vld [vmem:[%s322 + $0xc4] sm:$0xf]
        %v381 = vld [vmem:[%s322 + $0xc8] sm:$0xf]
        %v382 = vld [vmem:[%s322 + $0xcc] sm:$0xf]
        %v383 = vld [vmem:[%s322 + $0xd0] sm:$0xf]
        %v384 = vld [vmem:[%s322 + $0xd4] sm:$0xf]
        %v385 = vld [vmem:[%s322 + $0xd8] sm:$0xf]
        %v386 = vld [vmem:[%s322 + $0xdc] sm:$0xf]
        %v387 = vld [vmem:[%s322 + $0xe0] sm:$0xf]
        %v388 = vld [vmem:[%s322 + $0xe4] sm:$0xf]
        %v389 = vld [vmem:[%s322 + $0xe8] sm:$0xf]
        %v390 = vld [vmem:[%s322 + $0xec] sm:$0xf]
        %v391 = vld [vmem:[%s322 + $0xf0] sm:$0xf]
        %v392 = vld [vmem:[%s322 + $0xf4] sm:$0xf]
        %v393 = vld [vmem:[%s322 + $0xf8] sm:$0xf]
        %v394 = vld [vmem:[%s322 + $0xfc] sm:$0xf]
        %v395 = vld [vmem:[%s322 + $0x100] sm:$0xf]
        %v396 = vld [vmem:[%s322 + $0x104] sm:$0xf]
        %v397 = vld [vmem:[%s322 + $0x108] sm:$0xf]
        %v398 = vld [vmem:[%s322 + $0x10c] sm:$0xf]
        %v399 = vld [vmem:[%s322 + $0x110] sm:$0xf]
        %v400 = vld [vmem:[%s322 + $0x114] sm:$0xf]
        %v401 = vld [vmem:[%s322 + $0x118] sm:$0xf]
        %v402 = vld [vmem:[%s322 + $0x11c] sm:$0xf]
        %v403 = vld [vmem:[%s322 + $0x120] sm:$0xf]
        %v404 = vld [vmem:[%s322 + $0x124] sm:$0xf]
        %v405 = vld [vmem:[%s322 + $0x128] sm:$0xf]
        %v406 = vld [vmem:[%s322 + $0x12c] sm:$0xf]
        %v407 = vld [vmem:[%s322 + $0x130] sm:$0xf]
        %v408 = vld [vmem:[%s322 + $0x134] sm:$0xf]
        %v409 = vld [vmem:[%s322 + $0x138] sm:$0xf]
        %v410 = vld [vmem:[%s322 + $0x13c] sm:$0xf]
        %v411 = vld [vmem:[%s322 + $0x140] sm:$0xf]
        %v412 = vld [vmem:[%s322 + $0x144] sm:$0xf]
        %v413 = vld [vmem:[%s322 + $0x148] sm:$0xf]
        %v414 = vld [vmem:[%s322 + $0x14c] sm:$0xf]
        %v415 = vld [vmem:[%s322 + $0x150] sm:$0xf]
        %v416 = vld [vmem:[%s322 + $0x154] sm:$0xf]
        %v417 = vld [vmem:[%s322 + $0x158] sm:$0xf]
        %v418 = vld [vmem:[%s322 + $0x15c] sm:$0xf]
        %v419 = vld [vmem:[%s322 + $0x160] sm:$0xf]
        %v420 = vld [vmem:[%s322 + $0x164] sm:$0xf]
        %v421 = vld [vmem:[%s322 + $0x168] sm:$0xf]
        %v422 = vld [vmem:[%s322 + $0x16c] sm:$0xf]
        %v423 = vld [vmem:[%s322 + $0x170] sm:$0xf]
        %v424 = vld [vmem:[%s322 + $0x174] sm:$0xf]
        %v425 = vld [vmem:[%s322 + $0x178] sm:$0xf]
        %v426 = vld [vmem:[%s322 + $0x17c] sm:$0xf]
        %v427 = vld [vmem:[%s322 + $0x180] sm:$0xf]
        %v428 = vld [vmem:[%s322 + $0x184] sm:$0xf]
        %v429 = vld [vmem:[%s322 + $0x188] sm:$0xf]
        %v430 = vld [vmem:[%s322 + $0x18c] sm:$0xf]
        %v431 = vld [vmem:[%s322 + $0x190] sm:$0xf]
        %v432 = vld [vmem:[%s322 + $0x194] sm:$0xf]
        %v433 = vld [vmem:[%s322 + $0x198] sm:$0xf]
        %v434 = vld [vmem:[%s322 + $0x19c] sm:$0xf]
        %v435 = vld [vmem:[%s322 + $0x1a0] sm:$0xf]
        %v436 = vld [vmem:[%s322 + $0x1a4] sm:$0xf]
        %v437 = vld [vmem:[%s322 + $0x1a8] sm:$0xf]
        %v438 = vld [vmem:[%s322 + $0x1ac] sm:$0xf]
        %v439 = vld [vmem:[%s322 + $0x1b0] sm:$0xf]
        %v440 = vld [vmem:[%s322 + $0x1b4] sm:$0xf]
        %v441 = vld [vmem:[%s322 + $0x1b8] sm:$0xf]
        %v442 = vld [vmem:[%s322 + $0x1bc] sm:$0xf]
        %v443 = vld [vmem:[%s322 + $0x1c0] sm:$0xf]
        %v444 = vld [vmem:[%s322 + $0x1c4] sm:$0xf]
        %v445 = vld [vmem:[%s322 + $0x1c8] sm:$0xf]
        %v446 = vld [vmem:[%s322 + $0x1cc] sm:$0xf]
        %v447 = vld [vmem:[%s322 + $0x1d0] sm:$0xf]
        %v448 = vld [vmem:[%s322 + $0x1d4] sm:$0xf]
        %v449 = vld [vmem:[%s322 + $0x1d8] sm:$0xf]
        %v450 = vld [vmem:[%s322 + $0x1dc] sm:$0xf]
        %v451 = vld [vmem:[%s322 + $0x1e0] sm:$0xf]
        %v452 = vld [vmem:[%s322 + $0x1e4] sm:$0xf]
        %v453 = vld [vmem:[%s322 + $0x1e8] sm:$0xf]
        %v454 = vld [vmem:[%s322 + $0x1ec] sm:$0xf]
        %v455 = vld [vmem:[%s322 + $0x1f0] sm:$0xf]
        %v456 = vld [vmem:[%s322 + $0x1f4] sm:$0xf]
        %v457 = vld [vmem:[%s322 + $0x1f8] sm:$0xf]
        %v458 = vld [vmem:[%s322 + $0x1fc] sm:$0xf]
        %v459 = vld [vmem:[%s328] sm:$0xf]
        %v460 = vld [vmem:[%s328 + $0x4] sm:$0xf]
        %v461 = vld [vmem:[%s328 + $0x8] sm:$0xf]
        %v462 = vld [vmem:[%s328 + $0xc] sm:$0xf]
        %v463 = vld [vmem:[%s328 + $0x10] sm:$0xf]
        %v464 = vld [vmem:[%s328 + $0x14] sm:$0xf]
        %v465 = vld [vmem:[%s328 + $0x18] sm:$0xf]
        %v466 = vld [vmem:[%s328 + $0x1c] sm:$0xf]
        %v467 = vld [vmem:[%s328 + $0x20] sm:$0xf]
        %v468 = vld [vmem:[%s328 + $0x24] sm:$0xf]
        %v469 = vld [vmem:[%s328 + $0x28] sm:$0xf]
        %v470 = vld [vmem:[%s328 + $0x2c] sm:$0xf]
        %v471 = vld [vmem:[%s328 + $0x30] sm:$0xf]
        %v472 = vld [vmem:[%s328 + $0x34] sm:$0xf]
        %v473 = vld [vmem:[%s328 + $0x38] sm:$0xf]
        %v474 = vld [vmem:[%s328 + $0x3c] sm:$0xf]
        %v475 = vld [vmem:[%s328 + $0x40] sm:$0xf]
        %v476 = vld [vmem:[%s328 + $0x44] sm:$0xf]
        %v477 = vld [vmem:[%s328 + $0x48] sm:$0xf]
        %v478 = vld [vmem:[%s328 + $0x4c] sm:$0xf]
        %v479 = vld [vmem:[%s328 + $0x50] sm:$0xf]
        %v480 = vld [vmem:[%s328 + $0x54] sm:$0xf]
        %v481 = vld [vmem:[%s328 + $0x58] sm:$0xf]
        %v482 = vld [vmem:[%s328 + $0x5c] sm:$0xf]
        %v483 = vld [vmem:[%s328 + $0x60] sm:$0xf]
        %v484 = vld [vmem:[%s328 + $0x64] sm:$0xf]
        %v485 = vld [vmem:[%s328 + $0x68] sm:$0xf]
        %v486 = vld [vmem:[%s328 + $0x6c] sm:$0xf]
        %v487 = vld [vmem:[%s328 + $0x70] sm:$0xf]
        %v488 = vld [vmem:[%s328 + $0x74] sm:$0xf]
        %v489 = vld [vmem:[%s328 + $0x78] sm:$0xf]
        %v490 = vld [vmem:[%s328 + $0x7c] sm:$0xf]
        %v491 = vld [vmem:[%s328 + $0x80] sm:$0xf]
        %v492 = vld [vmem:[%s328 + $0x84] sm:$0xf]
        %v493 = vld [vmem:[%s328 + $0x88] sm:$0xf]
        %v494 = vld [vmem:[%s328 + $0x8c] sm:$0xf]
        %v495 = vld [vmem:[%s328 + $0x90] sm:$0xf]
        %v496 = vld [vmem:[%s328 + $0x94] sm:$0xf]
        %v497 = vld [vmem:[%s328 + $0x98] sm:$0xf]
        %v498 = vld [vmem:[%s328 + $0x9c] sm:$0xf]
        %v499 = vld [vmem:[%s328 + $0xa0] sm:$0xf]
        %v500 = vld [vmem:[%s328 + $0xa4] sm:$0xf]
        %v501 = vld [vmem:[%s328 + $0xa8] sm:$0xf]
        %v502 = vld [vmem:[%s328 + $0xac] sm:$0xf]
        %v503 = vld [vmem:[%s328 + $0xb0] sm:$0xf]
        %v504 = vld [vmem:[%s328 + $0xb4] sm:$0xf]
        %v505 = vld [vmem:[%s328 + $0xb8] sm:$0xf]
        %v506 = vld [vmem:[%s328 + $0xbc] sm:$0xf]
        %v507 = vld [vmem:[%s328 + $0xc0] sm:$0xf]
        %v508 = vld [vmem:[%s328 + $0xc4] sm:$0xf]
        %v509 = vld [vmem:[%s328 + $0xc8] sm:$0xf]
        %v510 = vld [vmem:[%s328 + $0xcc] sm:$0xf]
        %v511 = vld [vmem:[%s328 + $0xd0] sm:$0xf]
        %v512 = vld [vmem:[%s328 + $0xd4] sm:$0xf]
        %v513 = vld [vmem:[%s328 + $0xd8] sm:$0xf]
        %v514 = vld [vmem:[%s328 + $0xdc] sm:$0xf]
        %v515 = vld [vmem:[%s328 + $0xe0] sm:$0xf]
        %v516 = vld [vmem:[%s328 + $0xe4] sm:$0xf]
        %v517 = vld [vmem:[%s328 + $0xe8] sm:$0xf]
        %v518 = vld [vmem:[%s328 + $0xec] sm:$0xf]
        %v519 = vld [vmem:[%s328 + $0xf0] sm:$0xf]
        %v520 = vld [vmem:[%s328 + $0xf4] sm:$0xf]
        %v521 = vld [vmem:[%s328 + $0xf8] sm:$0xf]
        %v522 = vld [vmem:[%s328 + $0xfc] sm:$0xf]
        %v523 = vld [vmem:[%s328 + $0x100] sm:$0xf]
        %v524 = vld [vmem:[%s328 + $0x104] sm:$0xf]
        %v525 = vld [vmem:[%s328 + $0x108] sm:$0xf]
        %v526 = vld [vmem:[%s328 + $0x10c] sm:$0xf]
        %v527 = vld [vmem:[%s328 + $0x110] sm:$0xf]
        %v528 = vld [vmem:[%s328 + $0x114] sm:$0xf]
        %v529 = vld [vmem:[%s328 + $0x118] sm:$0xf]
        %v530 = vld [vmem:[%s328 + $0x11c] sm:$0xf]
        %v531 = vld [vmem:[%s328 + $0x120] sm:$0xf]
        %v532 = vld [vmem:[%s328 + $0x124] sm:$0xf]
        %v533 = vld [vmem:[%s328 + $0x128] sm:$0xf]
        %v534 = vld [vmem:[%s328 + $0x12c] sm:$0xf]
        %v535 = vld [vmem:[%s328 + $0x130] sm:$0xf]
        %v536 = vld [vmem:[%s328 + $0x134] sm:$0xf]
        %v537 = vld [vmem:[%s328 + $0x138] sm:$0xf]
        %v538 = vld [vmem:[%s328 + $0x13c] sm:$0xf]
        %v539 = vld [vmem:[%s328 + $0x140] sm:$0xf]
        %v540 = vld [vmem:[%s328 + $0x144] sm:$0xf]
        %v541 = vld [vmem:[%s328 + $0x148] sm:$0xf]
        %v542 = vld [vmem:[%s328 + $0x14c] sm:$0xf]
        %v543 = vld [vmem:[%s328 + $0x150] sm:$0xf]
        %v544 = vld [vmem:[%s328 + $0x154] sm:$0xf]
        %v545 = vld [vmem:[%s328 + $0x158] sm:$0xf]
        %v546 = vld [vmem:[%s328 + $0x15c] sm:$0xf]
        %v547 = vld [vmem:[%s328 + $0x160] sm:$0xf]
        %v548 = vld [vmem:[%s328 + $0x164] sm:$0xf]
        %v549 = vld [vmem:[%s328 + $0x168] sm:$0xf]
        %v550 = vld [vmem:[%s328 + $0x16c] sm:$0xf]
        %v551 = vld [vmem:[%s328 + $0x170] sm:$0xf]
        %v552 = vld [vmem:[%s328 + $0x174] sm:$0xf]
        %v553 = vld [vmem:[%s328 + $0x178] sm:$0xf]
        %v554 = vld [vmem:[%s328 + $0x17c] sm:$0xf]
        %v555 = vld [vmem:[%s328 + $0x180] sm:$0xf]
        %v556 = vld [vmem:[%s328 + $0x184] sm:$0xf]
        %v557 = vld [vmem:[%s328 + $0x188] sm:$0xf]
        %v558 = vld [vmem:[%s328 + $0x18c] sm:$0xf]
        %v559 = vld [vmem:[%s328 + $0x190] sm:$0xf]
        %v560 = vld [vmem:[%s328 + $0x194] sm:$0xf]
        %v561 = vld [vmem:[%s328 + $0x198] sm:$0xf]
        %v562 = vld [vmem:[%s328 + $0x19c] sm:$0xf]
        %v563 = vld [vmem:[%s328 + $0x1a0] sm:$0xf]
        %v564 = vld [vmem:[%s328 + $0x1a4] sm:$0xf]
        %v565 = vld [vmem:[%s328 + $0x1a8] sm:$0xf]
        %v566 = vld [vmem:[%s328 + $0x1ac] sm:$0xf]
        %v567 = vld [vmem:[%s328 + $0x1b0] sm:$0xf]
        %v568 = vld [vmem:[%s328 + $0x1b4] sm:$0xf]
        %v569 = vld [vmem:[%s328 + $0x1b8] sm:$0xf]
        %v570 = vld [vmem:[%s328 + $0x1bc] sm:$0xf]
        %v571 = vld [vmem:[%s328 + $0x1c0] sm:$0xf]
        %v572 = vld [vmem:[%s328 + $0x1c4] sm:$0xf]
        %v573 = vld [vmem:[%s328 + $0x1c8] sm:$0xf]
        %v574 = vld [vmem:[%s328 + $0x1cc] sm:$0xf]
        %v575 = vld [vmem:[%s328 + $0x1d0] sm:$0xf]
        %v576 = vld [vmem:[%s328 + $0x1d4] sm:$0xf]
        %v577 = vld [vmem:[%s328 + $0x1d8] sm:$0xf]
        %v578 = vld [vmem:[%s328 + $0x1dc] sm:$0xf]
        %v579 = vld [vmem:[%s328 + $0x1e0] sm:$0xf]
        %v580 = vld [vmem:[%s328 + $0x1e4] sm:$0xf]
        %v581 = vld [vmem:[%s328 + $0x1e8] sm:$0xf]
        %v582 = vld [vmem:[%s328 + $0x1ec] sm:$0xf]
        %v583 = vld [vmem:[%s328 + $0x1f0] sm:$0xf]
        %v584 = vld [vmem:[%s328 + $0x1f4] sm:$0xf]
        %v585 = vld [vmem:[%s328 + $0x1f8] sm:$0xf]
        %v586 = vld [vmem:[%s328 + $0x1fc] sm:$0xf]
        %v587 = vmul.bf16 %v331, %v459
        %v588 = vmul.bf16 %v332, %v460
        %v589 = vmul.bf16 %v333, %v461
        %v590 = vmul.bf16 %v334, %v462
        %v591 = vmul.bf16 %v335, %v463
        %v592 = vmul.bf16 %v336, %v464
        %v593 = vmul.bf16 %v337, %v465
        %v594 = vmul.bf16 %v338, %v466
        %v595 = vmul.bf16 %v339, %v467
        %v596 = vmul.bf16 %v340, %v468
        %v597 = vmul.bf16 %v341, %v469
        %v598 = vmul.bf16 %v342, %v470
        %v599 = vmul.bf16 %v343, %v471
        %v600 = vmul.bf16 %v344, %v472
        %v601 = vmul.bf16 %v345, %v473
        %v602 = vmul.bf16 %v346, %v474
        %v603 = vmul.bf16 %v347, %v475
        %v604 = vmul.bf16 %v348, %v476
        %v605 = vmul.bf16 %v349, %v477
        %v606 = vmul.bf16 %v350, %v478
        %v607 = vmul.bf16 %v351, %v479
        %v608 = vmul.bf16 %v352, %v480
        %v609 = vmul.bf16 %v353, %v481
        %v610 = vmul.bf16 %v354, %v482
        %v611 = vmul.bf16 %v355, %v483
        %v612 = vmul.bf16 %v356, %v484
        %v613 = vmul.bf16 %v357, %v485
        %v614 = vmul.bf16 %v358, %v486
        %v615 = vmul.bf16 %v359, %v487
        %v616 = vmul.bf16 %v360, %v488
        %v617 = vmul.bf16 %v361, %v489
        %v618 = vmul.bf16 %v362, %v490
        %v619 = vmul.bf16 %v363, %v491
        %v620 = vmul.bf16 %v364, %v492
        %v621 = vmul.bf16 %v365, %v493
        %v622 = vmul.bf16 %v366, %v494
        %v623 = vmul.bf16 %v367, %v495
        %v624 = vmul.bf16 %v368, %v496
        %v625 = vmul.bf16 %v369, %v497
        %v626 = vmul.bf16 %v370, %v498
        %v627 = vmul.bf16 %v371, %v499
        %v628 = vmul.bf16 %v372, %v500
        %v629 = vmul.bf16 %v373, %v501
        %v630 = vmul.bf16 %v374, %v502
        %v631 = vmul.bf16 %v375, %v503
        %v632 = vmul.bf16 %v376, %v504
        %v633 = vmul.bf16 %v377, %v505
        %v634 = vmul.bf16 %v378, %v506
        %v635 = vmul.bf16 %v379, %v507
        %v636 = vmul.bf16 %v380, %v508
        %v637 = vmul.bf16 %v381, %v509
        %v638 = vmul.bf16 %v382, %v510
        %v639 = vmul.bf16 %v383, %v511
        %v640 = vmul.bf16 %v384, %v512
        %v641 = vmul.bf16 %v385, %v513
        %v642 = vmul.bf16 %v386, %v514
        %v643 = vmul.bf16 %v387, %v515
        %v644 = vmul.bf16 %v388, %v516
        %v645 = vmul.bf16 %v389, %v517
        %v646 = vmul.bf16 %v390, %v518
        %v647 = vmul.bf16 %v391, %v519
        %v648 = vmul.bf16 %v392, %v520
        %v649 = vmul.bf16 %v393, %v521
        %v650 = vmul.bf16 %v394, %v522
        %v651 = vmul.bf16 %v395, %v523
        %v652 = vmul.bf16 %v396, %v524
        %v653 = vmul.bf16 %v397, %v525
        %v654 = vmul.bf16 %v398, %v526
        %v655 = vmul.bf16 %v399, %v527
        %v656 = vmul.bf16 %v400, %v528
        %v657 = vmul.bf16 %v401, %v529
        %v658 = vmul.bf16 %v402, %v530
        %v659 = vmul.bf16 %v403, %v531
        %v660 = vmul.bf16 %v404, %v532
        %v661 = vmul.bf16 %v405, %v533
        %v662 = vmul.bf16 %v406, %v534
        %v663 = vmul.bf16 %v407, %v535
        %v664 = vmul.bf16 %v408, %v536
        %v665 = vmul.bf16 %v409, %v537
        %v666 = vmul.bf16 %v410, %v538
        %v667 = vmul.bf16 %v411, %v539
        %v668 = vmul.bf16 %v412, %v540
        %v669 = vmul.bf16 %v413, %v541
        %v670 = vmul.bf16 %v414, %v542
        %v671 = vmul.bf16 %v415, %v543
        %v672 = vmul.bf16 %v416, %v544
        %v673 = vmul.bf16 %v417, %v545
        %v674 = vmul.bf16 %v418, %v546
        %v675 = vmul.bf16 %v419, %v547
        %v676 = vmul.bf16 %v420, %v548
        %v677 = vmul.bf16 %v421, %v549
        %v678 = vmul.bf16 %v422, %v550
        %v679 = vmul.bf16 %v423, %v551
        %v680 = vmul.bf16 %v424, %v552
        %v681 = vmul.bf16 %v425, %v553
        %v682 = vmul.bf16 %v426, %v554
        %v683 = vmul.bf16 %v427, %v555
        %v684 = vmul.bf16 %v428, %v556
        %v685 = vmul.bf16 %v429, %v557
        %v686 = vmul.bf16 %v430, %v558
        %v687 = vmul.bf16 %v431, %v559
        %v688 = vmul.bf16 %v432, %v560
        %v689 = vmul.bf16 %v433, %v561
        %v690 = vmul.bf16 %v434, %v562
        %v691 = vmul.bf16 %v435, %v563
        %v692 = vmul.bf16 %v436, %v564
        %v693 = vmul.bf16 %v437, %v565
        %v694 = vmul.bf16 %v438, %v566
        %v695 = vmul.bf16 %v439, %v567
        %v696 = vmul.bf16 %v440, %v568
        %v697 = vmul.bf16 %v441, %v569
        %v698 = vmul.bf16 %v442, %v570
        %v699 = vmul.bf16 %v443, %v571
        %v700 = vmul.bf16 %v444, %v572
        %v701 = vmul.bf16 %v445, %v573
        %v702 = vmul.bf16 %v446, %v574
        %v703 = vmul.bf16 %v447, %v575
        %v704 = vmul.bf16 %v448, %v576
        %v705 = vmul.bf16 %v449, %v577
        %v706 = vmul.bf16 %v450, %v578
        %v707 = vmul.bf16 %v451, %v579
        %v708 = vmul.bf16 %v452, %v580
        %v709 = vmul.bf16 %v453, %v581
        %v710 = vmul.bf16 %v454, %v582
        %v711 = vmul.bf16 %v455, %v583
        %v712 = vmul.bf16 %v456, %v584
        %v713 = vmul.bf16 %v457, %v585
        %v714 = vmul.bf16 %v458, %v586
        %v715 = vld [vmem:[%s2] sm:$0xf]
        %v716 = vld [vmem:[%s2 + $0x4] sm:$0xf]
        %v717 = vld [vmem:[%s2 + $0x8] sm:$0xf]
        %v718 = vld [vmem:[%s2 + $0xc] sm:$0xf]
        %v719 = vld [vmem:[%s5] sm:$0x1]
        %v721 = vlaneseq
        %v722 = vshrl.u32 %v721, 7
        %v723 = vsub.s32 0, %v722
        %v724 = vrot.slane %v719, %v723
        %v854 = vunpack.c.l.b16 %v587
        %v855 = vunpack.c.l.b16 %v588
        %v856 = vunpack.c.l.b16 %v589
        %v857 = vunpack.c.l.b16 %v590
        %v858 = vunpack.c.l.b16 %v591
        %v859 = vunpack.c.l.b16 %v592
        %v860 = vunpack.c.l.b16 %v593
        %v861 = vunpack.c.l.b16 %v594
        %v862 = vunpack.c.l.b16 %v595
        %v863 = vunpack.c.l.b16 %v596
        %v864 = vunpack.c.l.b16 %v597
        %v865 = vunpack.c.l.b16 %v598
        %v866 = vunpack.c.l.b16 %v599
        %v867 = vunpack.c.l.b16 %v600
        %v868 = vunpack.c.l.b16 %v601
        %v869 = vunpack.c.l.b16 %v602
        %v870 = vunpack.c.l.b16 %v603
        %v871 = vunpack.c.l.b16 %v604
        %v872 = vunpack.c.l.b16 %v605
        %v873 = vunpack.c.l.b16 %v606
        %v874 = vunpack.c.l.b16 %v607
        %v875 = vunpack.c.l.b16 %v608
        %v876 = vunpack.c.l.b16 %v609
        %v877 = vunpack.c.l.b16 %v610
        %v878 = vunpack.c.l.b16 %v611
        %v879 = vunpack.c.l.b16 %v612
        %v880 = vunpack.c.l.b16 %v613
        %v881 = vunpack.c.l.b16 %v614
        %v882 = vunpack.c.l.b16 %v615
        %v883 = vunpack.c.l.b16 %v616
        %v884 = vunpack.c.l.b16 %v617
        %v885 = vunpack.c.l.b16 %v618
        %v886 = vunpack.c.l.b16 %v619
        %v887 = vunpack.c.l.b16 %v620
        %v888 = vunpack.c.l.b16 %v621
        %v889 = vunpack.c.l.b16 %v622
        %v890 = vunpack.c.l.b16 %v623
        %v891 = vunpack.c.l.b16 %v624
        %v892 = vunpack.c.l.b16 %v625
        %v893 = vunpack.c.l.b16 %v626
        %v894 = vunpack.c.l.b16 %v627
        %v895 = vunpack.c.l.b16 %v628
        %v896 = vunpack.c.l.b16 %v629
        %v897 = vunpack.c.l.b16 %v630
        %v898 = vunpack.c.l.b16 %v631
        %v899 = vunpack.c.l.b16 %v632
        %v900 = vunpack.c.l.b16 %v633
        %v901 = vunpack.c.l.b16 %v634
        %v902 = vunpack.c.l.b16 %v635
        %v903 = vunpack.c.l.b16 %v636
        %v904 = vunpack.c.l.b16 %v637
        %v905 = vunpack.c.l.b16 %v638
        %v906 = vunpack.c.l.b16 %v639
        %v907 = vunpack.c.l.b16 %v640
        %v908 = vunpack.c.l.b16 %v641
        %v909 = vunpack.c.l.b16 %v642
        %v910 = vunpack.c.l.b16 %v643
        %v911 = vunpack.c.l.b16 %v644
        %v912 = vunpack.c.l.b16 %v645
        %v913 = vunpack.c.l.b16 %v646
        %v914 = vunpack.c.l.b16 %v647
        %v915 = vunpack.c.l.b16 %v648
        %v916 = vunpack.c.l.b16 %v649
        %v917 = vunpack.c.l.b16 %v650
        %v918 = vunpack.c.l.b16 %v651
        %v919 = vunpack.c.l.b16 %v652
        %v920 = vunpack.c.l.b16 %v653
        %v921 = vunpack.c.l.b16 %v654
        %v922 = vunpack.c.l.b16 %v655
        %v923 = vunpack.c.l.b16 %v656
        %v924 = vunpack.c.l.b16 %v657
        %v925 = vunpack.c.l.b16 %v658
        %v926 = vunpack.c.l.b16 %v659
        %v927 = vunpack.c.l.b16 %v660
        %v928 = vunpack.c.l.b16 %v661
        %v929 = vunpack.c.l.b16 %v662
        %v930 = vunpack.c.l.b16 %v663
        %v931 = vunpack.c.l.b16 %v664
        %v932 = vunpack.c.l.b16 %v665
        %v933 = vunpack.c.l.b16 %v666
        %v934 = vunpack.c.l.b16 %v667
        %v935 = vunpack.c.l.b16 %v668
        %v936 = vunpack.c.l.b16 %v669
        %v937 = vunpack.c.l.b16 %v670
        %v938 = vunpack.c.l.b16 %v671
        %v939 = vunpack.c.l.b16 %v672
        %v940 = vunpack.c.l.b16 %v673
        %v941 = vunpack.c.l.b16 %v674
        %v942 = vunpack.c.l.b16 %v675
        %v943 = vunpack.c.l.b16 %v676
        %v944 = vunpack.c.l.b16 %v677
        %v945 = vunpack.c.l.b16 %v678
        %v946 = vunpack.c.l.b16 %v679
        %v947 = vunpack.c.l.b16 %v680
        %v948 = vunpack.c.l.b16 %v681
        %v949 = vunpack.c.l.b16 %v682
        %v950 = vunpack.c.l.b16 %v683
        %v951 = vunpack.c.l.b16 %v684
        %v952 = vunpack.c.l.b16 %v685
        %v953 = vunpack.c.l.b16 %v686
        %v954 = vunpack.c.l.b16 %v687
        %v955 = vunpack.c.l.b16 %v688
        %v956 = vunpack.c.l.b16 %v689
        %v957 = vunpack.c.l.b16 %v690
        %v958 = vunpack.c.l.b16 %v691
        %v959 = vunpack.c.l.b16 %v692
        %v960 = vunpack.c.l.b16 %v693
        %v961 = vunpack.c.l.b16 %v694
        %v962 = vunpack.c.l.b16 %v695
        %v963 = vunpack.c.l.b16 %v696
        %v964 = vunpack.c.l.b16 %v697
        %v965 = vunpack.c.l.b16 %v698
        %v966 = vunpack.c.l.b16 %v699
        %v967 = vunpack.c.l.b16 %v700
        %v968 = vunpack.c.l.b16 %v701
        %v969 = vunpack.c.l.b16 %v702
        %v970 = vunpack.c.l.b16 %v703
        %v971 = vunpack.c.l.b16 %v704
        %v972 = vunpack.c.l.b16 %v705
        %v973 = vunpack.c.l.b16 %v706
        %v974 = vunpack.c.l.b16 %v707
        %v975 = vunpack.c.l.b16 %v708
        %v976 = vunpack.c.l.b16 %v709
        %v977 = vunpack.c.l.b16 %v710
        %v978 = vunpack.c.l.b16 %v711
        %v979 = vunpack.c.l.b16 %v712
        %v980 = vunpack.c.l.b16 %v713
        %v981 = vunpack.c.l.b16 %v714
        %v982 = vpack.c.b16 %v855, %v854
        %v983 = vpack.c.b16 %v857, %v856
        %v984 = vpack.c.b16 %v859, %v858
        %v985 = vpack.c.b16 %v861, %v860
        %v986 = vpack.c.b16 %v863, %v862
        %v987 = vpack.c.b16 %v865, %v864
        %v988 = vpack.c.b16 %v867, %v866
        %v989 = vpack.c.b16 %v869, %v868
        %v990 = vpack.c.b16 %v871, %v870
        %v991 = vpack.c.b16 %v873, %v872
        %v992 = vpack.c.b16 %v875, %v874
        %v993 = vpack.c.b16 %v877, %v876
        %v994 = vpack.c.b16 %v879, %v878
        %v995 = vpack.c.b16 %v881, %v880
        %v996 = vpack.c.b16 %v883, %v882
        %v997 = vpack.c.b16 %v885, %v884
        %v998 = vpack.c.b16 %v887, %v886
        %v999 = vpack.c.b16 %v889, %v888
        %v1000 = vpack.c.b16 %v891, %v890
        %v1001 = vpack.c.b16 %v893, %v892
        %v1002 = vpack.c.b16 %v895, %v894
        %v1003 = vpack.c.b16 %v897, %v896
        %v1004 = vpack.c.b16 %v899, %v898
        %v1005 = vpack.c.b16 %v901, %v900
        %v1006 = vpack.c.b16 %v903, %v902
        %v1007 = vpack.c.b16 %v905, %v904
        %v1008 = vpack.c.b16 %v907, %v906
        %v1009 = vpack.c.b16 %v909, %v908
        %v1010 = vpack.c.b16 %v911, %v910
        %v1011 = vpack.c.b16 %v913, %v912
        %v1012 = vpack.c.b16 %v915, %v914
        %v1013 = vpack.c.b16 %v917, %v916
        %v1014 = vpack.c.b16 %v919, %v918
        %v1015 = vpack.c.b16 %v921, %v920
        %v1016 = vpack.c.b16 %v923, %v922
        %v1017 = vpack.c.b16 %v925, %v924
        %v1018 = vpack.c.b16 %v927, %v926
        %v1019 = vpack.c.b16 %v929, %v928
        %v1020 = vpack.c.b16 %v931, %v930
        %v1021 = vpack.c.b16 %v933, %v932
        %v1022 = vpack.c.b16 %v935, %v934
        %v1023 = vpack.c.b16 %v937, %v936
        %v1024 = vpack.c.b16 %v939, %v938
        %v1025 = vpack.c.b16 %v941, %v940
        %v1026 = vpack.c.b16 %v943, %v942
        %v1027 = vpack.c.b16 %v945, %v944
        %v1028 = vpack.c.b16 %v947, %v946
        %v1029 = vpack.c.b16 %v949, %v948
        %v1030 = vpack.c.b16 %v951, %v950
        %v1031 = vpack.c.b16 %v953, %v952
        %v1032 = vpack.c.b16 %v955, %v954
        %v1033 = vpack.c.b16 %v957, %v956
        %v1034 = vpack.c.b16 %v959, %v958
        %v1035 = vpack.c.b16 %v961, %v960
        %v1036 = vpack.c.b16 %v963, %v962
        %v1037 = vpack.c.b16 %v965, %v964
        %v1038 = vpack.c.b16 %v967, %v966
        %v1039 = vpack.c.b16 %v969, %v968
        %v1040 = vpack.c.b16 %v971, %v970
        %v1041 = vpack.c.b16 %v973, %v972
        %v1042 = vpack.c.b16 %v975, %v974
        %v1043 = vpack.c.b16 %v977, %v976
        %v1044 = vpack.c.b16 %v979, %v978
        %v1045 = vpack.c.b16 %v981, %v980
        %v1050 = vunpack.c.l.b16 %v715
        %v1051 = vunpack.c.l.b16 %v716
        %v1052 = vunpack.c.l.b16 %v717
        %v1053 = vunpack.c.l.b16 %v718
        %v1054 = vpack.c.b16 %v1051, %v1050
        %v1055 = vpack.c.b16 %v1053, %v1052
        %vm1058 = vcmask 261120
        %v1060 = vsel %vm1058, %v982, 0
        %v1063 = vsel %vm1058, %v983, 0
        %v1066 = vsel %vm1058, %v984, 0
        %v1069 = vsel %vm1058, %v985, 0
        %v1072 = vsel %vm1058, %v986, 0
        %v1075 = vsel %vm1058, %v987, 0
        %v1078 = vsel %vm1058, %v988, 0
        %v1081 = vsel %vm1058, %v989, 0
        %v1084 = vsel %vm1058, %v990, 0
        %v1087 = vsel %vm1058, %v991, 0
        %v1090 = vsel %vm1058, %v992, 0
        %v1093 = vsel %vm1058, %v993, 0
        %v1096 = vsel %vm1058, %v994, 0
        %v1099 = vsel %vm1058, %v995, 0
        %v1102 = vsel %vm1058, %v996, 0
        %v1105 = vsel %vm1058, %v997, 0
        %v1108 = vsel %vm1058, %v998, 0
        %v1111 = vsel %vm1058, %v999, 0
        %v1114 = vsel %vm1058, %v1000, 0
        %v1117 = vsel %vm1058, %v1001, 0
        %v1120 = vsel %vm1058, %v1002, 0
        %v1123 = vsel %vm1058, %v1003, 0
        %v1126 = vsel %vm1058, %v1004, 0
        %v1129 = vsel %vm1058, %v1005, 0
        %v1132 = vsel %vm1058, %v1006, 0
        %v1135 = vsel %vm1058, %v1007, 0
        %v1138 = vsel %vm1058, %v1008, 0
        %v1141 = vsel %vm1058, %v1009, 0
        %v1144 = vsel %vm1058, %v1010, 0
        %v1147 = vsel %vm1058, %v1011, 0
        %v1150 = vsel %vm1058, %v1012, 0
        %v1153 = vsel %vm1058, %v1013, 0
        %v1156 = vsel %vm1058, %v1014, 0
        %v1159 = vsel %vm1058, %v1015, 0
        %v1162 = vsel %vm1058, %v1016, 0
        %v1165 = vsel %vm1058, %v1017, 0
        %v1168 = vsel %vm1058, %v1018, 0
        %v1171 = vsel %vm1058, %v1019, 0
        %v1174 = vsel %vm1058, %v1020, 0
        %v1177 = vsel %vm1058, %v1021, 0
        %v1180 = vsel %vm1058, %v1022, 0
        %v1183 = vsel %vm1058, %v1023, 0
        %v1186 = vsel %vm1058, %v1024, 0
        %v1189 = vsel %vm1058, %v1025, 0
        %v1192 = vsel %vm1058, %v1026, 0
        %v1195 = vsel %vm1058, %v1027, 0
        %v1198 = vsel %vm1058, %v1028, 0
        %v1201 = vsel %vm1058, %v1029, 0
        %v1204 = vsel %vm1058, %v1030, 0
        %v1207 = vsel %vm1058, %v1031, 0
        %v1210 = vsel %vm1058, %v1032, 0
        %v1213 = vsel %vm1058, %v1033, 0
        %v1216 = vsel %vm1058, %v1034, 0
        %v1219 = vsel %vm1058, %v1035, 0
        %v1222 = vsel %vm1058, %v1036, 0
        %v1225 = vsel %vm1058, %v1037, 0
        %v1228 = vsel %vm1058, %v1038, 0
        %v1231 = vsel %vm1058, %v1039, 0
        %v1234 = vsel %vm1058, %v1040, 0
        %v1237 = vsel %vm1058, %v1041, 0
        %v1240 = vsel %vm1058, %v1042, 0
        %v1243 = vsel %vm1058, %v1043, 0
        %v1246 = vsel %vm1058, %v1044, 0
        %v1249 = vsel %vm1058, %v1045, 0
        %1251 = vmatprep.subr.bf16.mxu0 0
        %1252 = vmatpush1.bf16.msra.mxu0 %v1054
        %1253 = vmatprep.subr.bf16.mxu0 0
        %1254 = vmatpush1.bf16.msra.mxu0 %v1055
        %1255 = vmatprep.subr.bf16.mxu0 0
        %1256 = vmatpush1.bf16.msra.mxu0 0
        %1257 = vmatprep.subr.bf16.mxu0 0
        %1258 = vmatpush1.bf16.msra.mxu0 0
        %1259 = vmatprep.subr.bf16.mxu0 0
        %1260 = vmatpush1.bf16.msra.mxu0 0
        %1261 = vmatprep.subr.bf16.mxu0 0
        %1262 = vmatpush1.bf16.msra.mxu0 0
        %1263 = vmatprep.subr.bf16.mxu0 0
        %1264 = vmatpush1.bf16.msra.mxu0 0
        %1265 = vmatprep.subr.bf16.mxu0 0
        %1266 = vmatpush1.bf16.msra.mxu0 0
        %1267 = vmatprep.subr.bf16.mxu0 0
        %1268 = vmatpush1.bf16.msra.mxu0 0
        %1269 = vmatprep.subr.bf16.mxu0 0
        %1270 = vmatpush1.bf16.msra.mxu0 0
        %1271 = vmatprep.subr.bf16.mxu0 0
        %1272 = vmatpush1.bf16.msra.mxu0 0
        %1273 = vmatprep.subr.bf16.mxu0 0
        %1274 = vmatpush1.bf16.msra.mxu0 0
        %1275 = vmatprep.subr.bf16.mxu0 0
        %1276 = vmatpush1.bf16.msra.mxu0 0
        %1277 = vmatprep.subr.bf16.mxu0 0
        %1278 = vmatpush1.bf16.msra.mxu0 0
        %1279 = vmatprep.subr.bf16.mxu0 0
        %1280 = vmatpush1.bf16.msra.mxu0 0
        %1281 = vmatprep.subr.bf16.mxu0 0
        %1282 = vmatpush1.bf16.msra.mxu0 0
        %1283 = vmatprep.mubr.bf16.mxu0 0
        %1284 = vmatmul.mubr.bf16.gmra.mrb[0].mxu0 %v1060
        %v1285 = vpop.f32.mrb[0].mxu0
        %v1286 = vadd.f32 %v724, %v1285
        %v1287 = vpop.f32.mrb[0].mxu0
        %v1288 = vpop.f32.mrb[0].mxu0
        %v1289 = vadd.f32 %v724, %v1288
        %v1290 = vpop.f32.mrb[0].mxu0
        %1291 = vmatprep.mubr.bf16.mxu0 0
        %1292 = vmatmul.mubr.bf16.gmra.mrb[0].mxu0 %v1063
        %v1293 = vpop.f32.mrb[0].mxu0
        %v1294 = vadd.f32 %v724, %v1293
        %v1295 = vpop.f32.mrb[0].mxu0
        %v1296 = vpop.f32.mrb[0].mxu0
        %v1297 = vadd.f32 %v724, %v1296
        %v1298 = vpop.f32.mrb[0].mxu0
        %1299 = vmatprep.mubr.bf16.mxu0 0
        %1300 = vmatmul.mubr.bf16.gmra.mrb[0].mxu0 %v1066
        %v1301 = vpop.f32.mrb[0].mxu0
        %v1302 = vadd.f32 %v724, %v1301
        %v1303 = vpop.f32.mrb[0].mxu0
        %v1304 = vpop.f32.mrb[0].mxu0
        %v1305 = vadd.f32 %v724, %v1304
        %v1306 = vpop.f32.mrb[0].mxu0
        %1307 = vmatprep.mubr.bf16.mxu0 0
        %1308 = vmatmul.mubr.bf16.gmra.mrb[0].mxu0 %v1069
        %v1309 = vpop.f32.mrb[0].mxu0
        %v1310 = vadd.f32 %v724, %v1309
        %v1311 = vpop.f32.mrb[0].mxu0
        %v1312 = vpop.f32.mrb[0].mxu0
        %v1313 = vadd.f32 %v724, %v1312
        %v1314 = vpop.f32.mrb[0].mxu0
        %1315 = vmatprep.mubr.bf16.mxu0 0
        %1316 = vmatmul.mubr.bf16.gmra.mrb[0].mxu0 %v1072
        %v1317 = vpop.f32.mrb[0].mxu0
        %v1318 = vadd.f32 %v724, %v1317
        %v1319 = vpop.f32.mrb[0].mxu0
        %v1320 = vpop.f32.mrb[0].mxu0
        %v1321 = vadd.f32 %v724, %v1320
        %v1322 = vpop.f32.mrb[0].mxu0
        %1323 = vmatprep.mubr.bf16.mxu0 0
        %1324 = vmatmul.mubr.bf16.gmra.mrb[0].mxu0 %v1075
        %v1325 = vpop.f32.mrb[0].mxu0
        %v1326 = vadd.f32 %v724, %v1325
        %v1327 = vpop.f32.mrb[0].mxu0
        %v1328 = vpop.f32.mrb[0].mxu0
        %v1329 = vadd.f32 %v724, %v1328
        %v1330 = vpop.f32.mrb[0].mxu0
        %1331 = vmatprep.mubr.bf16.mxu0 0
        %1332 = vmatmul.mubr.bf16.gmra.mrb[0].mxu0 %v1078
        %v1333 = vpop.f32.mrb[0].mxu0
        %v1334 = vadd.f32 %v724, %v1333
        %v1335 = vpop.f32.mrb[0].mxu0
        %v1336 = vpop.f32.mrb[0].mxu0
        %v1337 = vadd.f32 %v724, %v1336
        %v1338 = vpop.f32.mrb[0].mxu0
        %1339 = vmatprep.mubr.bf16.mxu0 0
        %1340 = vmatmul.mubr.bf16.gmra.mrb[0].mxu0 %v1081
        %v1341 = vpop.f32.mrb[0].mxu0
        %v1342 = vadd.f32 %v724, %v1341
        %v1343 = vpop.f32.mrb[0].mxu0
        %v1344 = vpop.f32.mrb[0].mxu0
        %v1345 = vadd.f32 %v724, %v1344
        %v1346 = vpop.f32.mrb[0].mxu0
        %1347 = vmatprep.mubr.bf16.mxu0 0
        %1348 = vmatmul.mubr.bf16.gmra.mrb[0].mxu0 %v1084
        %v1349 = vpop.f32.mrb[0].mxu0
        %v1350 = vadd.f32 %v724, %v1349
        %v1351 = vpop.f32.mrb[0].mxu0
        %v1352 = vpop.f32.mrb[0].mxu0
        %v1353 = vadd.f32 %v724, %v1352
        %v1354 = vpop.f32.mrb[0].mxu0
        %1355 = vmatprep.mubr.bf16.mxu0 0
        %1356 = vmatmul.mubr.bf16.gmra.mrb[0].mxu0 %v1087
        %v1357 = vpop.f32.mrb[0].mxu0
        %v1358 = vadd.f32 %v724, %v1357
        %v1359 = vpop.f32.mrb[0].mxu0
        %v1360 = vpop.f32.mrb[0].mxu0
        %v1361 = vadd.f32 %v724, %v1360
        %v1362 = vpop.f32.mrb[0].mxu0
        %1363 = vmatprep.mubr.bf16.mxu0 0
        %1364 = vmatmul.mubr.bf16.gmra.mrb[0].mxu0 %v1090
        %v1365 = vpop.f32.mrb[0].mxu0
        %v1366 = vadd.f32 %v724, %v1365
        %v1367 = vpop.f32.mrb[0].mxu0
        %v1368 = vpop.f32.mrb[0].mxu0
        %v1369 = vadd.f32 %v724, %v1368
        %v1370 = vpop.f32.mrb[0].mxu0
        %1371 = vmatprep.mubr.bf16.mxu0 0
        %1372 = vmatmul.mubr.bf16.gmra.mrb[0].mxu0 %v1093
        %v1373 = vpop.f32.mrb[0].mxu0
        %v1374 = vadd.f32 %v724, %v1373
        %v1375 = vpop.f32.mrb[0].mxu0
        %v1376 = vpop.f32.mrb[0].mxu0
        %v1377 = vadd.f32 %v724, %v1376
        %v1378 = vpop.f32.mrb[0].mxu0
        %1379 = vmatprep.mubr.bf16.mxu0 0
        %1380 = vmatmul.mubr.bf16.gmra.mrb[0].mxu0 %v1096
        %v1381 = vpop.f32.mrb[0].mxu0
        %v1382 = vadd.f32 %v724, %v1381
        %v1383 = vpop.f32.mrb[0].mxu0
        %v1384 = vpop.f32.mrb[0].mxu0
        %v1385 = vadd.f32 %v724, %v1384
        %v1386 = vpop.f32.mrb[0].mxu0
        %1387 = vmatprep.mubr.bf16.mxu0 0
        %1388 = vmatmul.mubr.bf16.gmra.mrb[0].mxu0 %v1099
        %v1389 = vpop.f32.mrb[0].mxu0
        %v1390 = vadd.f32 %v724, %v1389
        %v1391 = vpop.f32.mrb[0].mxu0
        %v1392 = vpop.f32.mrb[0].mxu0
        %v1393 = vadd.f32 %v724, %v1392
        %v1394 = vpop.f32.mrb[0].mxu0
        %1395 = vmatprep.mubr.bf16.mxu0 0
        %1396 = vmatmul.mubr.bf16.gmra.mrb[0].mxu0 %v1102
        %v1397 = vpop.f32.mrb[0].mxu0
        %v1398 = vadd.f32 %v724, %v1397
        %v1399 = vpop.f32.mrb[0].mxu0
        %v1400 = vpop.f32.mrb[0].mxu0
        %v1401 = vadd.f32 %v724, %v1400
        %v1402 = vpop.f32.mrb[0].mxu0
        %1403 = vmatprep.mubr.bf16.mxu0 0
        %1404 = vmatmul.mubr.bf16.gmra.mrb[0].mxu0 %v1105
        %v1405 = vpop.f32.mrb[0].mxu0
        %v1406 = vadd.f32 %v724, %v1405
        %v1407 = vpop.f32.mrb[0].mxu0
        %v1408 = vpop.f32.mrb[0].mxu0
        %v1409 = vadd.f32 %v724, %v1408
        %v1410 = vpop.f32.mrb[0].mxu0
        %1411 = vmatprep.mubr.bf16.mxu0 0
        %1412 = vmatmul.mubr.bf16.gmra.mrb[0].mxu0 %v1108
        %v1413 = vpop.f32.mrb[0].mxu0
        %v1414 = vadd.f32 %v724, %v1413
        %v1415 = vpop.f32.mrb[0].mxu0
        %v1416 = vpop.f32.mrb[0].mxu0
        %v1417 = vadd.f32 %v724, %v1416
        %v1418 = vpop.f32.mrb[0].mxu0
        %1419 = vmatprep.mubr.bf16.mxu0 0
        %1420 = vmatmul.mubr.bf16.gmra.mrb[0].mxu0 %v1111
        %v1421 = vpop.f32.mrb[0].mxu0
        %v1422 = vadd.f32 %v724, %v1421
        %v1423 = vpop.f32.mrb[0].mxu0
        %v1424 = vpop.f32.mrb[0].mxu0
        %v1425 = vadd.f32 %v724, %v1424
        %v1426 = vpop.f32.mrb[0].mxu0
        %1427 = vmatprep.mubr.bf16.mxu0 0
        %1428 = vmatmul.mubr.bf16.gmra.mrb[0].mxu0 %v1114
        %v1429 = vpop.f32.mrb[0].mxu0
        %v1430 = vadd.f32 %v724, %v1429
        %v1431 = vpop.f32.mrb[0].mxu0
        %v1432 = vpop.f32.mrb[0].mxu0
        %v1433 = vadd.f32 %v724, %v1432
        %v1434 = vpop.f32.mrb[0].mxu0
        %1435 = vmatprep.mubr.bf16.mxu0 0
        %1436 = vmatmul.mubr.bf16.gmra.mrb[0].mxu0 %v1117
        %v1437 = vpop.f32.mrb[0].mxu0
        %v1438 = vadd.f32 %v724, %v1437
        %v1439 = vpop.f32.mrb[0].mxu0
        %v1440 = vpop.f32.mrb[0].mxu0
        %v1441 = vadd.f32 %v724, %v1440
        %v1442 = vpop.f32.mrb[0].mxu0
        %1443 = vmatprep.mubr.bf16.mxu0 0
        %1444 = vmatmul.mubr.bf16.gmra.mrb[0].mxu0 %v1120
        %v1445 = vpop.f32.mrb[0].mxu0
        %v1446 = vadd.f32 %v724, %v1445
        %v1447 = vpop.f32.mrb[0].mxu0
        %v1448 = vpop.f32.mrb[0].mxu0
        %v1449 = vadd.f32 %v724, %v1448
        %v1450 = vpop.f32.mrb[0].mxu0
        %1451 = vmatprep.mubr.bf16.mxu0 0
        %1452 = vmatmul.mubr.bf16.gmra.mrb[0].mxu0 %v1123
        %v1453 = vpop.f32.mrb[0].mxu0
        %v1454 = vadd.f32 %v724, %v1453
        %v1455 = vpop.f32.mrb[0].mxu0
        %v1456 = vpop.f32.mrb[0].mxu0
        %v1457 = vadd.f32 %v724, %v1456
        %v1458 = vpop.f32.mrb[0].mxu0
        %1459 = vmatprep.mubr.bf16.mxu0 0
        %1460 = vmatmul.mubr.bf16.gmra.mrb[0].mxu0 %v1126
        %v1461 = vpop.f32.mrb[0].mxu0
        %v1462 = vadd.f32 %v724, %v1461
        %v1463 = vpop.f32.mrb[0].mxu0
        %v1464 = vpop.f32.mrb[0].mxu0
        %v1465 = vadd.f32 %v724, %v1464
        %v1466 = vpop.f32.mrb[0].mxu0
        %1467 = vmatprep.mubr.bf16.mxu0 0
        %1468 = vmatmul.mubr.bf16.gmra.mrb[0].mxu0 %v1129
        %v1469 = vpop.f32.mrb[0].mxu0
        %v1470 = vadd.f32 %v724, %v1469
        %v1471 = vpop.f32.mrb[0].mxu0
        %v1472 = vpop.f32.mrb[0].mxu0
        %v1473 = vadd.f32 %v724, %v1472
        %v1474 = vpop.f32.mrb[0].mxu0
        %1475 = vmatprep.mubr.bf16.mxu0 0
        %1476 = vmatmul.mubr.bf16.gmra.mrb[0].mxu0 %v1132
        %v1477 = vpop.f32.mrb[0].mxu0
        %v1478 = vadd.f32 %v724, %v1477
        %v1479 = vpop.f32.mrb[0].mxu0
        %v1480 = vpop.f32.mrb[0].mxu0
        %v1481 = vadd.f32 %v724, %v1480
        %v1482 = vpop.f32.mrb[0].mxu0
        %1483 = vmatprep.mubr.bf16.mxu0 0
        %1484 = vmatmul.mubr.bf16.gmra.mrb[0].mxu0 %v1135
        %v1485 = vpop.f32.mrb[0].mxu0
        %v1486 = vadd.f32 %v724, %v1485
        %v1487 = vpop.f32.mrb[0].mxu0
        %v1488 = vpop.f32.mrb[0].mxu0
        %v1489 = vadd.f32 %v724, %v1488
        %v1490 = vpop.f32.mrb[0].mxu0
        %1491 = vmatprep.mubr.bf16.mxu0 0
        %1492 = vmatmul.mubr.bf16.gmra.mrb[0].mxu0 %v1138
        %v1493 = vpop.f32.mrb[0].mxu0
        %v1494 = vadd.f32 %v724, %v1493
        %v1495 = vpop.f32.mrb[0].mxu0
        %v1496 = vpop.f32.mrb[0].mxu0
        %v1497 = vadd.f32 %v724, %v1496
        %v1498 = vpop.f32.mrb[0].mxu0
        %1499 = vmatprep.mubr.bf16.mxu0 0
        %1500 = vmatmul.mubr.bf16.gmra.mrb[0].mxu0 %v1141
        %v1501 = vpop.f32.mrb[0].mxu0
        %v1502 = vadd.f32 %v724, %v1501
        %v1503 = vpop.f32.mrb[0].mxu0
        %v1504 = vpop.f32.mrb[0].mxu0
        %v1505 = vadd.f32 %v724, %v1504
        %v1506 = vpop.f32.mrb[0].mxu0
        %1507 = vmatprep.mubr.bf16.mxu0 0
        %1508 = vmatmul.mubr.bf16.gmra.mrb[0].mxu0 %v1144
        %v1509 = vpop.f32.mrb[0].mxu0
        %v1510 = vadd.f32 %v724, %v1509
        %v1511 = vpop.f32.mrb[0].mxu0
        %v1512 = vpop.f32.mrb[0].mxu0
        %v1513 = vadd.f32 %v724, %v1512
        %v1514 = vpop.f32.mrb[0].mxu0
        %1515 = vmatprep.mubr.bf16.mxu0 0
        %1516 = vmatmul.mubr.bf16.gmra.mrb[0].mxu0 %v1147
        %v1517 = vpop.f32.mrb[0].mxu0
        %v1518 = vadd.f32 %v724, %v1517
        %v1519 = vpop.f32.mrb[0].mxu0
        %v1520 = vpop.f32.mrb[0].mxu0
        %v1521 = vadd.f32 %v724, %v1520
        %v1522 = vpop.f32.mrb[0].mxu0
        %1523 = vmatprep.mubr.bf16.mxu0 0
        %1524 = vmatmul.mubr.bf16.gmra.mrb[0].mxu0 %v1150
        %v1525 = vpop.f32.mrb[0].mxu0
        %v1526 = vadd.f32 %v724, %v1525
        %v1527 = vpop.f32.mrb[0].mxu0
        %v1528 = vpop.f32.mrb[0].mxu0
        %v1529 = vadd.f32 %v724, %v1528
        %v1530 = vpop.f32.mrb[0].mxu0
        %1531 = vmatprep.mubr.bf16.mxu0 0
        %1532 = vmatmul.mubr.bf16.gmra.mrb[0].mxu0 %v1153
        %v1533 = vpop.f32.mrb[0].mxu0
        %v1534 = vadd.f32 %v724, %v1533
        %v1535 = vpop.f32.mrb[0].mxu0
        %v1536 = vpop.f32.mrb[0].mxu0
        %v1537 = vadd.f32 %v724, %v1536
        %v1538 = vpop.f32.mrb[0].mxu0
        %1539 = vmatprep.mubr.bf16.mxu0 0
        %1540 = vmatmul.mubr.bf16.gmra.mrb[0].mxu0 %v1156
        %v1541 = vpop.f32.mrb[0].mxu0
        %v1542 = vadd.f32 %v724, %v1541
        %v1543 = vpop.f32.mrb[0].mxu0
        %v1544 = vpop.f32.mrb[0].mxu0
        %v1545 = vadd.f32 %v724, %v1544
        %v1546 = vpop.f32.mrb[0].mxu0
        %1547 = vmatprep.mubr.bf16.mxu0 0
        %1548 = vmatmul.mubr.bf16.gmra.mrb[0].mxu0 %v1159
        %v1549 = vpop.f32.mrb[0].mxu0
        %v1550 = vadd.f32 %v724, %v1549
        %v1551 = vpop.f32.mrb[0].mxu0
        %v1552 = vpop.f32.mrb[0].mxu0
        %v1553 = vadd.f32 %v724, %v1552
        %v1554 = vpop.f32.mrb[0].mxu0
        %1555 = vmatprep.mubr.bf16.mxu0 0
        %1556 = vmatmul.mubr.bf16.gmra.mrb[0].mxu0 %v1162
        %v1557 = vpop.f32.mrb[0].mxu0
        %v1558 = vadd.f32 %v724, %v1557
        %v1559 = vpop.f32.mrb[0].mxu0
        %v1560 = vpop.f32.mrb[0].mxu0
        %v1561 = vadd.f32 %v724, %v1560
        %v1562 = vpop.f32.mrb[0].mxu0
        %1563 = vmatprep.mubr.bf16.mxu0 0
        %1564 = vmatmul.mubr.bf16.gmra.mrb[0].mxu0 %v1165
        %v1565 = vpop.f32.mrb[0].mxu0
        %v1566 = vadd.f32 %v724, %v1565
        %v1567 = vpop.f32.mrb[0].mxu0
        %v1568 = vpop.f32.mrb[0].mxu0
        %v1569 = vadd.f32 %v724, %v1568
        %v1570 = vpop.f32.mrb[0].mxu0
        %1571 = vmatprep.mubr.bf16.mxu0 0
        %1572 = vmatmul.mubr.bf16.gmra.mrb[0].mxu0 %v1168
        %v1573 = vpop.f32.mrb[0].mxu0
        %v1574 = vadd.f32 %v724, %v1573
        %v1575 = vpop.f32.mrb[0].mxu0
        %v1576 = vpop.f32.mrb[0].mxu0
        %v1577 = vadd.f32 %v724, %v1576
        %v1578 = vpop.f32.mrb[0].mxu0
        %1579 = vmatprep.mubr.bf16.mxu0 0
        %1580 = vmatmul.mubr.bf16.gmra.mrb[0].mxu0 %v1171
        %v1581 = vpop.f32.mrb[0].mxu0
        %v1582 = vadd.f32 %v724, %v1581
        %v1583 = vpop.f32.mrb[0].mxu0
        %v1584 = vpop.f32.mrb[0].mxu0
        %v1585 = vadd.f32 %v724, %v1584
        %v1586 = vpop.f32.mrb[0].mxu0
        %1587 = vmatprep.mubr.bf16.mxu0 0
        %1588 = vmatmul.mubr.bf16.gmra.mrb[0].mxu0 %v1174
        %v1589 = vpop.f32.mrb[0].mxu0
        %v1590 = vadd.f32 %v724, %v1589
        %v1591 = vpop.f32.mrb[0].mxu0
        %v1592 = vpop.f32.mrb[0].mxu0
        %v1593 = vadd.f32 %v724, %v1592
        %v1594 = vpop.f32.mrb[0].mxu0
        %1595 = vmatprep.mubr.bf16.mxu0 0
        %1596 = vmatmul.mubr.bf16.gmra.mrb[0].mxu0 %v1177
        %v1597 = vpop.f32.mrb[0].mxu0
        %v1598 = vadd.f32 %v724, %v1597
        %v1599 = vpop.f32.mrb[0].mxu0
        %v1600 = vpop.f32.mrb[0].mxu0
        %v1601 = vadd.f32 %v724, %v1600
        %v1602 = vpop.f32.mrb[0].mxu0
        %1603 = vmatprep.mubr.bf16.mxu0 0
        %1604 = vmatmul.mubr.bf16.gmra.mrb[0].mxu0 %v1180
        %v1605 = vpop.f32.mrb[0].mxu0
        %v1606 = vadd.f32 %v724, %v1605
        %v1607 = vpop.f32.mrb[0].mxu0
        %v1608 = vpop.f32.mrb[0].mxu0
        %v1609 = vadd.f32 %v724, %v1608
        %v1610 = vpop.f32.mrb[0].mxu0
        %1611 = vmatprep.mubr.bf16.mxu0 0
        %1612 = vmatmul.mubr.bf16.gmra.mrb[0].mxu0 %v1183
        %v1613 = vpop.f32.mrb[0].mxu0
        %v1614 = vadd.f32 %v724, %v1613
        %v1615 = vpop.f32.mrb[0].mxu0
        %v1616 = vpop.f32.mrb[0].mxu0
        %v1617 = vadd.f32 %v724, %v1616
        %v1618 = vpop.f32.mrb[0].mxu0
        %1619 = vmatprep.mubr.bf16.mxu0 0
        %1620 = vmatmul.mubr.bf16.gmra.mrb[0].mxu0 %v1186
        %v1621 = vpop.f32.mrb[0].mxu0
        %v1622 = vadd.f32 %v724, %v1621
        %v1623 = vpop.f32.mrb[0].mxu0
        %v1624 = vpop.f32.mrb[0].mxu0
        %v1625 = vadd.f32 %v724, %v1624
        %v1626 = vpop.f32.mrb[0].mxu0
        %1627 = vmatprep.mubr.bf16.mxu0 0
        %1628 = vmatmul.mubr.bf16.gmra.mrb[0].mxu0 %v1189
        %v1629 = vpop.f32.mrb[0].mxu0
        %v1630 = vadd.f32 %v724, %v1629
        %v1631 = vpop.f32.mrb[0].mxu0
        %v1632 = vpop.f32.mrb[0].mxu0
        %v1633 = vadd.f32 %v724, %v1632
        %v1634 = vpop.f32.mrb[0].mxu0
        %1635 = vmatprep.mubr.bf16.mxu0 0
        %1636 = vmatmul.mubr.bf16.gmra.mrb[0].mxu0 %v1192
        %v1637 = vpop.f32.mrb[0].mxu0
        %v1638 = vadd.f32 %v724, %v1637
        %v1639 = vpop.f32.mrb[0].mxu0
        %v1640 = vpop.f32.mrb[0].mxu0
        %v1641 = vadd.f32 %v724, %v1640
        %v1642 = vpop.f32.mrb[0].mxu0
        %1643 = vmatprep.mubr.bf16.mxu0 0
        %1644 = vmatmul.mubr.bf16.gmra.mrb[0].mxu0 %v1195
        %v1645 = vpop.f32.mrb[0].mxu0
        %v1646 = vadd.f32 %v724, %v1645
        %v1647 = vpop.f32.mrb[0].mxu0
        %v1648 = vpop.f32.mrb[0].mxu0
        %v1649 = vadd.f32 %v724, %v1648
        %v1650 = vpop.f32.mrb[0].mxu0
        %1651 = vmatprep.mubr.bf16.mxu0 0
        %1652 = vmatmul.mubr.bf16.gmra.mrb[0].mxu0 %v1198
        %v1653 = vpop.f32.mrb[0].mxu0
        %v1654 = vadd.f32 %v724, %v1653
        %v1655 = vpop.f32.mrb[0].mxu0
        %v1656 = vpop.f32.mrb[0].mxu0
        %v1657 = vadd.f32 %v724, %v1656
        %v1658 = vpop.f32.mrb[0].mxu0
        %1659 = vmatprep.mubr.bf16.mxu0 0
        %1660 = vmatmul.mubr.bf16.gmra.mrb[0].mxu0 %v1201
        %v1661 = vpop.f32.mrb[0].mxu0
        %v1662 = vadd.f32 %v724, %v1661
        %v1663 = vpop.f32.mrb[0].mxu0
        %v1664 = vpop.f32.mrb[0].mxu0
        %v1665 = vadd.f32 %v724, %v1664
        %v1666 = vpop.f32.mrb[0].mxu0
        %1667 = vmatprep.mubr.bf16.mxu0 0
        %1668 = vmatmul.mubr.bf16.gmra.mrb[0].mxu0 %v1204
        %v1669 = vpop.f32.mrb[0].mxu0
        %v1670 = vadd.f32 %v724, %v1669
        %v1671 = vpop.f32.mrb[0].mxu0
        %v1672 = vpop.f32.mrb[0].mxu0
        %v1673 = vadd.f32 %v724, %v1672
        %v1674 = vpop.f32.mrb[0].mxu0
        %1675 = vmatprep.mubr.bf16.mxu0 0
        %1676 = vmatmul.mubr.bf16.gmra.mrb[0].mxu0 %v1207
        %v1677 = vpop.f32.mrb[0].mxu0
        %v1678 = vadd.f32 %v724, %v1677
        %v1679 = vpop.f32.mrb[0].mxu0
        %v1680 = vpop.f32.mrb[0].mxu0
        %v1681 = vadd.f32 %v724, %v1680
        %v1682 = vpop.f32.mrb[0].mxu0
        %1683 = vmatprep.mubr.bf16.mxu0 0
        %1684 = vmatmul.mubr.bf16.gmra.mrb[0].mxu0 %v1210
        %v1685 = vpop.f32.mrb[0].mxu0
        %v1686 = vadd.f32 %v724, %v1685
        %v1687 = vpop.f32.mrb[0].mxu0
        %v1688 = vpop.f32.mrb[0].mxu0
        %v1689 = vadd.f32 %v724, %v1688
        %v1690 = vpop.f32.mrb[0].mxu0
        %1691 = vmatprep.mubr.bf16.mxu0 0
        %1692 = vmatmul.mubr.bf16.gmra.mrb[0].mxu0 %v1213
        %v1693 = vpop.f32.mrb[0].mxu0
        %v1694 = vadd.f32 %v724, %v1693
        %v1695 = vpop.f32.mrb[0].mxu0
        %v1696 = vpop.f32.mrb[0].mxu0
        %v1697 = vadd.f32 %v724, %v1696
        %v1698 = vpop.f32.mrb[0].mxu0
        %1699 = vmatprep.mubr.bf16.mxu0 0
        %1700 = vmatmul.mubr.bf16.gmra.mrb[0].mxu0 %v1216
        %v1701 = vpop.f32.mrb[0].mxu0
        %v1702 = vadd.f32 %v724, %v1701
        %v1703 = vpop.f32.mrb[0].mxu0
        %v1704 = vpop.f32.mrb[0].mxu0
        %v1705 = vadd.f32 %v724, %v1704
        %v1706 = vpop.f32.mrb[0].mxu0
        %1707 = vmatprep.mubr.bf16.mxu0 0
        %1708 = vmatmul.mubr.bf16.gmra.mrb[0].mxu0 %v1219
        %v1709 = vpop.f32.mrb[0].mxu0
        %v1710 = vadd.f32 %v724, %v1709
        %v1711 = vpop.f32.mrb[0].mxu0
        %v1712 = vpop.f32.mrb[0].mxu0
        %v1713 = vadd.f32 %v724, %v1712
        %v1714 = vpop.f32.mrb[0].mxu0
        %1715 = vmatprep.mubr.bf16.mxu0 0
        %1716 = vmatmul.mubr.bf16.gmra.mrb[0].mxu0 %v1222
        %v1717 = vpop.f32.mrb[0].mxu0
        %v1718 = vadd.f32 %v724, %v1717
        %v1719 = vpop.f32.mrb[0].mxu0
        %v1720 = vpop.f32.mrb[0].mxu0
        %v1721 = vadd.f32 %v724, %v1720
        %v1722 = vpop.f32.mrb[0].mxu0
        %1723 = vmatprep.mubr.bf16.mxu0 0
        %1724 = vmatmul.mubr.bf16.gmra.mrb[0].mxu0 %v1225
        %v1725 = vpop.f32.mrb[0].mxu0
        %v1726 = vadd.f32 %v724, %v1725
        %v1727 = vpop.f32.mrb[0].mxu0
        %v1728 = vpop.f32.mrb[0].mxu0
        %v1729 = vadd.f32 %v724, %v1728
        %v1730 = vpop.f32.mrb[0].mxu0
        %1731 = vmatprep.mubr.bf16.mxu0 0
        %1732 = vmatmul.mubr.bf16.gmra.mrb[0].mxu0 %v1228
        %v1733 = vpop.f32.mrb[0].mxu0
        %v1734 = vadd.f32 %v724, %v1733
        %v1735 = vpop.f32.mrb[0].mxu0
        %v1736 = vpop.f32.mrb[0].mxu0
        %v1737 = vadd.f32 %v724, %v1736
        %v1738 = vpop.f32.mrb[0].mxu0
        %1739 = vmatprep.mubr.bf16.mxu0 0
        %1740 = vmatmul.mubr.bf16.gmra.mrb[0].mxu0 %v1231
        %v1741 = vpop.f32.mrb[0].mxu0
        %v1742 = vadd.f32 %v724, %v1741
        %v1743 = vpop.f32.mrb[0].mxu0
        %v1744 = vpop.f32.mrb[0].mxu0
        %v1745 = vadd.f32 %v724, %v1744
        %v1746 = vpop.f32.mrb[0].mxu0
        %1747 = vmatprep.mubr.bf16.mxu0 0
        %1748 = vmatmul.mubr.bf16.gmra.mrb[0].mxu0 %v1234
        %v1749 = vpop.f32.mrb[0].mxu0
        %v1750 = vadd.f32 %v724, %v1749
        %v1751 = vpop.f32.mrb[0].mxu0
        %v1752 = vpop.f32.mrb[0].mxu0
        %v1753 = vadd.f32 %v724, %v1752
        %v1754 = vpop.f32.mrb[0].mxu0
        %1755 = vmatprep.mubr.bf16.mxu0 0
        %1756 = vmatmul.mubr.bf16.gmra.mrb[0].mxu0 %v1237
        %v1757 = vpop.f32.mrb[0].mxu0
        %v1758 = vadd.f32 %v724, %v1757
        %v1759 = vpop.f32.mrb[0].mxu0
        %v1760 = vpop.f32.mrb[0].mxu0
        %v1761 = vadd.f32 %v724, %v1760
        %v1762 = vpop.f32.mrb[0].mxu0
        %1763 = vmatprep.mubr.bf16.mxu0 0
        %1764 = vmatmul.mubr.bf16.gmra.mrb[0].mxu0 %v1240
        %v1765 = vpop.f32.mrb[0].mxu0
        %v1766 = vadd.f32 %v724, %v1765
        %v1767 = vpop.f32.mrb[0].mxu0
        %v1768 = vpop.f32.mrb[0].mxu0
        %v1769 = vadd.f32 %v724, %v1768
        %v1770 = vpop.f32.mrb[0].mxu0
        %1771 = vmatprep.mubr.bf16.mxu0 0
        %1772 = vmatmul.mubr.bf16.gmra.mrb[0].mxu0 %v1243
        %v1773 = vpop.f32.mrb[0].mxu0
        %v1774 = vadd.f32 %v724, %v1773
        %v1775 = vpop.f32.mrb[0].mxu0
        %v1776 = vpop.f32.mrb[0].mxu0
        %v1777 = vadd.f32 %v724, %v1776
        %v1778 = vpop.f32.mrb[0].mxu0
        %1779 = vmatprep.mubr.bf16.mxu0 0
        %1780 = vmatmul.mubr.bf16.gmra.mrb[0].mxu0 %v1246
        %v1781 = vpop.f32.mrb[0].mxu0
        %v1782 = vadd.f32 %v724, %v1781
        %v1783 = vpop.f32.mrb[0].mxu0
        %v1784 = vpop.f32.mrb[0].mxu0
        %v1785 = vadd.f32 %v724, %v1784
        %v1786 = vpop.f32.mrb[0].mxu0
        %1787 = vmatprep.mubr.bf16.mxu0 0
        %1788 = vmatmul.mubr.bf16.gmra.mrb[0].mxu0 %v1249
        %v1789 = vpop.f32.mrb[0].mxu0
        %v1790 = vadd.f32 %v724, %v1789
        %v1791 = vpop.f32.mrb[0].mxu0
        %v1792 = vpop.f32.mrb[0].mxu0
        %v1793 = vadd.f32 %v724, %v1792
        %v1794 = vpop.f32.mrb[0].mxu0
        %1795 = vdwg.mxu0
        %v1796 = vmax.f32 %v1286, 0.0
        %v1797 = vmax.f32 %v1289, 0.0
        %v1798 = vmax.f32 %v1294, 0.0
        %v1799 = vmax.f32 %v1297, 0.0
        %v1800 = vmax.f32 %v1302, 0.0
        %v1801 = vmax.f32 %v1305, 0.0
        %v1802 = vmax.f32 %v1310, 0.0
        %v1803 = vmax.f32 %v1313, 0.0
        %v1804 = vmax.f32 %v1318, 0.0
        %v1805 = vmax.f32 %v1321, 0.0
        %v1806 = vmax.f32 %v1326, 0.0
        %v1807 = vmax.f32 %v1329, 0.0
        %v1808 = vmax.f32 %v1334, 0.0
        %v1809 = vmax.f32 %v1337, 0.0
        %v1810 = vmax.f32 %v1342, 0.0
        %v1811 = vmax.f32 %v1345, 0.0
        %v1812 = vmax.f32 %v1350, 0.0
        %v1813 = vmax.f32 %v1353, 0.0
        %v1814 = vmax.f32 %v1358, 0.0
        %v1815 = vmax.f32 %v1361, 0.0
        %v1816 = vmax.f32 %v1366, 0.0
        %v1817 = vmax.f32 %v1369, 0.0
        %v1818 = vmax.f32 %v1374, 0.0
        %v1819 = vmax.f32 %v1377, 0.0
        %v1820 = vmax.f32 %v1382, 0.0
        %v1821 = vmax.f32 %v1385, 0.0
        %v1822 = vmax.f32 %v1390, 0.0
        %v1823 = vmax.f32 %v1393, 0.0
        %v1824 = vmax.f32 %v1398, 0.0
        %v1825 = vmax.f32 %v1401, 0.0
        %v1826 = vmax.f32 %v1406, 0.0
        %v1827 = vmax.f32 %v1409, 0.0
        %v1828 = vmax.f32 %v1414, 0.0
        %v1829 = vmax.f32 %v1417, 0.0
        %v1830 = vmax.f32 %v1422, 0.0
        %v1831 = vmax.f32 %v1425, 0.0
        %v1832 = vmax.f32 %v1430, 0.0
        %v1833 = vmax.f32 %v1433, 0.0
        %v1834 = vmax.f32 %v1438, 0.0
        %v1835 = vmax.f32 %v1441, 0.0
        %v1836 = vmax.f32 %v1446, 0.0
        %v1837 = vmax.f32 %v1449, 0.0
        %v1838 = vmax.f32 %v1454, 0.0
        %v1839 = vmax.f32 %v1457, 0.0
        %v1840 = vmax.f32 %v1462, 0.0
        %v1841 = vmax.f32 %v1465, 0.0
        %v1842 = vmax.f32 %v1470, 0.0
        %v1843 = vmax.f32 %v1473, 0.0
        %v1844 = vmax.f32 %v1478, 0.0
        %v1845 = vmax.f32 %v1481, 0.0
        %v1846 = vmax.f32 %v1486, 0.0
        %v1847 = vmax.f32 %v1489, 0.0
        %v1848 = vmax.f32 %v1494, 0.0
        %v1849 = vmax.f32 %v1497, 0.0
        %v1850 = vmax.f32 %v1502, 0.0
        %v1851 = vmax.f32 %v1505, 0.0
        %v1852 = vmax.f32 %v1510, 0.0
        %v1853 = vmax.f32 %v1513, 0.0
        %v1854 = vmax.f32 %v1518, 0.0
        %v1855 = vmax.f32 %v1521, 0.0
        %v1856 = vmax.f32 %v1526, 0.0
        %v1857 = vmax.f32 %v1529, 0.0
        %v1858 = vmax.f32 %v1534, 0.0
        %v1859 = vmax.f32 %v1537, 0.0
        %v1860 = vmax.f32 %v1542, 0.0
        %v1861 = vmax.f32 %v1545, 0.0
        %v1862 = vmax.f32 %v1550, 0.0
        %v1863 = vmax.f32 %v1553, 0.0
        %v1864 = vmax.f32 %v1558, 0.0
        %v1865 = vmax.f32 %v1561, 0.0
        %v1866 = vmax.f32 %v1566, 0.0
        %v1867 = vmax.f32 %v1569, 0.0
        %v1868 = vmax.f32 %v1574, 0.0
        %v1869 = vmax.f32 %v1577, 0.0
        %v1870 = vmax.f32 %v1582, 0.0
        %v1871 = vmax.f32 %v1585, 0.0
        %v1872 = vmax.f32 %v1590, 0.0
        %v1873 = vmax.f32 %v1593, 0.0
        %v1874 = vmax.f32 %v1598, 0.0
        %v1875 = vmax.f32 %v1601, 0.0
        %v1876 = vmax.f32 %v1606, 0.0
        %v1877 = vmax.f32 %v1609, 0.0
        %v1878 = vmax.f32 %v1614, 0.0
        %v1879 = vmax.f32 %v1617, 0.0
        %v1880 = vmax.f32 %v1622, 0.0
        %v1881 = vmax.f32 %v1625, 0.0
        %v1882 = vmax.f32 %v1630, 0.0
        %v1883 = vmax.f32 %v1633, 0.0
        %v1884 = vmax.f32 %v1638, 0.0
        %v1885 = vmax.f32 %v1641, 0.0
        %v1886 = vmax.f32 %v1646, 0.0
        %v1887 = vmax.f32 %v1649, 0.0
        %v1888 = vmax.f32 %v1654, 0.0
        %v1889 = vmax.f32 %v1657, 0.0
        %v1890 = vmax.f32 %v1662, 0.0
        %v1891 = vmax.f32 %v1665, 0.0
        %v1892 = vmax.f32 %v1670, 0.0
        %v1893 = vmax.f32 %v1673, 0.0
        %v1894 = vmax.f32 %v1678, 0.0
        %v1895 = vmax.f32 %v1681, 0.0
        %v1896 = vmax.f32 %v1686, 0.0
        %v1897 = vmax.f32 %v1689, 0.0
        %v1898 = vmax.f32 %v1694, 0.0
        %v1899 = vmax.f32 %v1697, 0.0
        %v1900 = vmax.f32 %v1702, 0.0
        %v1901 = vmax.f32 %v1705, 0.0
        %v1902 = vmax.f32 %v1710, 0.0
        %v1903 = vmax.f32 %v1713, 0.0
        %v1904 = vmax.f32 %v1718, 0.0
        %v1905 = vmax.f32 %v1721, 0.0
        %v1906 = vmax.f32 %v1726, 0.0
        %v1907 = vmax.f32 %v1729, 0.0
        %v1908 = vmax.f32 %v1734, 0.0
        %v1909 = vmax.f32 %v1737, 0.0
        %v1910 = vmax.f32 %v1742, 0.0
        %v1911 = vmax.f32 %v1745, 0.0
        %v1912 = vmax.f32 %v1750, 0.0
        %v1913 = vmax.f32 %v1753, 0.0
        %v1914 = vmax.f32 %v1758, 0.0
        %v1915 = vmax.f32 %v1761, 0.0
        %v1916 = vmax.f32 %v1766, 0.0
        %v1917 = vmax.f32 %v1769, 0.0
        %v1918 = vmax.f32 %v1774, 0.0
        %v1919 = vmax.f32 %v1777, 0.0
        %v1920 = vmax.f32 %v1782, 0.0
        %v1921 = vmax.f32 %v1785, 0.0
        %v1922 = vmax.f32 %v1790, 0.0
        %v1923 = vmax.f32 %v1793, 0.0
        %v1924 = vpack.c.bf16 %v1797, %v1796
        %v1925 = vpack.c.bf16 %v1799, %v1798
        %v1926 = vpack.c.bf16 %v1801, %v1800
        %v1927 = vpack.c.bf16 %v1803, %v1802
        %v1928 = vpack.c.bf16 %v1805, %v1804
        %v1929 = vpack.c.bf16 %v1807, %v1806
        %v1930 = vpack.c.bf16 %v1809, %v1808
        %v1931 = vpack.c.bf16 %v1811, %v1810
        %v1932 = vpack.c.bf16 %v1813, %v1812
        %v1933 = vpack.c.bf16 %v1815, %v1814
        %v1934 = vpack.c.bf16 %v1817, %v1816
        %v1935 = vpack.c.bf16 %v1819, %v1818
        %v1936 = vpack.c.bf16 %v1821, %v1820
        %v1937 = vpack.c.bf16 %v1823, %v1822
        %v1938 = vpack.c.bf16 %v1825, %v1824
        %v1939 = vpack.c.bf16 %v1827, %v1826
        %v1940 = vpack.c.bf16 %v1829, %v1828
        %v1941 = vpack.c.bf16 %v1831, %v1830
        %v1942 = vpack.c.bf16 %v1833, %v1832
        %v1943 = vpack.c.bf16 %v1835, %v1834
        %v1944 = vpack.c.bf16 %v1837, %v1836
        %v1945 = vpack.c.bf16 %v1839, %v1838
        %v1946 = vpack.c.bf16 %v1841, %v1840
        %v1947 = vpack.c.bf16 %v1843, %v1842
        %v1948 = vpack.c.bf16 %v1845, %v1844
        %v1949 = vpack.c.bf16 %v1847, %v1846
        %v1950 = vpack.c.bf16 %v1849, %v1848
        %v1951 = vpack.c.bf16 %v1851, %v1850
        %v1952 = vpack.c.bf16 %v1853, %v1852
        %v1953 = vpack.c.bf16 %v1855, %v1854
        %v1954 = vpack.c.bf16 %v1857, %v1856
        %v1955 = vpack.c.bf16 %v1859, %v1858
        %v1956 = vpack.c.bf16 %v1861, %v1860
        %v1957 = vpack.c.bf16 %v1863, %v1862
        %v1958 = vpack.c.bf16 %v1865, %v1864
        %v1959 = vpack.c.bf16 %v1867, %v1866
        %v1960 = vpack.c.bf16 %v1869, %v1868
        %v1961 = vpack.c.bf16 %v1871, %v1870
        %v1962 = vpack.c.bf16 %v1873, %v1872
        %v1963 = vpack.c.bf16 %v1875, %v1874
        %v1964 = vpack.c.bf16 %v1877, %v1876
        %v1965 = vpack.c.bf16 %v1879, %v1878
        %v1966 = vpack.c.bf16 %v1881, %v1880
        %v1967 = vpack.c.bf16 %v1883, %v1882
        %v1968 = vpack.c.bf16 %v1885, %v1884
        %v1969 = vpack.c.bf16 %v1887, %v1886
        %v1970 = vpack.c.bf16 %v1889, %v1888
        %v1971 = vpack.c.bf16 %v1891, %v1890
        %v1972 = vpack.c.bf16 %v1893, %v1892
        %v1973 = vpack.c.bf16 %v1895, %v1894
        %v1974 = vpack.c.bf16 %v1897, %v1896
        %v1975 = vpack.c.bf16 %v1899, %v1898
        %v1976 = vpack.c.bf16 %v1901, %v1900
        %v1977 = vpack.c.bf16 %v1903, %v1902
        %v1978 = vpack.c.bf16 %v1905, %v1904
        %v1979 = vpack.c.bf16 %v1907, %v1906
        %v1980 = vpack.c.bf16 %v1909, %v1908
        %v1981 = vpack.c.bf16 %v1911, %v1910
        %v1982 = vpack.c.bf16 %v1913, %v1912
        %v1983 = vpack.c.bf16 %v1915, %v1914
        %v1984 = vpack.c.bf16 %v1917, %v1916
        %v1985 = vpack.c.bf16 %v1919, %v1918
        %v1986 = vpack.c.bf16 %v1921, %v1920
        %v1987 = vpack.c.bf16 %v1923, %v1922
        %v1988 = vld [vmem:[%s3] sm:$0xf]
        %v1989 = vld [vmem:[%s3 + $0x4] sm:$0xf]
        %v1990 = vld [vmem:[%s3 + $0x8] sm:$0xf]
        %v1991 = vld [vmem:[%s3 + $0xc] sm:$0xf]
        %v1992 = vld [vmem:[%s3 + $0x10] sm:$0xf]
        %v1993 = vld [vmem:[%s3 + $0x14] sm:$0xf]
        %v1994 = vld [vmem:[%s3 + $0x18] sm:$0xf]
        %v1995 = vld [vmem:[%s3 + $0x1c] sm:$0xf]
        %v1996 = vld [vmem:[%s6] sm:$0x1]
        %v1998 = vlaneseq
        %v1999 = vshrl.u32 %v1998, 7
        %v2000 = vsub.s32 0, %v1999
        %v2001 = vrot.slane %v1996, %v2000
        %v2011 = vunpack.c.l.b16 %v1988
        %v2012 = vunpack.c.l.b16 %v1989
        %v2013 = vunpack.c.l.b16 %v1990
        %v2014 = vunpack.c.l.b16 %v1991
        %v2015 = vunpack.c.l.b16 %v1992
        %v2016 = vunpack.c.l.b16 %v1993
        %v2017 = vunpack.c.l.b16 %v1994
        %v2018 = vunpack.c.l.b16 %v1995
        %v2019 = vpack.c.b16 %v2012, %v2011
        %v2020 = vpack.c.b16 %v2014, %v2013
        %v2021 = vpack.c.b16 %v2016, %v2015
        %v2022 = vpack.c.b16 %v2018, %v2017
        %vm2027 = vcmask 523264
        %v2029 = vsel %vm2027, %v1924, 0
        %v2032 = vsel %vm2027, %v1925, 0
        %v2035 = vsel %vm2027, %v1926, 0
        %v2038 = vsel %vm2027, %v1927, 0
        %v2041 = vsel %vm2027, %v1928, 0
        %v2044 = vsel %vm2027, %v1929, 0
        %v2047 = vsel %vm2027, %v1930, 0
        %v2050 = vsel %vm2027, %v1931, 0
        %v2053 = vsel %vm2027, %v1932, 0
        %v2056 = vsel %vm2027, %v1933, 0
        %v2059 = vsel %vm2027, %v1934, 0
        %v2062 = vsel %vm2027, %v1935, 0
        %v2065 = vsel %vm2027, %v1936, 0
        %v2068 = vsel %vm2027, %v1937, 0
        %v2071 = vsel %vm2027, %v1938, 0
        %v2074 = vsel %vm2027, %v1939, 0
        %v2077 = vsel %vm2027, %v1940, 0
        %v2080 = vsel %vm2027, %v1941, 0
        %v2083 = vsel %vm2027, %v1942, 0
        %v2086 = vsel %vm2027, %v1943, 0
        %v2089 = vsel %vm2027, %v1944, 0
        %v2092 = vsel %vm2027, %v1945, 0
        %v2095 = vsel %vm2027, %v1946, 0
        %v2098 = vsel %vm2027, %v1947, 0
        %v2101 = vsel %vm2027, %v1948, 0
        %v2104 = vsel %vm2027, %v1949, 0
        %v2107 = vsel %vm2027, %v1950, 0
        %v2110 = vsel %vm2027, %v1951, 0
        %v2113 = vsel %vm2027, %v1952, 0
        %v2116 = vsel %vm2027, %v1953, 0
        %v2119 = vsel %vm2027, %v1954, 0
        %v2122 = vsel %vm2027, %v1955, 0
        %v2125 = vsel %vm2027, %v1956, 0
        %v2128 = vsel %vm2027, %v1957, 0
        %v2131 = vsel %vm2027, %v1958, 0
        %v2134 = vsel %vm2027, %v1959, 0
        %v2137 = vsel %vm2027, %v1960, 0
        %v2140 = vsel %vm2027, %v1961, 0
        %v2143 = vsel %vm2027, %v1962, 0
        %v2146 = vsel %vm2027, %v1963, 0
        %v2149 = vsel %vm2027, %v1964, 0
        %v2152 = vsel %vm2027, %v1965, 0
        %v2155 = vsel %vm2027, %v1966, 0
        %v2158 = vsel %vm2027, %v1967, 0
        %v2161 = vsel %vm2027, %v1968, 0
        %v2164 = vsel %vm2027, %v1969, 0
        %v2167 = vsel %vm2027, %v1970, 0
        %v2170 = vsel %vm2027, %v1971, 0
        %v2173 = vsel %vm2027, %v1972, 0
        %v2176 = vsel %vm2027, %v1973, 0
        %v2179 = vsel %vm2027, %v1974, 0
        %v2182 = vsel %vm2027, %v1975, 0
        %v2185 = vsel %vm2027, %v1976, 0
        %v2188 = vsel %vm2027, %v1977, 0
        %v2191 = vsel %vm2027, %v1978, 0
        %v2194 = vsel %vm2027, %v1979, 0
        %v2197 = vsel %vm2027, %v1980, 0
        %v2200 = vsel %vm2027, %v1981, 0
        %v2203 = vsel %vm2027, %v1982, 0
        %v2206 = vsel %vm2027, %v1983, 0
        %v2209 = vsel %vm2027, %v1984, 0
        %v2212 = vsel %vm2027, %v1985, 0
        %v2215 = vsel %vm2027, %v1986, 0
        %v2218 = vsel %vm2027, %v1987, 0
        %2220 = vmatprep.subr.bf16.mxu0 0
        %2221 = vmatpush1.bf16.msra.mxu0 %v2019
        %2222 = vmatprep.subr.bf16.mxu0 0
        %2223 = vmatpush1.bf16.msra.mxu0 %v2020
        %2224 = vmatprep.subr.bf16.mxu0 0
        %2225 = vmatpush1.bf16.msra.mxu0 %v2021
        %2226 = vmatprep.subr.bf16.mxu0 0
        %2227 = vmatpush1.bf16.msra.mxu0 %v2022
        %2228 = vmatprep.subr.bf16.mxu0 0
        %2229 = vmatpush1.bf16.msra.mxu0 0
        %2230 = vmatprep.subr.bf16.mxu0 0
        %2231 = vmatpush1.bf16.msra.mxu0 0
        %2232 = vmatprep.subr.bf16.mxu0 0
        %2233 = vmatpush1.bf16.msra.mxu0 0
        %2234 = vmatprep.subr.bf16.mxu0 0
        %2235 = vmatpush1.bf16.msra.mxu0 0
        %2236 = vmatprep.subr.bf16.mxu0 0
        %2237 = vmatpush1.bf16.msra.mxu0 0
        %2238 = vmatprep.subr.bf16.mxu0 0
        %2239 = vmatpush1.bf16.msra.mxu0 0
        %2240 = vmatprep.subr.bf16.mxu0 0
        %2241 = vmatpush1.bf16.msra.mxu0 0
        %2242 = vmatprep.subr.bf16.mxu0 0
        %2243 = vmatpush1.bf16.msra.mxu0 0
        %2244 = vmatprep.subr.bf16.mxu0 0
        %2245 = vmatpush1.bf16.msra.mxu0 0
        %2246 = vmatprep.subr.bf16.mxu0 0
        %2247 = vmatpush1.bf16.msra.mxu0 0
        %2248 = vmatprep.subr.bf16.mxu0 0
        %2249 = vmatpush1.bf16.msra.mxu0 0
        %2250 = vmatprep.subr.bf16.mxu0 0
        %2251 = vmatpush1.bf16.msra.mxu0 0
        %2252 = vmatprep.mubr.bf16.mxu0 0
        %2253 = vmatmul.mubr.bf16.gmra.mrb[0].mxu0 %v2029
        %v2254 = vpop.f32.mrb[0].mxu0
        %v2255 = vadd.f32 %v2001, %v2254
        %v2256 = vpop.f32.mrb[0].mxu0
        %v2257 = vpop.f32.mrb[0].mxu0
        %v2258 = vadd.f32 %v2001, %v2257
        %v2259 = vpop.f32.mrb[0].mxu0
        %2260 = vmatprep.mubr.bf16.mxu0 0
        %2261 = vmatmul.mubr.bf16.gmra.mrb[0].mxu0 %v2032
        %v2262 = vpop.f32.mrb[0].mxu0
        %v2263 = vadd.f32 %v2001, %v2262
        %v2264 = vpop.f32.mrb[0].mxu0
        %v2265 = vpop.f32.mrb[0].mxu0
        %v2266 = vadd.f32 %v2001, %v2265
        %v2267 = vpop.f32.mrb[0].mxu0
        %2268 = vmatprep.mubr.bf16.mxu0 0
        %2269 = vmatmul.mubr.bf16.gmra.mrb[0].mxu0 %v2035
        %v2270 = vpop.f32.mrb[0].mxu0
        %v2271 = vadd.f32 %v2001, %v2270
        %v2272 = vpop.f32.mrb[0].mxu0
        %v2273 = vpop.f32.mrb[0].mxu0
        %v2274 = vadd.f32 %v2001, %v2273
        %v2275 = vpop.f32.mrb[0].mxu0
        %2276 = vmatprep.mubr.bf16.mxu0 0
        %2277 = vmatmul.mubr.bf16.gmra.mrb[0].mxu0 %v2038
        %v2278 = vpop.f32.mrb[0].mxu0
        %v2279 = vadd.f32 %v2001, %v2278
        %v2280 = vpop.f32.mrb[0].mxu0
        %v2281 = vpop.f32.mrb[0].mxu0
        %v2282 = vadd.f32 %v2001, %v2281
        %v2283 = vpop.f32.mrb[0].mxu0
        %2284 = vmatprep.mubr.bf16.mxu0 0
        %2285 = vmatmul.mubr.bf16.gmra.mrb[0].mxu0 %v2041
        %v2286 = vpop.f32.mrb[0].mxu0
        %v2287 = vadd.f32 %v2001, %v2286
        %v2288 = vpop.f32.mrb[0].mxu0
        %v2289 = vpop.f32.mrb[0].mxu0
        %v2290 = vadd.f32 %v2001, %v2289
        %v2291 = vpop.f32.mrb[0].mxu0
        %2292 = vmatprep.mubr.bf16.mxu0 0
        %2293 = vmatmul.mubr.bf16.gmra.mrb[0].mxu0 %v2044
        %v2294 = vpop.f32.mrb[0].mxu0
        %v2295 = vadd.f32 %v2001, %v2294
        %v2296 = vpop.f32.mrb[0].mxu0
        %v2297 = vpop.f32.mrb[0].mxu0
        %v2298 = vadd.f32 %v2001, %v2297
        %v2299 = vpop.f32.mrb[0].mxu0
        %2300 = vmatprep.mubr.bf16.mxu0 0
        %2301 = vmatmul.mubr.bf16.gmra.mrb[0].mxu0 %v2047
        %v2302 = vpop.f32.mrb[0].mxu0
        %v2303 = vadd.f32 %v2001, %v2302
        %v2304 = vpop.f32.mrb[0].mxu0
        %v2305 = vpop.f32.mrb[0].mxu0
        %v2306 = vadd.f32 %v2001, %v2305
        %v2307 = vpop.f32.mrb[0].mxu0
        %2308 = vmatprep.mubr.bf16.mxu0 0
        %2309 = vmatmul.mubr.bf16.gmra.mrb[0].mxu0 %v2050
        %v2310 = vpop.f32.mrb[0].mxu0
        %v2311 = vadd.f32 %v2001, %v2310
        %v2312 = vpop.f32.mrb[0].mxu0
        %v2313 = vpop.f32.mrb[0].mxu0
        %v2314 = vadd.f32 %v2001, %v2313
        %v2315 = vpop.f32.mrb[0].mxu0
        %2316 = vmatprep.mubr.bf16.mxu0 0
        %2317 = vmatmul.mubr.bf16.gmra.mrb[0].mxu0 %v2053
        %v2318 = vpop.f32.mrb[0].mxu0
        %v2319 = vadd.f32 %v2001, %v2318
        %v2320 = vpop.f32.mrb[0].mxu0
        %v2321 = vpop.f32.mrb[0].mxu0
        %v2322 = vadd.f32 %v2001, %v2321
        %v2323 = vpop.f32.mrb[0].mxu0
        %2324 = vmatprep.mubr.bf16.mxu0 0
        %2325 = vmatmul.mubr.bf16.gmra.mrb[0].mxu0 %v2056
        %v2326 = vpop.f32.mrb[0].mxu0
        %v2327 = vadd.f32 %v2001, %v2326
        %v2328 = vpop.f32.mrb[0].mxu0
        %v2329 = vpop.f32.mrb[0].mxu0
        %v2330 = vadd.f32 %v2001, %v2329
        %v2331 = vpop.f32.mrb[0].mxu0
        %2332 = vmatprep.mubr.bf16.mxu0 0
        %2333 = vmatmul.mubr.bf16.gmra.mrb[0].mxu0 %v2059
        %v2334 = vpop.f32.mrb[0].mxu0
        %v2335 = vadd.f32 %v2001, %v2334
        %v2336 = vpop.f32.mrb[0].mxu0
        %v2337 = vpop.f32.mrb[0].mxu0
        %v2338 = vadd.f32 %v2001, %v2337
        %v2339 = vpop.f32.mrb[0].mxu0
        %2340 = vmatprep.mubr.bf16.mxu0 0
        %2341 = vmatmul.mubr.bf16.gmra.mrb[0].mxu0 %v2062
        %v2342 = vpop.f32.mrb[0].mxu0
        %v2343 = vadd.f32 %v2001, %v2342
        %v2344 = vpop.f32.mrb[0].mxu0
        %v2345 = vpop.f32.mrb[0].mxu0
        %v2346 = vadd.f32 %v2001, %v2345
        %v2347 = vpop.f32.mrb[0].mxu0
        %2348 = vmatprep.mubr.bf16.mxu0 0
        %2349 = vmatmul.mubr.bf16.gmra.mrb[0].mxu0 %v2065
        %v2350 = vpop.f32.mrb[0].mxu0
        %v2351 = vadd.f32 %v2001, %v2350
        %v2352 = vpop.f32.mrb[0].mxu0
        %v2353 = vpop.f32.mrb[0].mxu0
        %v2354 = vadd.f32 %v2001, %v2353
        %v2355 = vpop.f32.mrb[0].mxu0
        %2356 = vmatprep.mubr.bf16.mxu0 0
        %2357 = vmatmul.mubr.bf16.gmra.mrb[0].mxu0 %v2068
        %v2358 = vpop.f32.mrb[0].mxu0
        %v2359 = vadd.f32 %v2001, %v2358
        %v2360 = vpop.f32.mrb[0].mxu0
        %v2361 = vpop.f32.mrb[0].mxu0
        %v2362 = vadd.f32 %v2001, %v2361
        %v2363 = vpop.f32.mrb[0].mxu0
        %2364 = vmatprep.mubr.bf16.mxu0 0
        %2365 = vmatmul.mubr.bf16.gmra.mrb[0].mxu0 %v2071
        %v2366 = vpop.f32.mrb[0].mxu0
        %v2367 = vadd.f32 %v2001, %v2366
        %v2368 = vpop.f32.mrb[0].mxu0
        %v2369 = vpop.f32.mrb[0].mxu0
        %v2370 = vadd.f32 %v2001, %v2369
        %v2371 = vpop.f32.mrb[0].mxu0
        %2372 = vmatprep.mubr.bf16.mxu0 0
        %2373 = vmatmul.mubr.bf16.gmra.mrb[0].mxu0 %v2074
        %v2374 = vpop.f32.mrb[0].mxu0
        %v2375 = vadd.f32 %v2001, %v2374
        %v2376 = vpop.f32.mrb[0].mxu0
        %v2377 = vpop.f32.mrb[0].mxu0
        %v2378 = vadd.f32 %v2001, %v2377
        %v2379 = vpop.f32.mrb[0].mxu0
        %2380 = vmatprep.mubr.bf16.mxu0 0
        %2381 = vmatmul.mubr.bf16.gmra.mrb[0].mxu0 %v2077
        %v2382 = vpop.f32.mrb[0].mxu0
        %v2383 = vadd.f32 %v2001, %v2382
        %v2384 = vpop.f32.mrb[0].mxu0
        %v2385 = vpop.f32.mrb[0].mxu0
        %v2386 = vadd.f32 %v2001, %v2385
        %v2387 = vpop.f32.mrb[0].mxu0
        %2388 = vmatprep.mubr.bf16.mxu0 0
        %2389 = vmatmul.mubr.bf16.gmra.mrb[0].mxu0 %v2080
        %v2390 = vpop.f32.mrb[0].mxu0
        %v2391 = vadd.f32 %v2001, %v2390
        %v2392 = vpop.f32.mrb[0].mxu0
        %v2393 = vpop.f32.mrb[0].mxu0
        %v2394 = vadd.f32 %v2001, %v2393
        %v2395 = vpop.f32.mrb[0].mxu0
        %2396 = vmatprep.mubr.bf16.mxu0 0
        %2397 = vmatmul.mubr.bf16.gmra.mrb[0].mxu0 %v2083
        %v2398 = vpop.f32.mrb[0].mxu0
        %v2399 = vadd.f32 %v2001, %v2398
        %v2400 = vpop.f32.mrb[0].mxu0
        %v2401 = vpop.f32.mrb[0].mxu0
        %v2402 = vadd.f32 %v2001, %v2401
        %v2403 = vpop.f32.mrb[0].mxu0
        %2404 = vmatprep.mubr.bf16.mxu0 0
        %2405 = vmatmul.mubr.bf16.gmra.mrb[0].mxu0 %v2086
        %v2406 = vpop.f32.mrb[0].mxu0
        %v2407 = vadd.f32 %v2001, %v2406
        %v2408 = vpop.f32.mrb[0].mxu0
        %v2409 = vpop.f32.mrb[0].mxu0
        %v2410 = vadd.f32 %v2001, %v2409
        %v2411 = vpop.f32.mrb[0].mxu0
        %2412 = vmatprep.mubr.bf16.mxu0 0
        %2413 = vmatmul.mubr.bf16.gmra.mrb[0].mxu0 %v2089
        %v2414 = vpop.f32.mrb[0].mxu0
        %v2415 = vadd.f32 %v2001, %v2414
        %v2416 = vpop.f32.mrb[0].mxu0
        %v2417 = vpop.f32.mrb[0].mxu0
        %v2418 = vadd.f32 %v2001, %v2417
        %v2419 = vpop.f32.mrb[0].mxu0
        %2420 = vmatprep.mubr.bf16.mxu0 0
        %2421 = vmatmul.mubr.bf16.gmra.mrb[0].mxu0 %v2092
        %v2422 = vpop.f32.mrb[0].mxu0
        %v2423 = vadd.f32 %v2001, %v2422
        %v2424 = vpop.f32.mrb[0].mxu0
        %v2425 = vpop.f32.mrb[0].mxu0
        %v2426 = vadd.f32 %v2001, %v2425
        %v2427 = vpop.f32.mrb[0].mxu0
        %2428 = vmatprep.mubr.bf16.mxu0 0
        %2429 = vmatmul.mubr.bf16.gmra.mrb[0].mxu0 %v2095
        %v2430 = vpop.f32.mrb[0].mxu0
        %v2431 = vadd.f32 %v2001, %v2430
        %v2432 = vpop.f32.mrb[0].mxu0
        %v2433 = vpop.f32.mrb[0].mxu0
        %v2434 = vadd.f32 %v2001, %v2433
        %v2435 = vpop.f32.mrb[0].mxu0
        %2436 = vmatprep.mubr.bf16.mxu0 0
        %2437 = vmatmul.mubr.bf16.gmra.mrb[0].mxu0 %v2098
        %v2438 = vpop.f32.mrb[0].mxu0
        %v2439 = vadd.f32 %v2001, %v2438
        %v2440 = vpop.f32.mrb[0].mxu0
        %v2441 = vpop.f32.mrb[0].mxu0
        %v2442 = vadd.f32 %v2001, %v2441
        %v2443 = vpop.f32.mrb[0].mxu0
        %2444 = vmatprep.mubr.bf16.mxu0 0
        %2445 = vmatmul.mubr.bf16.gmra.mrb[0].mxu0 %v2101
        %v2446 = vpop.f32.mrb[0].mxu0
        %v2447 = vadd.f32 %v2001, %v2446
        %v2448 = vpop.f32.mrb[0].mxu0
        %v2449 = vpop.f32.mrb[0].mxu0
        %v2450 = vadd.f32 %v2001, %v2449
        %v2451 = vpop.f32.mrb[0].mxu0
        %2452 = vmatprep.mubr.bf16.mxu0 0
        %2453 = vmatmul.mubr.bf16.gmra.mrb[0].mxu0 %v2104
        %v2454 = vpop.f32.mrb[0].mxu0
        %v2455 = vadd.f32 %v2001, %v2454
        %v2456 = vpop.f32.mrb[0].mxu0
        %v2457 = vpop.f32.mrb[0].mxu0
        %v2458 = vadd.f32 %v2001, %v2457
        %v2459 = vpop.f32.mrb[0].mxu0
        %2460 = vmatprep.mubr.bf16.mxu0 0
        %2461 = vmatmul.mubr.bf16.gmra.mrb[0].mxu0 %v2107
        %v2462 = vpop.f32.mrb[0].mxu0
        %v2463 = vadd.f32 %v2001, %v2462
        %v2464 = vpop.f32.mrb[0].mxu0
        %v2465 = vpop.f32.mrb[0].mxu0
        %v2466 = vadd.f32 %v2001, %v2465
        %v2467 = vpop.f32.mrb[0].mxu0
        %2468 = vmatprep.mubr.bf16.mxu0 0
        %2469 = vmatmul.mubr.bf16.gmra.mrb[0].mxu0 %v2110
        %v2470 = vpop.f32.mrb[0].mxu0
        %v2471 = vadd.f32 %v2001, %v2470
        %v2472 = vpop.f32.mrb[0].mxu0
        %v2473 = vpop.f32.mrb[0].mxu0
        %v2474 = vadd.f32 %v2001, %v2473
        %v2475 = vpop.f32.mrb[0].mxu0
        %2476 = vmatprep.mubr.bf16.mxu0 0
        %2477 = vmatmul.mubr.bf16.gmra.mrb[0].mxu0 %v2113
        %v2478 = vpop.f32.mrb[0].mxu0
        %v2479 = vadd.f32 %v2001, %v2478
        %v2480 = vpop.f32.mrb[0].mxu0
        %v2481 = vpop.f32.mrb[0].mxu0
        %v2482 = vadd.f32 %v2001, %v2481
        %v2483 = vpop.f32.mrb[0].mxu0
        %2484 = vmatprep.mubr.bf16.mxu0 0
        %2485 = vmatmul.mubr.bf16.gmra.mrb[0].mxu0 %v2116
        %v2486 = vpop.f32.mrb[0].mxu0
        %v2487 = vadd.f32 %v2001, %v2486
        %v2488 = vpop.f32.mrb[0].mxu0
        %v2489 = vpop.f32.mrb[0].mxu0
        %v2490 = vadd.f32 %v2001, %v2489
        %v2491 = vpop.f32.mrb[0].mxu0
        %2492 = vmatprep.mubr.bf16.mxu0 0
        %2493 = vmatmul.mubr.bf16.gmra.mrb[0].mxu0 %v2119
        %v2494 = vpop.f32.mrb[0].mxu0
        %v2495 = vadd.f32 %v2001, %v2494
        %v2496 = vpop.f32.mrb[0].mxu0
        %v2497 = vpop.f32.mrb[0].mxu0
        %v2498 = vadd.f32 %v2001, %v2497
        %v2499 = vpop.f32.mrb[0].mxu0
        %2500 = vmatprep.mubr.bf16.mxu0 0
        %2501 = vmatmul.mubr.bf16.gmra.mrb[0].mxu0 %v2122
        %v2502 = vpop.f32.mrb[0].mxu0
        %v2503 = vadd.f32 %v2001, %v2502
        %v2504 = vpop.f32.mrb[0].mxu0
        %v2505 = vpop.f32.mrb[0].mxu0
        %v2506 = vadd.f32 %v2001, %v2505
        %v2507 = vpop.f32.mrb[0].mxu0
        %2508 = vmatprep.mubr.bf16.mxu0 0
        %2509 = vmatmul.mubr.bf16.gmra.mrb[0].mxu0 %v2125
        %v2510 = vpop.f32.mrb[0].mxu0
        %v2511 = vadd.f32 %v2001, %v2510
        %v2512 = vpop.f32.mrb[0].mxu0
        %v2513 = vpop.f32.mrb[0].mxu0
        %v2514 = vadd.f32 %v2001, %v2513
        %v2515 = vpop.f32.mrb[0].mxu0
        %2516 = vmatprep.mubr.bf16.mxu0 0
        %2517 = vmatmul.mubr.bf16.gmra.mrb[0].mxu0 %v2128
        %v2518 = vpop.f32.mrb[0].mxu0
        %v2519 = vadd.f32 %v2001, %v2518
        %v2520 = vpop.f32.mrb[0].mxu0
        %v2521 = vpop.f32.mrb[0].mxu0
        %v2522 = vadd.f32 %v2001, %v2521
        %v2523 = vpop.f32.mrb[0].mxu0
        %2524 = vmatprep.mubr.bf16.mxu0 0
        %2525 = vmatmul.mubr.bf16.gmra.mrb[0].mxu0 %v2131
        %v2526 = vpop.f32.mrb[0].mxu0
        %v2527 = vadd.f32 %v2001, %v2526
        %v2528 = vpop.f32.mrb[0].mxu0
        %v2529 = vpop.f32.mrb[0].mxu0
        %v2530 = vadd.f32 %v2001, %v2529
        %v2531 = vpop.f32.mrb[0].mxu0
        %2532 = vmatprep.mubr.bf16.mxu0 0
        %2533 = vmatmul.mubr.bf16.gmra.mrb[0].mxu0 %v2134
        %v2534 = vpop.f32.mrb[0].mxu0
        %v2535 = vadd.f32 %v2001, %v2534
        %v2536 = vpop.f32.mrb[0].mxu0
        %v2537 = vpop.f32.mrb[0].mxu0
        %v2538 = vadd.f32 %v2001, %v2537
        %v2539 = vpop.f32.mrb[0].mxu0
        %2540 = vmatprep.mubr.bf16.mxu0 0
        %2541 = vmatmul.mubr.bf16.gmra.mrb[0].mxu0 %v2137
        %v2542 = vpop.f32.mrb[0].mxu0
        %v2543 = vadd.f32 %v2001, %v2542
        %v2544 = vpop.f32.mrb[0].mxu0
        %v2545 = vpop.f32.mrb[0].mxu0
        %v2546 = vadd.f32 %v2001, %v2545
        %v2547 = vpop.f32.mrb[0].mxu0
        %2548 = vmatprep.mubr.bf16.mxu0 0
        %2549 = vmatmul.mubr.bf16.gmra.mrb[0].mxu0 %v2140
        %v2550 = vpop.f32.mrb[0].mxu0
        %v2551 = vadd.f32 %v2001, %v2550
        %v2552 = vpop.f32.mrb[0].mxu0
        %v2553 = vpop.f32.mrb[0].mxu0
        %v2554 = vadd.f32 %v2001, %v2553
        %v2555 = vpop.f32.mrb[0].mxu0
        %2556 = vmatprep.mubr.bf16.mxu0 0
        %2557 = vmatmul.mubr.bf16.gmra.mrb[0].mxu0 %v2143
        %v2558 = vpop.f32.mrb[0].mxu0
        %v2559 = vadd.f32 %v2001, %v2558
        %v2560 = vpop.f32.mrb[0].mxu0
        %v2561 = vpop.f32.mrb[0].mxu0
        %v2562 = vadd.f32 %v2001, %v2561
        %v2563 = vpop.f32.mrb[0].mxu0
        %2564 = vmatprep.mubr.bf16.mxu0 0
        %2565 = vmatmul.mubr.bf16.gmra.mrb[0].mxu0 %v2146
        %v2566 = vpop.f32.mrb[0].mxu0
        %v2567 = vadd.f32 %v2001, %v2566
        %v2568 = vpop.f32.mrb[0].mxu0
        %v2569 = vpop.f32.mrb[0].mxu0
        %v2570 = vadd.f32 %v2001, %v2569
        %v2571 = vpop.f32.mrb[0].mxu0
        %2572 = vmatprep.mubr.bf16.mxu0 0
        %2573 = vmatmul.mubr.bf16.gmra.mrb[0].mxu0 %v2149
        %v2574 = vpop.f32.mrb[0].mxu0
        %v2575 = vadd.f32 %v2001, %v2574
        %v2576 = vpop.f32.mrb[0].mxu0
        %v2577 = vpop.f32.mrb[0].mxu0
        %v2578 = vadd.f32 %v2001, %v2577
        %v2579 = vpop.f32.mrb[0].mxu0
        %2580 = vmatprep.mubr.bf16.mxu0 0
        %2581 = vmatmul.mubr.bf16.gmra.mrb[0].mxu0 %v2152
        %v2582 = vpop.f32.mrb[0].mxu0
        %v2583 = vadd.f32 %v2001, %v2582
        %v2584 = vpop.f32.mrb[0].mxu0
        %v2585 = vpop.f32.mrb[0].mxu0
        %v2586 = vadd.f32 %v2001, %v2585
        %v2587 = vpop.f32.mrb[0].mxu0
        %2588 = vmatprep.mubr.bf16.mxu0 0
        %2589 = vmatmul.mubr.bf16.gmra.mrb[0].mxu0 %v2155
        %v2590 = vpop.f32.mrb[0].mxu0
        %v2591 = vadd.f32 %v2001, %v2590
        %v2592 = vpop.f32.mrb[0].mxu0
        %v2593 = vpop.f32.mrb[0].mxu0
        %v2594 = vadd.f32 %v2001, %v2593
        %v2595 = vpop.f32.mrb[0].mxu0
        %2596 = vmatprep.mubr.bf16.mxu0 0
        %2597 = vmatmul.mubr.bf16.gmra.mrb[0].mxu0 %v2158
        %v2598 = vpop.f32.mrb[0].mxu0
        %v2599 = vadd.f32 %v2001, %v2598
        %v2600 = vpop.f32.mrb[0].mxu0
        %v2601 = vpop.f32.mrb[0].mxu0
        %v2602 = vadd.f32 %v2001, %v2601
        %v2603 = vpop.f32.mrb[0].mxu0
        %2604 = vmatprep.mubr.bf16.mxu0 0
        %2605 = vmatmul.mubr.bf16.gmra.mrb[0].mxu0 %v2161
        %v2606 = vpop.f32.mrb[0].mxu0
        %v2607 = vadd.f32 %v2001, %v2606
        %v2608 = vpop.f32.mrb[0].mxu0
        %v2609 = vpop.f32.mrb[0].mxu0
        %v2610 = vadd.f32 %v2001, %v2609
        %v2611 = vpop.f32.mrb[0].mxu0
        %2612 = vmatprep.mubr.bf16.mxu0 0
        %2613 = vmatmul.mubr.bf16.gmra.mrb[0].mxu0 %v2164
        %v2614 = vpop.f32.mrb[0].mxu0
        %v2615 = vadd.f32 %v2001, %v2614
        %v2616 = vpop.f32.mrb[0].mxu0
        %v2617 = vpop.f32.mrb[0].mxu0
        %v2618 = vadd.f32 %v2001, %v2617
        %v2619 = vpop.f32.mrb[0].mxu0
        %2620 = vmatprep.mubr.bf16.mxu0 0
        %2621 = vmatmul.mubr.bf16.gmra.mrb[0].mxu0 %v2167
        %v2622 = vpop.f32.mrb[0].mxu0
        %v2623 = vadd.f32 %v2001, %v2622
        %v2624 = vpop.f32.mrb[0].mxu0
        %v2625 = vpop.f32.mrb[0].mxu0
        %v2626 = vadd.f32 %v2001, %v2625
        %v2627 = vpop.f32.mrb[0].mxu0
        %2628 = vmatprep.mubr.bf16.mxu0 0
        %2629 = vmatmul.mubr.bf16.gmra.mrb[0].mxu0 %v2170
        %v2630 = vpop.f32.mrb[0].mxu0
        %v2631 = vadd.f32 %v2001, %v2630
        %v2632 = vpop.f32.mrb[0].mxu0
        %v2633 = vpop.f32.mrb[0].mxu0
        %v2634 = vadd.f32 %v2001, %v2633
        %v2635 = vpop.f32.mrb[0].mxu0
        %2636 = vmatprep.mubr.bf16.mxu0 0
        %2637 = vmatmul.mubr.bf16.gmra.mrb[0].mxu0 %v2173
        %v2638 = vpop.f32.mrb[0].mxu0
        %v2639 = vadd.f32 %v2001, %v2638
        %v2640 = vpop.f32.mrb[0].mxu0
        %v2641 = vpop.f32.mrb[0].mxu0
        %v2642 = vadd.f32 %v2001, %v2641
        %v2643 = vpop.f32.mrb[0].mxu0
        %2644 = vmatprep.mubr.bf16.mxu0 0
        %2645 = vmatmul.mubr.bf16.gmra.mrb[0].mxu0 %v2176
        %v2646 = vpop.f32.mrb[0].mxu0
        %v2647 = vadd.f32 %v2001, %v2646
        %v2648 = vpop.f32.mrb[0].mxu0
        %v2649 = vpop.f32.mrb[0].mxu0
        %v2650 = vadd.f32 %v2001, %v2649
        %v2651 = vpop.f32.mrb[0].mxu0
        %2652 = vmatprep.mubr.bf16.mxu0 0
        %2653 = vmatmul.mubr.bf16.gmra.mrb[0].mxu0 %v2179
        %v2654 = vpop.f32.mrb[0].mxu0
        %v2655 = vadd.f32 %v2001, %v2654
        %v2656 = vpop.f32.mrb[0].mxu0
        %v2657 = vpop.f32.mrb[0].mxu0
        %v2658 = vadd.f32 %v2001, %v2657
        %v2659 = vpop.f32.mrb[0].mxu0
        %2660 = vmatprep.mubr.bf16.mxu0 0
        %2661 = vmatmul.mubr.bf16.gmra.mrb[0].mxu0 %v2182
        %v2662 = vpop.f32.mrb[0].mxu0
        %v2663 = vadd.f32 %v2001, %v2662
        %v2664 = vpop.f32.mrb[0].mxu0
        %v2665 = vpop.f32.mrb[0].mxu0
        %v2666 = vadd.f32 %v2001, %v2665
        %v2667 = vpop.f32.mrb[0].mxu0
        %2668 = vmatprep.mubr.bf16.mxu0 0
        %2669 = vmatmul.mubr.bf16.gmra.mrb[0].mxu0 %v2185
        %v2670 = vpop.f32.mrb[0].mxu0
        %v2671 = vadd.f32 %v2001, %v2670
        %v2672 = vpop.f32.mrb[0].mxu0
        %v2673 = vpop.f32.mrb[0].mxu0
        %v2674 = vadd.f32 %v2001, %v2673
        %v2675 = vpop.f32.mrb[0].mxu0
        %2676 = vmatprep.mubr.bf16.mxu0 0
        %2677 = vmatmul.mubr.bf16.gmra.mrb[0].mxu0 %v2188
        %v2678 = vpop.f32.mrb[0].mxu0
        %v2679 = vadd.f32 %v2001, %v2678
        %v2680 = vpop.f32.mrb[0].mxu0
        %v2681 = vpop.f32.mrb[0].mxu0
        %v2682 = vadd.f32 %v2001, %v2681
        %v2683 = vpop.f32.mrb[0].mxu0
        %2684 = vmatprep.mubr.bf16.mxu0 0
        %2685 = vmatmul.mubr.bf16.gmra.mrb[0].mxu0 %v2191
        %v2686 = vpop.f32.mrb[0].mxu0
        %v2687 = vadd.f32 %v2001, %v2686
        %v2688 = vpop.f32.mrb[0].mxu0
        %v2689 = vpop.f32.mrb[0].mxu0
        %v2690 = vadd.f32 %v2001, %v2689
        %v2691 = vpop.f32.mrb[0].mxu0
        %2692 = vmatprep.mubr.bf16.mxu0 0
        %2693 = vmatmul.mubr.bf16.gmra.mrb[0].mxu0 %v2194
        %v2694 = vpop.f32.mrb[0].mxu0
        %v2695 = vadd.f32 %v2001, %v2694
        %v2696 = vpop.f32.mrb[0].mxu0
        %v2697 = vpop.f32.mrb[0].mxu0
        %v2698 = vadd.f32 %v2001, %v2697
        %v2699 = vpop.f32.mrb[0].mxu0
        %2700 = vmatprep.mubr.bf16.mxu0 0
        %2701 = vmatmul.mubr.bf16.gmra.mrb[0].mxu0 %v2197
        %v2702 = vpop.f32.mrb[0].mxu0
        %v2703 = vadd.f32 %v2001, %v2702
        %v2704 = vpop.f32.mrb[0].mxu0
        %v2705 = vpop.f32.mrb[0].mxu0
        %v2706 = vadd.f32 %v2001, %v2705
        %v2707 = vpop.f32.mrb[0].mxu0
        %2708 = vmatprep.mubr.bf16.mxu0 0
        %2709 = vmatmul.mubr.bf16.gmra.mrb[0].mxu0 %v2200
        %v2710 = vpop.f32.mrb[0].mxu0
        %v2711 = vadd.f32 %v2001, %v2710
        %v2712 = vpop.f32.mrb[0].mxu0
        %v2713 = vpop.f32.mrb[0].mxu0
        %v2714 = vadd.f32 %v2001, %v2713
        %v2715 = vpop.f32.mrb[0].mxu0
        %2716 = vmatprep.mubr.bf16.mxu0 0
        %2717 = vmatmul.mubr.bf16.gmra.mrb[0].mxu0 %v2203
        %v2718 = vpop.f32.mrb[0].mxu0
        %v2719 = vadd.f32 %v2001, %v2718
        %v2720 = vpop.f32.mrb[0].mxu0
        %v2721 = vpop.f32.mrb[0].mxu0
        %v2722 = vadd.f32 %v2001, %v2721
        %v2723 = vpop.f32.mrb[0].mxu0
        %2724 = vmatprep.mubr.bf16.mxu0 0
        %2725 = vmatmul.mubr.bf16.gmra.mrb[0].mxu0 %v2206
        %v2726 = vpop.f32.mrb[0].mxu0
        %v2727 = vadd.f32 %v2001, %v2726
        %v2728 = vpop.f32.mrb[0].mxu0
        %v2729 = vpop.f32.mrb[0].mxu0
        %v2730 = vadd.f32 %v2001, %v2729
        %v2731 = vpop.f32.mrb[0].mxu0
        %2732 = vmatprep.mubr.bf16.mxu0 0
        %2733 = vmatmul.mubr.bf16.gmra.mrb[0].mxu0 %v2209
        %v2734 = vpop.f32.mrb[0].mxu0
        %v2735 = vadd.f32 %v2001, %v2734
        %v2736 = vpop.f32.mrb[0].mxu0
        %v2737 = vpop.f32.mrb[0].mxu0
        %v2738 = vadd.f32 %v2001, %v2737
        %v2739 = vpop.f32.mrb[0].mxu0
        %2740 = vmatprep.mubr.bf16.mxu0 0
        %2741 = vmatmul.mubr.bf16.gmra.mrb[0].mxu0 %v2212
        %v2742 = vpop.f32.mrb[0].mxu0
        %v2743 = vadd.f32 %v2001, %v2742
        %v2744 = vpop.f32.mrb[0].mxu0
        %v2745 = vpop.f32.mrb[0].mxu0
        %v2746 = vadd.f32 %v2001, %v2745
        %v2747 = vpop.f32.mrb[0].mxu0
        %2748 = vmatprep.mubr.bf16.mxu0 0
        %2749 = vmatmul.mubr.bf16.gmra.mrb[0].mxu0 %v2215
        %v2750 = vpop.f32.mrb[0].mxu0
        %v2751 = vadd.f32 %v2001, %v2750
        %v2752 = vpop.f32.mrb[0].mxu0
        %v2753 = vpop.f32.mrb[0].mxu0
        %v2754 = vadd.f32 %v2001, %v2753
        %v2755 = vpop.f32.mrb[0].mxu0
        %2756 = vmatprep.mubr.bf16.mxu0 0
        %2757 = vmatmul.mubr.bf16.gmra.mrb[0].mxu0 %v2218
        %v2758 = vpop.f32.mrb[0].mxu0
        %v2759 = vadd.f32 %v2001, %v2758
        %v2760 = vpop.f32.mrb[0].mxu0
        %v2761 = vpop.f32.mrb[0].mxu0
        %v2762 = vadd.f32 %v2001, %v2761
        %v2763 = vpop.f32.mrb[0].mxu0
        %2764 = vdwg.mxu0
        %v2765 = vmax.f32 %v2255, 0.0
        %v2766 = vmax.f32 %v2258, 0.0
        %v2767 = vmax.f32 %v2263, 0.0
        %v2768 = vmax.f32 %v2266, 0.0
        %v2769 = vmax.f32 %v2271, 0.0
        %v2770 = vmax.f32 %v2274, 0.0
        %v2771 = vmax.f32 %v2279, 0.0
        %v2772 = vmax.f32 %v2282, 0.0
        %v2773 = vmax.f32 %v2287, 0.0
        %v2774 = vmax.f32 %v2290, 0.0
        %v2775 = vmax.f32 %v2295, 0.0
        %v2776 = vmax.f32 %v2298, 0.0
        %v2777 = vmax.f32 %v2303, 0.0
        %v2778 = vmax.f32 %v2306, 0.0
        %v2779 = vmax.f32 %v2311, 0.0
        %v2780 = vmax.f32 %v2314, 0.0
        %v2781 = vmax.f32 %v2319, 0.0
        %v2782 = vmax.f32 %v2322, 0.0
        %v2783 = vmax.f32 %v2327, 0.0
        %v2784 = vmax.f32 %v2330, 0.0
        %v2785 = vmax.f32 %v2335, 0.0
        %v2786 = vmax.f32 %v2338, 0.0
        %v2787 = vmax.f32 %v2343, 0.0
        %v2788 = vmax.f32 %v2346, 0.0
        %v2789 = vmax.f32 %v2351, 0.0
        %v2790 = vmax.f32 %v2354, 0.0
        %v2791 = vmax.f32 %v2359, 0.0
        %v2792 = vmax.f32 %v2362, 0.0
        %v2793 = vmax.f32 %v2367, 0.0
        %v2794 = vmax.f32 %v2370, 0.0
        %v2795 = vmax.f32 %v2375, 0.0
        %v2796 = vmax.f32 %v2378, 0.0
        %v2797 = vmax.f32 %v2383, 0.0
        %v2798 = vmax.f32 %v2386, 0.0
        %v2799 = vmax.f32 %v2391, 0.0
        %v2800 = vmax.f32 %v2394, 0.0
        %v2801 = vmax.f32 %v2399, 0.0
        %v2802 = vmax.f32 %v2402, 0.0
        %v2803 = vmax.f32 %v2407, 0.0
        %v2804 = vmax.f32 %v2410, 0.0
        %v2805 = vmax.f32 %v2415, 0.0
        %v2806 = vmax.f32 %v2418, 0.0
        %v2807 = vmax.f32 %v2423, 0.0
        %v2808 = vmax.f32 %v2426, 0.0
        %v2809 = vmax.f32 %v2431, 0.0
        %v2810 = vmax.f32 %v2434, 0.0
        %v2811 = vmax.f32 %v2439, 0.0
        %v2812 = vmax.f32 %v2442, 0.0
        %v2813 = vmax.f32 %v2447, 0.0
        %v2814 = vmax.f32 %v2450, 0.0
        %v2815 = vmax.f32 %v2455, 0.0
        %v2816 = vmax.f32 %v2458, 0.0
        %v2817 = vmax.f32 %v2463, 0.0
        %v2818 = vmax.f32 %v2466, 0.0
        %v2819 = vmax.f32 %v2471, 0.0
        %v2820 = vmax.f32 %v2474, 0.0
        %v2821 = vmax.f32 %v2479, 0.0
        %v2822 = vmax.f32 %v2482, 0.0
        %v2823 = vmax.f32 %v2487, 0.0
        %v2824 = vmax.f32 %v2490, 0.0
        %v2825 = vmax.f32 %v2495, 0.0
        %v2826 = vmax.f32 %v2498, 0.0
        %v2827 = vmax.f32 %v2503, 0.0
        %v2828 = vmax.f32 %v2506, 0.0
        %v2829 = vmax.f32 %v2511, 0.0
        %v2830 = vmax.f32 %v2514, 0.0
        %v2831 = vmax.f32 %v2519, 0.0
        %v2832 = vmax.f32 %v2522, 0.0
        %v2833 = vmax.f32 %v2527, 0.0
        %v2834 = vmax.f32 %v2530, 0.0
        %v2835 = vmax.f32 %v2535, 0.0
        %v2836 = vmax.f32 %v2538, 0.0
        %v2837 = vmax.f32 %v2543, 0.0
        %v2838 = vmax.f32 %v2546, 0.0
        %v2839 = vmax.f32 %v2551, 0.0
        %v2840 = vmax.f32 %v2554, 0.0
        %v2841 = vmax.f32 %v2559, 0.0
        %v2842 = vmax.f32 %v2562, 0.0
        %v2843 = vmax.f32 %v2567, 0.0
        %v2844 = vmax.f32 %v2570, 0.0
        %v2845 = vmax.f32 %v2575, 0.0
        %v2846 = vmax.f32 %v2578, 0.0
        %v2847 = vmax.f32 %v2583, 0.0
        %v2848 = vmax.f32 %v2586, 0.0
        %v2849 = vmax.f32 %v2591, 0.0
        %v2850 = vmax.f32 %v2594, 0.0
        %v2851 = vmax.f32 %v2599, 0.0
        %v2852 = vmax.f32 %v2602, 0.0
        %v2853 = vmax.f32 %v2607, 0.0
        %v2854 = vmax.f32 %v2610, 0.0
        %v2855 = vmax.f32 %v2615, 0.0
        %v2856 = vmax.f32 %v2618, 0.0
        %v2857 = vmax.f32 %v2623, 0.0
        %v2858 = vmax.f32 %v2626, 0.0
        %v2859 = vmax.f32 %v2631, 0.0
        %v2860 = vmax.f32 %v2634, 0.0
        %v2861 = vmax.f32 %v2639, 0.0
        %v2862 = vmax.f32 %v2642, 0.0
        %v2863 = vmax.f32 %v2647, 0.0
        %v2864 = vmax.f32 %v2650, 0.0
        %v2865 = vmax.f32 %v2655, 0.0
        %v2866 = vmax.f32 %v2658, 0.0
        %v2867 = vmax.f32 %v2663, 0.0
        %v2868 = vmax.f32 %v2666, 0.0
        %v2869 = vmax.f32 %v2671, 0.0
        %v2870 = vmax.f32 %v2674, 0.0
        %v2871 = vmax.f32 %v2679, 0.0
        %v2872 = vmax.f32 %v2682, 0.0
        %v2873 = vmax.f32 %v2687, 0.0
        %v2874 = vmax.f32 %v2690, 0.0
        %v2875 = vmax.f32 %v2695, 0.0
        %v2876 = vmax.f32 %v2698, 0.0
        %v2877 = vmax.f32 %v2703, 0.0
        %v2878 = vmax.f32 %v2706, 0.0
        %v2879 = vmax.f32 %v2711, 0.0
        %v2880 = vmax.f32 %v2714, 0.0
        %v2881 = vmax.f32 %v2719, 0.0
        %v2882 = vmax.f32 %v2722, 0.0
        %v2883 = vmax.f32 %v2727, 0.0
        %v2884 = vmax.f32 %v2730, 0.0
        %v2885 = vmax.f32 %v2735, 0.0
        %v2886 = vmax.f32 %v2738, 0.0
        %v2887 = vmax.f32 %v2743, 0.0
        %v2888 = vmax.f32 %v2746, 0.0
        %v2889 = vmax.f32 %v2751, 0.0
        %v2890 = vmax.f32 %v2754, 0.0
        %v2891 = vmax.f32 %v2759, 0.0
        %v2892 = vmax.f32 %v2762, 0.0
        %2893 = vxpose.xlu0.b32.start [1/16] %v2765, 128
        %2894 = vxpose.xlu0.b32.cont [2/16] %v2766, 128
        %2895 = vxpose.xlu0.b32.cont [3/16] %v2767, 128
        %2896 = vxpose.xlu0.b32.cont [4/16] %v2768, 128
        %2897 = vxpose.xlu0.b32.cont [5/16] %v2769, 128
        %2898 = vxpose.xlu0.b32.cont [6/16] %v2770, 128
        %2899 = vxpose.xlu0.b32.cont [7/16] %v2771, 128
        %2900 = vxpose.xlu0.b32.cont [8/16] %v2772, 128
        %2901 = vxpose.xlu0.b32.cont [9/16] %v2773, 128
        %2902 = vxpose.xlu0.b32.cont [10/16] %v2774, 128
        %2903 = vxpose.xlu0.b32.cont [11/16] %v2775, 128
        %2904 = vxpose.xlu0.b32.cont [12/16] %v2776, 128
        %2905 = vxpose.xlu0.b32.cont [13/16] %v2777, 128
        %2906 = vxpose.xlu0.b32.cont [14/16] %v2778, 128
        %2907 = vxpose.xlu0.b32.cont [15/16] %v2779, 128
        %2908 = vxpose.xlu0.b32.end [16/16] %v2780, 128
        %v2909 = vpop.trf.xlu0
        %v2910 = vpop.trf.xlu0
        %v2911 = vpop.trf.xlu0
        %v2912 = vpop.trf.xlu0
        %v2913 = vpop.trf.xlu0
        %v2914 = vpop.trf.xlu0
        %v2915 = vpop.trf.xlu0
        %v2916 = vpop.trf.xlu0
        %v2917 = vpop.trf.xlu0
        %v2918 = vpop.trf.xlu0
        %v2919 = vpop.trf.xlu0
        %v2920 = vpop.trf.xlu0
        %v2921 = vpop.trf.xlu0
        %v2922 = vpop.trf.xlu0
        %v2923 = vpop.trf.xlu0
        %v2924 = vpop.trf.xlu0
        %2925 = vxpose.xlu0.b32.start [1/16] %v2781, 128
        %2926 = vxpose.xlu0.b32.cont [2/16] %v2782, 128
        %2927 = vxpose.xlu0.b32.cont [3/16] %v2783, 128
        %2928 = vxpose.xlu0.b32.cont [4/16] %v2784, 128
        %2929 = vxpose.xlu0.b32.cont [5/16] %v2785, 128
        %2930 = vxpose.xlu0.b32.cont [6/16] %v2786, 128
        %2931 = vxpose.xlu0.b32.cont [7/16] %v2787, 128
        %2932 = vxpose.xlu0.b32.cont [8/16] %v2788, 128
        %2933 = vxpose.xlu0.b32.cont [9/16] %v2789, 128
        %2934 = vxpose.xlu0.b32.cont [10/16] %v2790, 128
        %2935 = vxpose.xlu0.b32.cont [11/16] %v2791, 128
        %2936 = vxpose.xlu0.b32.cont [12/16] %v2792, 128
        %2937 = vxpose.xlu0.b32.cont [13/16] %v2793, 128
        %2938 = vxpose.xlu0.b32.cont [14/16] %v2794, 128
        %2939 = vxpose.xlu0.b32.cont [15/16] %v2795, 128
        %2940 = vxpose.xlu0.b32.end [16/16] %v2796, 128
        %v2941 = vpop.trf.xlu0
        %v2942 = vpop.trf.xlu0
        %v2943 = vpop.trf.xlu0
        %v2944 = vpop.trf.xlu0
        %v2945 = vpop.trf.xlu0
        %v2946 = vpop.trf.xlu0
        %v2947 = vpop.trf.xlu0
        %v2948 = vpop.trf.xlu0
        %v2949 = vpop.trf.xlu0
        %v2950 = vpop.trf.xlu0
        %v2951 = vpop.trf.xlu0
        %v2952 = vpop.trf.xlu0
        %v2953 = vpop.trf.xlu0
        %v2954 = vpop.trf.xlu0
        %v2955 = vpop.trf.xlu0
        %v2956 = vpop.trf.xlu0
        %2957 = vxpose.xlu0.b32.start [1/16] %v2797, 128
        %2958 = vxpose.xlu0.b32.cont [2/16] %v2798, 128
        %2959 = vxpose.xlu0.b32.cont [3/16] %v2799, 128
        %2960 = vxpose.xlu0.b32.cont [4/16] %v2800, 128
        %2961 = vxpose.xlu0.b32.cont [5/16] %v2801, 128
        %2962 = vxpose.xlu0.b32.cont [6/16] %v2802, 128
        %2963 = vxpose.xlu0.b32.cont [7/16] %v2803, 128
        %2964 = vxpose.xlu0.b32.cont [8/16] %v2804, 128
        %2965 = vxpose.xlu0.b32.cont [9/16] %v2805, 128
        %2966 = vxpose.xlu0.b32.cont [10/16] %v2806, 128
        %2967 = vxpose.xlu0.b32.cont [11/16] %v2807, 128
        %2968 = vxpose.xlu0.b32.cont [12/16] %v2808, 128
        %2969 = vxpose.xlu0.b32.cont [13/16] %v2809, 128
        %2970 = vxpose.xlu0.b32.cont [14/16] %v2810, 128
        %2971 = vxpose.xlu0.b32.cont [15/16] %v2811, 128
        %2972 = vxpose.xlu0.b32.end [16/16] %v2812, 128
        %v2973 = vpop.trf.xlu0
        %v2974 = vpop.trf.xlu0
        %v2975 = vpop.trf.xlu0
        %v2976 = vpop.trf.xlu0
        %v2977 = vpop.trf.xlu0
        %v2978 = vpop.trf.xlu0
        %v2979 = vpop.trf.xlu0
        %v2980 = vpop.trf.xlu0
        %v2981 = vpop.trf.xlu0
        %v2982 = vpop.trf.xlu0
        %v2983 = vpop.trf.xlu0
        %v2984 = vpop.trf.xlu0
        %v2985 = vpop.trf.xlu0
        %v2986 = vpop.trf.xlu0
        %v2987 = vpop.trf.xlu0
        %v2988 = vpop.trf.xlu0
        %2989 = vxpose.xlu0.b32.start [1/16] %v2813, 128
        %2990 = vxpose.xlu0.b32.cont [2/16] %v2814, 128
        %2991 = vxpose.xlu0.b32.cont [3/16] %v2815, 128
        %2992 = vxpose.xlu0.b32.cont [4/16] %v2816, 128
        %2993 = vxpose.xlu0.b32.cont [5/16] %v2817, 128
        %2994 = vxpose.xlu0.b32.cont [6/16] %v2818, 128
        %2995 = vxpose.xlu0.b32.cont [7/16] %v2819, 128
        %2996 = vxpose.xlu0.b32.cont [8/16] %v2820, 128
        %2997 = vxpose.xlu0.b32.cont [9/16] %v2821, 128
        %2998 = vxpose.xlu0.b32.cont [10/16] %v2822, 128
        %2999 = vxpose.xlu0.b32.cont [11/16] %v2823, 128
        %3000 = vxpose.xlu0.b32.cont [12/16] %v2824, 128
        %3001 = vxpose.xlu0.b32.cont [13/16] %v2825, 128
        %3002 = vxpose.xlu0.b32.cont [14/16] %v2826, 128
        %3003 = vxpose.xlu0.b32.cont [15/16] %v2827, 128
        %3004 = vxpose.xlu0.b32.end [16/16] %v2828, 128
        %v3005 = vpop.trf.xlu0
        %v3006 = vpop.trf.xlu0
        %v3007 = vpop.trf.xlu0
        %v3008 = vpop.trf.xlu0
        %v3009 = vpop.trf.xlu0
        %v3010 = vpop.trf.xlu0
        %v3011 = vpop.trf.xlu0
        %v3012 = vpop.trf.xlu0
        %v3013 = vpop.trf.xlu0
        %v3014 = vpop.trf.xlu0
        %v3015 = vpop.trf.xlu0
        %v3016 = vpop.trf.xlu0
        %v3017 = vpop.trf.xlu0
        %v3018 = vpop.trf.xlu0
        %v3019 = vpop.trf.xlu0
        %v3020 = vpop.trf.xlu0
        %3021 = vxpose.xlu0.b32.start [1/16] %v2829, 128
        %3022 = vxpose.xlu0.b32.cont [2/16] %v2830, 128
        %3023 = vxpose.xlu0.b32.cont [3/16] %v2831, 128
        %3024 = vxpose.xlu0.b32.cont [4/16] %v2832, 128
        %3025 = vxpose.xlu0.b32.cont [5/16] %v2833, 128
        %3026 = vxpose.xlu0.b32.cont [6/16] %v2834, 128
        %3027 = vxpose.xlu0.b32.cont [7/16] %v2835, 128
        %3028 = vxpose.xlu0.b32.cont [8/16] %v2836, 128
        %3029 = vxpose.xlu0.b32.cont [9/16] %v2837, 128
        %3030 = vxpose.xlu0.b32.cont [10/16] %v2838, 128
        %3031 = vxpose.xlu0.b32.cont [11/16] %v2839, 128
        %3032 = vxpose.xlu0.b32.cont [12/16] %v2840, 128
        %3033 = vxpose.xlu0.b32.cont [13/16] %v2841, 128
        %3034 = vxpose.xlu0.b32.cont [14/16] %v2842, 128
        %3035 = vxpose.xlu0.b32.cont [15/16] %v2843, 128
        %3036 = vxpose.xlu0.b32.end [16/16] %v2844, 128
        %v3037 = vpop.trf.xlu0
        %v3038 = vpop.trf.xlu0
        %v3039 = vpop.trf.xlu0
        %v3040 = vpop.trf.xlu0
        %v3041 = vpop.trf.xlu0
        %v3042 = vpop.trf.xlu0
        %v3043 = vpop.trf.xlu0
        %v3044 = vpop.trf.xlu0
        %v3045 = vpop.trf.xlu0
        %v3046 = vpop.trf.xlu0
        %v3047 = vpop.trf.xlu0
        %v3048 = vpop.trf.xlu0
        %v3049 = vpop.trf.xlu0
        %v3050 = vpop.trf.xlu0
        %v3051 = vpop.trf.xlu0
        %v3052 = vpop.trf.xlu0
        %3053 = vxpose.xlu0.b32.start [1/16] %v2845, 128
        %3054 = vxpose.xlu0.b32.cont [2/16] %v2846, 128
        %3055 = vxpose.xlu0.b32.cont [3/16] %v2847, 128
        %3056 = vxpose.xlu0.b32.cont [4/16] %v2848, 128
        %3057 = vxpose.xlu0.b32.cont [5/16] %v2849, 128
        %3058 = vxpose.xlu0.b32.cont [6/16] %v2850, 128
        %3059 = vxpose.xlu0.b32.cont [7/16] %v2851, 128
        %3060 = vxpose.xlu0.b32.cont [8/16] %v2852, 128
        %3061 = vxpose.xlu0.b32.cont [9/16] %v2853, 128
        %3062 = vxpose.xlu0.b32.cont [10/16] %v2854, 128
        %3063 = vxpose.xlu0.b32.cont [11/16] %v2855, 128
        %3064 = vxpose.xlu0.b32.cont [12/16] %v2856, 128
        %3065 = vxpose.xlu0.b32.cont [13/16] %v2857, 128
        %3066 = vxpose.xlu0.b32.cont [14/16] %v2858, 128
        %3067 = vxpose.xlu0.b32.cont [15/16] %v2859, 128
        %3068 = vxpose.xlu0.b32.end [16/16] %v2860, 128
        %v3069 = vpop.trf.xlu0
        %v3070 = vpop.trf.xlu0
        %v3071 = vpop.trf.xlu0
        %v3072 = vpop.trf.xlu0
        %v3073 = vpop.trf.xlu0
        %v3074 = vpop.trf.xlu0
        %v3075 = vpop.trf.xlu0
        %v3076 = vpop.trf.xlu0
        %v3077 = vpop.trf.xlu0
        %v3078 = vpop.trf.xlu0
        %v3079 = vpop.trf.xlu0
        %v3080 = vpop.trf.xlu0
        %v3081 = vpop.trf.xlu0
        %v3082 = vpop.trf.xlu0
        %v3083 = vpop.trf.xlu0
        %v3084 = vpop.trf.xlu0
        %3085 = vxpose.xlu0.b32.start [1/16] %v2861, 128
        %3086 = vxpose.xlu0.b32.cont [2/16] %v2862, 128
        %3087 = vxpose.xlu0.b32.cont [3/16] %v2863, 128
        %3088 = vxpose.xlu0.b32.cont [4/16] %v2864, 128
        %3089 = vxpose.xlu0.b32.cont [5/16] %v2865, 128
        %3090 = vxpose.xlu0.b32.cont [6/16] %v2866, 128
        %3091 = vxpose.xlu0.b32.cont [7/16] %v2867, 128
        %3092 = vxpose.xlu0.b32.cont [8/16] %v2868, 128
        %3093 = vxpose.xlu0.b32.cont [9/16] %v2869, 128
        %3094 = vxpose.xlu0.b32.cont [10/16] %v2870, 128
        %3095 = vxpose.xlu0.b32.cont [11/16] %v2871, 128
        %3096 = vxpose.xlu0.b32.cont [12/16] %v2872, 128
        %3097 = vxpose.xlu0.b32.cont [13/16] %v2873, 128
        %3098 = vxpose.xlu0.b32.cont [14/16] %v2874, 128
        %3099 = vxpose.xlu0.b32.cont [15/16] %v2875, 128
        %3100 = vxpose.xlu0.b32.end [16/16] %v2876, 128
        %v3101 = vpop.trf.xlu0
        %v3102 = vpop.trf.xlu0
        %v3103 = vpop.trf.xlu0
        %v3104 = vpop.trf.xlu0
        %v3105 = vpop.trf.xlu0
        %v3106 = vpop.trf.xlu0
        %v3107 = vpop.trf.xlu0
        %v3108 = vpop.trf.xlu0
        %v3109 = vpop.trf.xlu0
        %v3110 = vpop.trf.xlu0
        %v3111 = vpop.trf.xlu0
        %v3112 = vpop.trf.xlu0
        %v3113 = vpop.trf.xlu0
        %v3114 = vpop.trf.xlu0
        %v3115 = vpop.trf.xlu0
        %v3116 = vpop.trf.xlu0
        %3117 = vxpose.xlu0.b32.start [1/16] %v2877, 128
        %3118 = vxpose.xlu0.b32.cont [2/16] %v2878, 128
        %3119 = vxpose.xlu0.b32.cont [3/16] %v2879, 128
        %3120 = vxpose.xlu0.b32.cont [4/16] %v2880, 128
        %3121 = vxpose.xlu0.b32.cont [5/16] %v2881, 128
        %3122 = vxpose.xlu0.b32.cont [6/16] %v2882, 128
        %3123 = vxpose.xlu0.b32.cont [7/16] %v2883, 128
        %3124 = vxpose.xlu0.b32.cont [8/16] %v2884, 128
        %3125 = vxpose.xlu0.b32.cont [9/16] %v2885, 128
        %3126 = vxpose.xlu0.b32.cont [10/16] %v2886, 128
        %3127 = vxpose.xlu0.b32.cont [11/16] %v2887, 128
        %3128 = vxpose.xlu0.b32.cont [12/16] %v2888, 128
        %3129 = vxpose.xlu0.b32.cont [13/16] %v2889, 128
        %3130 = vxpose.xlu0.b32.cont [14/16] %v2890, 128
        %3131 = vxpose.xlu0.b32.cont [15/16] %v2891, 128
        %3132 = vxpose.xlu0.b32.end [16/16] %v2892, 128
        %v3133 = vpop.trf.xlu0
        %v3134 = vpop.trf.xlu0
        %v3135 = vpop.trf.xlu0
        %v3136 = vpop.trf.xlu0
        %v3137 = vpop.trf.xlu0
        %v3138 = vpop.trf.xlu0
        %v3139 = vpop.trf.xlu0
        %v3140 = vpop.trf.xlu0
        %v3141 = vpop.trf.xlu0
        %v3142 = vpop.trf.xlu0
        %v3143 = vpop.trf.xlu0
        %v3144 = vpop.trf.xlu0
        %v3145 = vpop.trf.xlu0
        %v3146 = vpop.trf.xlu0
        %v3147 = vpop.trf.xlu0
        %v3148 = vpop.trf.xlu0
        %v3149 = vld [vmem:[%s4] sm:$0xf]
        %v3150 = vld [vmem:[%s4 + $0x4] sm:$0xf]
        %v3151 = vld [vmem:[%s4 + $0x8] sm:$0xf]
        %v3152 = vld [vmem:[%s4 + $0xc] sm:$0xf]
        %v3153 = vld [vmem:[%s4 + $0x10] sm:$0xf]
        %v3154 = vld [vmem:[%s4 + $0x14] sm:$0xf]
        %v3155 = vld [vmem:[%s4 + $0x18] sm:$0xf]
        %v3156 = vld [vmem:[%s4 + $0x1c] sm:$0xf]
        %v3157 = vunpack.c.l.bf16 %v3149
        %v3158 = vunpack.c.l.bf16 %v3150
        %v3159 = vunpack.c.l.bf16 %v3151
        %v3160 = vunpack.c.l.bf16 %v3152
        %v3161 = vunpack.c.l.bf16 %v3153
        %v3162 = vunpack.c.l.bf16 %v3154
        %v3163 = vunpack.c.l.bf16 %v3155
        %v3164 = vunpack.c.l.bf16 %v3156
        %3166 = vset.pattern.permute.xlu0 0
        %3167 = vperm.xlu0 %3166, %v3157
        %v3168 = vpop.permute.xlu0 %3167
        %3171 = vset.pattern.permute.xlu0 0
        %3172 = vperm.xlu0 %3171, %v3158
        %v3173 = vpop.permute.xlu0 %3172
        %3176 = vset.pattern.permute.xlu0 0
        %3177 = vperm.xlu0 %3176, %v3159
        %v3178 = vpop.permute.xlu0 %3177
        %3181 = vset.pattern.permute.xlu0 0
        %3182 = vperm.xlu0 %3181, %v3160
        %v3183 = vpop.permute.xlu0 %3182
        %3186 = vset.pattern.permute.xlu0 0
        %3187 = vperm.xlu0 %3186, %v3161
        %v3188 = vpop.permute.xlu0 %3187
        %3191 = vset.pattern.permute.xlu0 0
        %3192 = vperm.xlu0 %3191, %v3162
        %v3193 = vpop.permute.xlu0 %3192
        %3196 = vset.pattern.permute.xlu0 0
        %3197 = vperm.xlu0 %3196, %v3163
        %v3198 = vpop.permute.xlu0 %3197
        %3201 = vset.pattern.permute.xlu0 0
        %3202 = vperm.xlu0 %3201, %v3164
        %v3203 = vpop.permute.xlu0 %3202
        %v3205 = vmul.f32 %v2909, %v3168
        %v3206 = vmul.f32 %v2941, %v3168
        %v3207 = vmul.f32 %v2973, %v3168
        %v3208 = vmul.f32 %v3005, %v3168
        %v3209 = vmul.f32 %v3037, %v3168
        %v3210 = vmul.f32 %v3069, %v3168
        %v3211 = vmul.f32 %v3101, %v3168
        %v3212 = vmul.f32 %v3133, %v3168
        %v3213 = vmul.f32 %v2910, %v3173
        %v3214 = vmul.f32 %v2942, %v3173
        %v3215 = vmul.f32 %v2974, %v3173
        %v3216 = vmul.f32 %v3006, %v3173
        %v3217 = vmul.f32 %v3038, %v3173
        %v3218 = vmul.f32 %v3070, %v3173
        %v3219 = vmul.f32 %v3102, %v3173
        %v3220 = vmul.f32 %v3134, %v3173
        %v3221 = vmul.f32 %v2911, %v3178
        %v3222 = vmul.f32 %v2943, %v3178
        %v3223 = vmul.f32 %v2975, %v3178
        %v3224 = vmul.f32 %v3007, %v3178
        %v3225 = vmul.f32 %v3039, %v3178
        %v3226 = vmul.f32 %v3071, %v3178
        %v3227 = vmul.f32 %v3103, %v3178
        %v3228 = vmul.f32 %v3135, %v3178
        %v3229 = vmul.f32 %v2912, %v3183
        %v3230 = vmul.f32 %v2944, %v3183
        %v3231 = vmul.f32 %v2976, %v3183
        %v3232 = vmul.f32 %v3008, %v3183
        %v3233 = vmul.f32 %v3040, %v3183
        %v3234 = vmul.f32 %v3072, %v3183
        %v3235 = vmul.f32 %v3104, %v3183
        %v3236 = vmul.f32 %v3136, %v3183
        %v3237 = vmul.f32 %v2913, %v3188
        %v3238 = vmul.f32 %v2945, %v3188
        %v3239 = vmul.f32 %v2977, %v3188
        %v3240 = vmul.f32 %v3009, %v3188
        %v3241 = vmul.f32 %v3041, %v3188
        %v3242 = vmul.f32 %v3073, %v3188
        %v3243 = vmul.f32 %v3105, %v3188
        %v3244 = vmul.f32 %v3137, %v3188
        %v3245 = vmul.f32 %v2914, %v3193
        %v3246 = vmul.f32 %v2946, %v3193
        %v3247 = vmul.f32 %v2978, %v3193
        %v3248 = vmul.f32 %v3010, %v3193
        %v3249 = vmul.f32 %v3042, %v3193
        %v3250 = vmul.f32 %v3074, %v3193
        %v3251 = vmul.f32 %v3106, %v3193
        %v3252 = vmul.f32 %v3138, %v3193
        %v3253 = vmul.f32 %v2915, %v3198
        %v3254 = vmul.f32 %v2947, %v3198
        %v3255 = vmul.f32 %v2979, %v3198
        %v3256 = vmul.f32 %v3011, %v3198
        %v3257 = vmul.f32 %v3043, %v3198
        %v3258 = vmul.f32 %v3075, %v3198
        %v3259 = vmul.f32 %v3107, %v3198
        %v3260 = vmul.f32 %v3139, %v3198
        %v3261 = vmul.f32 %v2916, %v3203
        %v3262 = vmul.f32 %v2948, %v3203
        %v3263 = vmul.f32 %v2980, %v3203
        %v3264 = vmul.f32 %v3012, %v3203
        %v3265 = vmul.f32 %v3044, %v3203
        %v3266 = vmul.f32 %v3076, %v3203
        %v3267 = vmul.f32 %v3108, %v3203
        %v3268 = vmul.f32 %v3140, %v3203
        %v3269 = vadd.f32 %v3205, %v3213
        %v3270 = vadd.f32 %v3269, %v3221
        %v3271 = vadd.f32 %v3270, %v3229
        %v3272 = vadd.f32 %v3271, %v3237
        %v3273 = vadd.f32 %v3272, %v3245
        %v3274 = vadd.f32 %v3273, %v3253
        %v3275 = vadd.f32 %v3274, %v3261
        %v3276 = vrot.slane %v3275, 4
        %v3277 = vadd.f32 %v3275, %v3276
        %v3278 = vrot.slane %v3277, 2
        %v3279 = vadd.f32 %v3277, %v3278
        %v3280 = vrot.slane %v3279, 1
        %v3281 = vadd.f32 %v3279, %v3280
        %v3282 = vadd.f32 %v3206, %v3214
        %v3283 = vadd.f32 %v3282, %v3222
        %v3284 = vadd.f32 %v3283, %v3230
        %v3285 = vadd.f32 %v3284, %v3238
        %v3286 = vadd.f32 %v3285, %v3246
        %v3287 = vadd.f32 %v3286, %v3254
        %v3288 = vadd.f32 %v3287, %v3262
        %v3289 = vrot.slane %v3288, 4
        %v3290 = vadd.f32 %v3288, %v3289
        %v3291 = vrot.slane %v3290, 2
        %v3292 = vadd.f32 %v3290, %v3291
        %v3293 = vrot.slane %v3292, 1
        %v3294 = vadd.f32 %v3292, %v3293
        %v3295 = vadd.f32 %v3207, %v3215
        %v3296 = vadd.f32 %v3295, %v3223
        %v3297 = vadd.f32 %v3296, %v3231
        %v3298 = vadd.f32 %v3297, %v3239
        %v3299 = vadd.f32 %v3298, %v3247
        %v3300 = vadd.f32 %v3299, %v3255
        %v3301 = vadd.f32 %v3300, %v3263
        %v3302 = vrot.slane %v3301, 4
        %v3303 = vadd.f32 %v3301, %v3302
        %v3304 = vrot.slane %v3303, 2
        %v3305 = vadd.f32 %v3303, %v3304
        %v3306 = vrot.slane %v3305, 1
        %v3307 = vadd.f32 %v3305, %v3306
        %v3308 = vadd.f32 %v3208, %v3216
        %v3309 = vadd.f32 %v3308, %v3224
        %v3310 = vadd.f32 %v3309, %v3232
        %v3311 = vadd.f32 %v3310, %v3240
        %v3312 = vadd.f32 %v3311, %v3248
        %v3313 = vadd.f32 %v3312, %v3256
        %v3314 = vadd.f32 %v3313, %v3264
        %v3315 = vrot.slane %v3314, 4
        %v3316 = vadd.f32 %v3314, %v3315
        %v3317 = vrot.slane %v3316, 2
        %v3318 = vadd.f32 %v3316, %v3317
        %v3319 = vrot.slane %v3318, 1
        %v3320 = vadd.f32 %v3318, %v3319
        %v3321 = vadd.f32 %v3209, %v3217
        %v3322 = vadd.f32 %v3321, %v3225
        %v3323 = vadd.f32 %v3322, %v3233
        %v3324 = vadd.f32 %v3323, %v3241
        %v3325 = vadd.f32 %v3324, %v3249
        %v3326 = vadd.f32 %v3325, %v3257
        %v3327 = vadd.f32 %v3326, %v3265
        %v3328 = vrot.slane %v3327, 4
        %v3329 = vadd.f32 %v3327, %v3328
        %v3330 = vrot.slane %v3329, 2
        %v3331 = vadd.f32 %v3329, %v3330
        %v3332 = vrot.slane %v3331, 1
        %v3333 = vadd.f32 %v3331, %v3332
        %v3334 = vadd.f32 %v3210, %v3218
        %v3335 = vadd.f32 %v3334, %v3226
        %v3336 = vadd.f32 %v3335, %v3234
        %v3337 = vadd.f32 %v3336, %v3242
        %v3338 = vadd.f32 %v3337, %v3250
        %v3339 = vadd.f32 %v3338, %v3258
        %v3340 = vadd.f32 %v3339, %v3266
        %v3341 = vrot.slane %v3340, 4
        %v3342 = vadd.f32 %v3340, %v3341
        %v3343 = vrot.slane %v3342, 2
        %v3344 = vadd.f32 %v3342, %v3343
        %v3345 = vrot.slane %v3344, 1
        %v3346 = vadd.f32 %v3344, %v3345
        %v3347 = vadd.f32 %v3211, %v3219
        %v3348 = vadd.f32 %v3347, %v3227
        %v3349 = vadd.f32 %v3348, %v3235
        %v3350 = vadd.f32 %v3349, %v3243
        %v3351 = vadd.f32 %v3350, %v3251
        %v3352 = vadd.f32 %v3351, %v3259
        %v3353 = vadd.f32 %v3352, %v3267
        %v3354 = vrot.slane %v3353, 4
        %v3355 = vadd.f32 %v3353, %v3354
        %v3356 = vrot.slane %v3355, 2
        %v3357 = vadd.f32 %v3355, %v3356
        %v3358 = vrot.slane %v3357, 1
        %v3359 = vadd.f32 %v3357, %v3358
        %v3360 = vadd.f32 %v3212, %v3220
        %v3361 = vadd.f32 %v3360, %v3228
        %v3362 = vadd.f32 %v3361, %v3236
        %v3363 = vadd.f32 %v3362, %v3244
        %v3364 = vadd.f32 %v3363, %v3252
        %v3365 = vadd.f32 %v3364, %v3260
        %v3366 = vadd.f32 %v3365, %v3268
        %v3367 = vrot.slane %v3366, 4
        %v3368 = vadd.f32 %v3366, %v3367
        %v3369 = vrot.slane %v3368, 2
        %v3370 = vadd.f32 %v3368, %v3369
        %v3371 = vrot.slane %v3370, 1
        %v3372 = vadd.f32 %v3370, %v3371
        %v3373 = vld [vmem:[#allocation2] sm:$0x1]
        %3375 = vset.pattern.permute.xlu0 0
        %3376 = vperm.xlu0 %3375, %v3373
        %v3377 = vpop.permute.xlu0 %3376
        %v3379 = vlaneseq
        %v3380 = vshrl.u32 %v3379, 7
        %v3381 = vsub.s32 0, %v3380
        %v3382 = vrot.slane %v3377, %v3381
        %v3383 = vadd.f32 %v3281, %v3382
        %v3384 = vadd.f32 %v3294, %v3382
        %v3385 = vadd.f32 %v3307, %v3382
        %v3386 = vadd.f32 %v3320, %v3382
        %v3387 = vadd.f32 %v3333, %v3382
        %v3388 = vadd.f32 %v3346, %v3382
        %v3389 = vadd.f32 %v3359, %v3382
        %v3390 = vadd.f32 %v3372, %v3382
        %v3391 = vxor.u32 %v3383, 2147483648
        %v3392 = vxor.u32 %v3384, 2147483648
        %v3393 = vxor.u32 %v3385, 2147483648
        %v3394 = vxor.u32 %v3386, 2147483648
        %v3395 = vxor.u32 %v3387, 2147483648
        %v3396 = vxor.u32 %v3388, 2147483648
        %v3397 = vxor.u32 %v3389, 2147483648
        %v3398 = vxor.u32 %v3390, 2147483648
        %v3399 = vmul.f32 %v3391, 1.442695
        %v3400 = vpow.pop %v3399
        %v3401 = vmul.f32 %v3392, 1.442695
        %v3402 = vpow.pop %v3401
        %v3403 = vmul.f32 %v3393, 1.442695
        %v3404 = vpow.pop %v3403
        %v3405 = vmul.f32 %v3394, 1.442695
        %v3406 = vpow.pop %v3405
        %v3407 = vmul.f32 %v3395, 1.442695
        %v3408 = vpow.pop %v3407
        %v3409 = vmul.f32 %v3396, 1.442695
        %v3410 = vpow.pop %v3409
        %v3411 = vmul.f32 %v3397, 1.442695
        %v3412 = vpow.pop %v3411
        %v3413 = vmul.f32 %v3398, 1.442695
        %v3414 = vpow.pop %v3413
        %v3415 = vadd.f32 %v3400, 1.0
        %v3416 = vadd.f32 %v3402, 1.0
        %v3417 = vadd.f32 %v3404, 1.0
        %v3418 = vadd.f32 %v3406, 1.0
        %v3419 = vadd.f32 %v3408, 1.0
        %v3420 = vadd.f32 %v3410, 1.0
        %v3421 = vadd.f32 %v3412, 1.0
        %v3422 = vadd.f32 %v3414, 1.0
        %v3423 = vrcp.pop %v3415
        %v3424 = vmul.f32 1.0, %v3423
        %v3425 = vrcp.pop %v3416
        %v3426 = vmul.f32 1.0, %v3425
        %v3427 = vrcp.pop %v3417
        %v3428 = vmul.f32 1.0, %v3427
        %v3429 = vrcp.pop %v3418
        %v3430 = vmul.f32 1.0, %v3429
        %v3431 = vrcp.pop %v3419
        %v3432 = vmul.f32 1.0, %v3431
        %v3433 = vrcp.pop %v3420
        %v3434 = vmul.f32 1.0, %v3433
        %v3435 = vrcp.pop %v3421
        %v3436 = vmul.f32 1.0, %v3435
        %v3437 = vrcp.pop %v3422
        %v3438 = vmul.f32 1.0, %v3437
        %v3447 = vcombine.low %v3424, %v3426
        %v3448 = vcombine.low %v3428, %v3430
        %v3449 = vcombine.low %v3432, %v3434
        %v3450 = vcombine.low %v3436, %v3438
        %v3452 = vunpack.c.l.s4 1966171168
        %v3453 = vunpack.c.0.s8 %v3452
        %v3454 = vlaneseq
        %v3455 = vshrl.u32 %v3454, 7
        %v3456 = vsub.s32 %v3453, %v3455
        %v3457 = vrot.slane %v3447, %v3456
        %v3459 = vunpack.c.l.s4 1966171168
        %v3460 = vunpack.c.0.s8 %v3459
        %v3461 = vlaneseq
        %v3462 = vshrl.u32 %v3461, 7
        %v3463 = vsub.s32 %v3460, %v3462
        %v3464 = vrot.slane %v3448, %v3463
        %v3466 = vunpack.c.l.s4 1966171168
        %v3467 = vunpack.c.0.s8 %v3466
        %v3468 = vlaneseq
        %v3469 = vshrl.u32 %v3468, 7
        %v3470 = vsub.s32 %v3467, %v3469
        %v3471 = vrot.slane %v3449, %v3470
        %v3473 = vunpack.c.l.s4 1966171168
        %v3474 = vunpack.c.0.s8 %v3473
        %v3475 = vlaneseq
        %v3476 = vshrl.u32 %v3475, 7
        %v3477 = vsub.s32 %v3474, %v3476
        %v3478 = vrot.slane %v3450, %v3477
        %v3479 = vcombine.low %v3457, %v3464
        %v3480 = vcombine.low %v3471, %v3478
        %v3482 = vunpack.c.l.s4 1966171168
        %v3483 = vunpack.c.0.s8 %v3482
        %v3484 = vlaneseq
        %v3485 = vshrl.u32 %v3484, 7
        %v3486 = vsub.s32 %v3483, %v3485
        %v3487 = vrot.slane %v3479, %v3486
        %v3489 = vunpack.c.l.s4 1966171168
        %v3490 = vunpack.c.0.s8 %v3489
        %v3491 = vlaneseq
        %v3492 = vshrl.u32 %v3491, 7
        %v3493 = vsub.s32 %v3490, %v3492
        %v3494 = vrot.slane %v3480, %v3493
        %v3495 = vcombine.low %v3487, %v3494
        %3497 = vst [vmem:[%s317] sm:$0xff] %v3495
        %s3498 = sand.u32 %s210, 1
        %s3499 = scalar_lea.sflag [#allocation4], %s3498
        %s3500 = sand.u32 %s210, 1
        %s3501 = smul.addr %s3500, 8
        %s3502 = scalar_lea.vmem [#allocation3], %s3501
        // Predicated region
        $region53: #{tpu_custom_call.1} parent=51 // pred_check
          %p3503 = pneg %p220
        $region54: #{tpu_custom_call.1} parent=51 // pred_check_branch
          %3505 = sbr.rel (%p3503) target = $region56
        $region55: #{tpu_custom_call.1} parent=51 // pred_region
          %s3507 = ssub.s32 128, 128
          %3508 = vsyncadd %s3499, %s3507
          %s3509 = smul.addr %s24, 8
          %s3510 = smul.addr %s3509, 16
          %s3511 = scalar_lea.hbm %s8, %s3510
          %s3513 = sshll.u32 %s3502, 4
          %s3514 = int_to_ptr.vmem [resolvable:$true] %s3513
          %3516 = dma.vmem_to_hbm [thread:$0]  %s3514, 128, %s3511, %s3499
        $region56: #{tpu_custom_call.1} parent=51 // pred_fallthru
          _
      $region52: #{tpu_custom_call.1} parent=5 // pred_fallthru
        _
      %p3517 = scmp.le.s32.totalorder 2, %s19
      // Predicated region
      $region57: #{tpu_custom_call.1} parent=5 // pred_check
        %p3518 = pneg %p3517
      $region58: #{tpu_custom_call.1} parent=5 // pred_check_branch
        %3520 = sbr.rel (%p3518) target = $region60
      $region59: #{tpu_custom_call.1} parent=5 // pred_region
        %s3521 = ssub.s32 %s19, 2
        // Predicated region
        $region61: #{tpu_custom_call.1} parent=59 // pred_check
          %p3522 = pneg %p226
        $region62: #{tpu_custom_call.1} parent=59 // pred_check_branch
          %3524 = sbr.rel (%p3522) target = $region64
        $region63: #{tpu_custom_call.1} parent=59 // pred_region
          %s3525 = sand.u32 %s211, 1
          %s3526 = scalar_lea.sflag [#allocation4], %s3525
          %s3527 = sand.u32 %s211, 1
          %s3528 = smul.addr %s3527, 8
          %s3529 = scalar_lea.vmem [#allocation3], %s3528
          %3530 = dma.done %s3526, 128
        $region64: #{tpu_custom_call.1} parent=59 // pred_fallthru
          _
      $region60: #{tpu_custom_call.1} parent=5 // pred_fallthru
        _
    $region6: #{tpu_custom_call.1} parent=1 // loop_footer
      %s23 = sadd.s32 1, %s19
    $region7: #{tpu_custom_call.1} parent=1 // loop_footer_branch
      %18 = sbr.rel target = $region3
    $region8: #{tpu_custom_call.1} parent=1 // loop_exit
      _
    %3531 = vsyncpa [#allocation4], 1
    %s3532 = scalar_lea.sflag [#allocation4], 1
    %3533 = vsyncpa %s3532, 1

</llo_original>
